<compile_context>
chip_gen: v5e
topology: v5e:2x2
jax: 0.10.0
libtpu: 0.0.40
codegen_flags: <defaults>
</compile_context>

<pallas_src>
import functools

import jax
import jax.numpy as jnp
from jax.experimental import pallas as pl
from jax.experimental.pallas import tpu as pltpu

EPS = 1e-5  # nn.BatchNorm2d default eps


# ---------------------------- Pallas kernels --------------------------------

def _conv_relu_stats_kernel(x_ref, w_ref, b_ref, y_ref, sum_ref, sq_ref, *,
                            kh, kw, stride, th, w_out, h_out):
    """One tile = (one image, `th` output rows).

    Gathers the kh*kw input taps directly from the resident padded NHWC image
    in VMEM (no im2col materialization), runs bf16 matmuls with f32
    accumulation on the MXU, applies bias + ReLU, writes the lane-dense y tile
    and accumulates the per-channel BN sum / sum-of-squares on the fly.
    """
    t = pl.program_id(1)
    rows = th * w_out
    cin = w_ref.shape[1]
    cpad = w_ref.shape[-1]

    @pl.when(t == 0)
    def _():
        sum_ref[...] = jnp.zeros_like(sum_ref)
        sq_ref[...] = jnp.zeros_like(sq_ref)

    h0 = t * (th * stride)   # first padded-input row needed by this tile

    acc = jnp.zeros((rows, cpad), jnp.float32)
    for p in range(kh * kw):
        di, dj = p // kw, p % kw
        if stride == 1:
            slab = x_ref[pl.ds(h0 + di, th), pl.ds(dj, w_out), :]
        else:
            slab = x_ref[pl.ds(h0 + di, th, stride=stride),
                         pl.ds(dj, w_out, stride=stride), :]
        # (th, w_out, cin) -> (rows, cin); bf16 x bf16 -> f32 on the MXU.
        acc = acc + jnp.dot(slab.reshape(rows, cin), w_ref[p],
                            preferred_element_type=jnp.float32)

    y = jnp.maximum(acc + b_ref[...], 0.0)          # bias + ReLU (f32)

    # Zero rows belonging to padded output rows so the BN statistics stay
    # exact.  Statically elided when h_out divides evenly into tiles.
    if h_out % th != 0:
        limit = (h_out - t * th) * w_out
        lidx = jax.lax.broadcasted_iota(jnp.int32, y.shape, 0)
        y = jnp.where(lidx < limit, y, 0.0)

    y_ref[...] = y
    # Fold the (rows, cpad) tile down to (8, cpad) partial sums (layout-free
    # sublane split); the wrapper finishes the tiny reduction.
    sum_ref[...] += y.reshape(rows // 8, 8, cpad).sum(axis=0)
    sq_ref[...] += (y * y).reshape(rows // 8, 8, cpad).sum(axis=0)


def _bn_apply_kernel(y_ref, scale_ref, shift_ref, o_ref):
    """y * scale + shift, emitted transposed (channel-major) so the final
    NCHW layout needs no separate XLA transpose pass."""
    o = y_ref[...] * scale_ref[...] + shift_ref[...]   # (rows, cpad) f32
    o_ref[...] = o.T                                   # (cpad, rows)


# ------------------------------- wrapper -------------------------------------

def basic_conv2d_forward(x_nchw, conv_w, conv_b, bn_gamma, bn_beta,
                         stride, padding, row_tile=512):
    n, cin, h, w = x_nchw.shape
    cout, cin2, kh, kw = conv_w.shape
    assert cin == cin2

    h_out = (h + 2 * padding - kh) // stride + 1
    w_out = (w + 2 * padding - kw) // stride + 1

    # Tile over output rows: `th` rows (= th*w_out output pixels) per step.
    th = min(h_out, max(1, row_tile // w_out))
    if (th * w_out) % 8 != 0:
        th = ((th + 7) // 8) * 8          # keep the stats sublane-split exact
    n_t = pl.cdiv(h_out, th)
    h_out_pad = n_t * th
    rows = th * w_out
    cpad = ((cout + 127) // 128) * 128    # lane-dense channel dimension

    # NHWC, spatially zero-padded, bf16 for the MXU.  x is read once per
    # image -- no kh*kw duplicated im2col array ever hits HBM.
    x_nhwc = jnp.transpose(x_nchw, (0, 2, 3, 1))
    hp_full = max(h + 2 * padding, (h_out_pad - 1) * stride + kh)
    wp_full = w + 2 * padding
    xp = jnp.pad(x_nhwc,
                 ((0, 0), (padding, hp_full - h - padding),
                  (padding, padding), (0, 0))).astype(jnp.bfloat16)

    # OIHW -> (kh*kw, Cin, Cpad) bf16 taps; bias -> (1, Cpad) f32.
    w_taps = jnp.transpose(conv_w, (2, 3, 1, 0)).reshape(kh * kw, cin, cout)
    w_taps = jnp.pad(w_taps, ((0, 0), (0, 0), (0, cpad - cout))).astype(jnp.bfloat16)
    b_row = jnp.pad(conv_b.astype(jnp.float32), (0, cpad - cout)).reshape(1, cpad)

    grid = (n, n_t)

    kern = functools.partial(_conv_relu_stats_kernel, kh=kh, kw=kw,
                             stride=stride, th=th, w_out=w_out, h_out=h_out)

    # --- pass 1: conv + bias + ReLU + fused BN statistics ---
    y, sums, sqs = pl.pallas_call(
        kern,
        out_shape=(
            jax.ShapeDtypeStruct((n, h_out_pad * w_out, cpad), jnp.float32),
            jax.ShapeDtypeStruct((n, 8, cpad), jnp.float32),
            jax.ShapeDtypeStruct((n, 8, cpad), jnp.float32),
        ),
        grid_spec=pltpu.PrefetchScalarGridSpec(
            num_scalar_prefetch=0,
            grid=grid,
            in_specs=[
                pl.BlockSpec((None, hp_full, wp_full, cin),
                             lambda i, t: (i, 0, 0, 0)),
                pl.BlockSpec((kh * kw, cin, cpad), lambda i, t: (0, 0, 0)),
                pl.BlockSpec((1, cpad), lambda i, t: (0, 0)),
            ],
            out_specs=(
                pl.BlockSpec((None, rows, cpad), lambda i, t: (i, t, 0)),
                pl.BlockSpec((None, 8, cpad), lambda i, t: (i, 0, 0)),
                pl.BlockSpec((None, 8, cpad), lambda i, t: (i, 0, 0)),
            ),
        ),
        compiler_params=pltpu.CompilerParams(
            dimension_semantics=("parallel", "arbitrary")),
    )(xp, w_taps, b_row)

    # --- finalize BatchNorm (training-mode) statistics: tiny, plain JAX ---
    cnt = jnp.float32(n * h_out * w_out)
    mean = jnp.sum(sums, axis=(0, 1)) / cnt
    var = jnp.maximum(jnp.sum(sqs, axis=(0, 1)) / cnt - mean * mean, 0.0)
    gamma = jnp.pad(bn_gamma.astype(jnp.float32), (0, cpad - cout))
    beta = jnp.pad(bn_beta.astype(jnp.float32), (0, cpad - cout))
    scale = (gamma * jax.lax.rsqrt(var + EPS)).reshape(1, cpad)
    shift = (beta - mean * scale[0]).reshape(1, cpad)

    # --- pass 2: per-channel affine, emitted channel-major (NCHW-ready) ---
    out_t = pl.pallas_call(
        _bn_apply_kernel,
        out_shape=jax.ShapeDtypeStruct((n, cpad, h_out_pad * w_out), jnp.float32),
        grid_spec=pltpu.PrefetchScalarGridSpec(
            num_scalar_prefetch=0,
            grid=grid,
            in_specs=[
                pl.BlockSpec((None, rows, cpad), lambda i, t: (i, t, 0)),
                pl.BlockSpec((1, cpad), lambda i, t: (0, 0)),
                pl.BlockSpec((1, cpad), lambda i, t: (0, 0)),
            ],
            out_specs=pl.BlockSpec((None, cpad, rows), lambda i, t: (i, 0, t)),
        ),
        compiler_params=pltpu.CompilerParams(
            dimension_semantics=("parallel", "parallel")),
    )(y, scale, shift)

    # Already channel-major: just reshape and slice off the padding.
    out = out_t.reshape(n, cpad, h_out_pad, w_out)[:, :cout, :h_out, :]
    return out


# ---------------------------- pure-JAX reference -----------------------------

def reference_forward(x, conv_w, conv_b, gamma, beta, stride, padding):
    # Same bf16-operand / f32-accumulation path as the kernel's MXU matmuls.
    y = jax.lax.conv_general_dilated(
        x.astype(jnp.bfloat16), conv_w.astype(jnp.bfloat16),
        window_strides=(stride, stride),
        padding=[(padding, padding), (padding, padding)],
        dimension_numbers=("NCHW", "OIHW", "NCHW"),
        preferred_element_type=jnp.float32)
    y = y + conv_b.reshape(1, -1, 1, 1)
    y = jnp.maximum(y, 0.0)
    mean = jnp.mean(y, axis=(0, 2, 3), keepdims=True)
    var = jnp.mean((y - mean) ** 2, axis=(0, 2, 3), keepdims=True)
    return ((y - mean) * jax.lax.rsqrt(var + EPS)
            * gamma.reshape(1, -1, 1, 1) + beta.reshape(1, -1, 1, 1))


if __name__ == "__main__":
    key = jax.random.PRNGKey(0)
    k1, k2, k3, k4, k5 = jax.random.split(key, 5)

    # BasicConv2d(inChannels=4, outChannels=8, kernel_size=3, stride=1, padding=1)
    n, cin, hh, ww = 2, 4, 16, 16
    cout, ksz, stride, padding = 8, 3, 1, 1

    x = jax.random.normal(k1, (n, cin, hh, ww), jnp.float32)
    conv_w = jax.random.normal(k2, (cout, cin, ksz, ksz), jnp.float32) * 0.1
    conv_b = jax.random.normal(k3, (cout,), jnp.float32) * 0.1
    bn_gamma = 1.0 + 0.1 * jax.random.normal(k4, (cout,), jnp.float32)
    bn_beta = 0.1 * jax.random.normal(k5, (cout,), jnp.float32)

    out = basic_conv2d_forward(x, conv_w, conv_b, bn_gamma, bn_beta,
                               stride, padding)
    out = jax.block_until_ready(out)

    ref = reference_forward(x, conv_w, conv_b, bn_gamma, bn_beta, stride, padding)
    assert out.shape == ref.shape == (n, cout, hh, ww)
    err = float(jnp.max(jnp.abs(out - ref)))
    assert jnp.allclose(out, ref, atol=1e-3, rtol=1e-3), err
    print("KERNEL_OK")
</pallas_src>

<mosaic_0001>
module attributes {stable_mosaic.version = 11 : i64} {
  func.func @_conv_relu_stats_kernel(%arg0: i32, %arg1: i32, %arg2: memref<1x18x18x4xbf16, #tpu.memory_space<vmem>>, %arg3: memref<9x4x128xbf16, #tpu.memory_space<vmem>>, %arg4: memref<1x128xf32, #tpu.memory_space<vmem>>, %arg5: memref<1x256x128xf32, #tpu.memory_space<vmem>>, %arg6: memref<1x8x128xf32, #tpu.memory_space<vmem>>, %arg7: memref<1x8x128xf32, #tpu.memory_space<vmem>>) attributes {dimension_semantics = [#tpu.dimension_semantics<parallel>, #tpu.dimension_semantics<arbitrary>], iteration_bounds = array<i64: 2, 1>, scalar_prefetch = 0 : i64, scratch_operands = 0 : i64, tpu.core_type = #tpu.core_type<tc>, window_params = [{transform_indices = @transform_0, window_bounds = array<i64: 1, 18, 18, 4>}, {pipeline_mode = #tpu.pipeline_mode<synchronous>, transform_indices = @transform_1, window_bounds = array<i64: 9, 4, 128>}, {pipeline_mode = #tpu.pipeline_mode<synchronous>, transform_indices = @transform_2, window_bounds = array<i64: 1, 128>}, {transform_indices = @transform_3, window_bounds = array<i64: 1, 256, 128>}, {transform_indices = @transform_4, window_bounds = array<i64: 1, 8, 128>}, {transform_indices = @transform_5, window_bounds = array<i64: 1, 8, 128>}]} {
    %c0_i32 = arith.constant 0 : i32
    %0 = arith.cmpi eq, %arg1, %c0_i32 : i32
    %1 = arith.extui %0 : i1 to i32
    %c0_i32_0 = arith.constant 0 : i32
    %2 = arith.cmpi ne, %1, %c0_i32_0 : i32
    scf.if %2 {
      %cst_82 = arith.constant 0.000000e+00 : f32
      %111 = vector.broadcast %cst_82 : f32 to vector<8x128xf32>
      %c0_83 = arith.constant 0 : index
      %c0_84 = arith.constant 0 : index
      %c0_85 = arith.constant 0 : index
      %112 = vector.load %arg6[%c0_83, %c0_84, %c0_85] : memref<1x8x128xf32, #tpu.memory_space<vmem>>, vector<1x8x128xf32>
      %113 = vector.shape_cast %112 : vector<1x8x128xf32> to vector<8x128xf32>
      %114 = vector.shape_cast %111 : vector<8x128xf32> to vector<1x8x128xf32>
      tpu.vector_store %arg6[%c0_83, %c0_84, %c0_85], %114 {strides = array<i32>} : memref<1x8x128xf32, #tpu.memory_space<vmem>>, vector<1x8x128xf32>,
      %cst_86 = arith.constant 0.000000e+00 : f32
      %115 = vector.broadcast %cst_86 : f32 to vector<8x128xf32>
      %c0_87 = arith.constant 0 : index
      %c0_88 = arith.constant 0 : index
      %c0_89 = arith.constant 0 : index
      %116 = vector.load %arg7[%c0_87, %c0_88, %c0_89] : memref<1x8x128xf32, #tpu.memory_space<vmem>>, vector<1x8x128xf32>
      %117 = vector.shape_cast %116 : vector<1x8x128xf32> to vector<8x128xf32>
      %118 = vector.shape_cast %115 : vector<8x128xf32> to vector<1x8x128xf32>
      tpu.vector_store %arg7[%c0_87, %c0_88, %c0_89], %118 {strides = array<i32>} : memref<1x8x128xf32, #tpu.memory_space<vmem>>, vector<1x8x128xf32>,
    } else {
    }
    %c16_i32 = arith.constant 16 : i32
    %3 = arith.muli %arg1, %c16_i32 : i32
    %cst = arith.constant 0.000000e+00 : f32
    %4 = vector.broadcast %cst : f32 to vector<256x128xf32>
    %c0_i32_1 = arith.constant 0 : i32
    %5 = arith.addi %3, %c0_i32_1 : i32
    %c0 = arith.constant 0 : index
    %6 = arith.index_cast %5 : i32 to index
    %c0_2 = arith.constant 0 : index
    %c0_3 = arith.constant 0 : index
    %7 = vector.load %arg2[%c0, %6, %c0_2, %c0_3] : memref<1x18x18x4xbf16, #tpu.memory_space<vmem>>, vector<1x16x16x4xbf16>
    %8 = vector.shape_cast %7 : vector<1x16x16x4xbf16> to vector<16x16x4xbf16>
    %9 = vector.shape_cast %8 : vector<16x16x4xbf16> to vector<256x4xbf16>
    %c0_4 = arith.constant 0 : index
    %c0_5 = arith.constant 0 : index
    %c0_6 = arith.constant 0 : index
    %10 = vector.load %arg3[%c0_4, %c0_5, %c0_6] : memref<9x4x128xbf16, #tpu.memory_space<vmem>>, vector<1x4x128xbf16>
    %11 = vector.shape_cast %10 : vector<1x4x128xbf16> to vector<4x128xbf16>
    %cst_7 = arith.constant dense<0.000000e+00> : vector<256x128xf32>
    %12 = tpu.matmul %9, %11, %cst_7 {dimension_numbers = #tpu.dot_dimension_numbers<[1], [0], [0], [1], [0, 0, 1, 1], [], []>} : vector<256x4xbf16>, vector<4x128xbf16>, vector<256x128xf32> -> vector<256x128xf32>
    %13 = arith.addf %4, %12 : vector<256x128xf32>
    %c0_i32_8 = arith.constant 0 : i32
    %14 = arith.addi %3, %c0_i32_8 : i32
    %c0_9 = arith.constant 0 : index
    %15 = arith.index_cast %14 : i32 to index
    %c1 = arith.constant 1 : index
    %c0_10 = arith.constant 0 : index
    %16 = vector.load %arg2[%c0_9, %15, %c1, %c0_10] : memref<1x18x18x4xbf16, #tpu.memory_space<vmem>>, vector<1x16x16x4xbf16>
    %17 = vector.shape_cast %16 : vector<1x16x16x4xbf16> to vector<16x16x4xbf16>
    %18 = vector.shape_cast %17 : vector<16x16x4xbf16> to vector<256x4xbf16>
    %c1_11 = arith.constant 1 : index
    %c0_12 = arith.constant 0 : index
    %c0_13 = arith.constant 0 : index
    %19 = vector.load %arg3[%c1_11, %c0_12, %c0_13] : memref<9x4x128xbf16, #tpu.memory_space<vmem>>, vector<1x4x128xbf16>
    %20 = vector.shape_cast %19 : vector<1x4x128xbf16> to vector<4x128xbf16>
    %cst_14 = arith.constant dense<0.000000e+00> : vector<256x128xf32>
    %21 = tpu.matmul %18, %20, %cst_14 {dimension_numbers = #tpu.dot_dimension_numbers<[1], [0], [0], [1], [0, 0, 1, 1], [], []>} : vector<256x4xbf16>, vector<4x128xbf16>, vector<256x128xf32> -> vector<256x128xf32>
    %22 = arith.addf %13, %21 : vector<256x128xf32>
    %c0_i32_15 = arith.constant 0 : i32
    %23 = arith.addi %3, %c0_i32_15 : i32
    %c0_16 = arith.constant 0 : index
    %24 = arith.index_cast %23 : i32 to index
    %c2 = arith.constant 2 : index
    %c0_17 = arith.constant 0 : index
    %25 = vector.load %arg2[%c0_16, %24, %c2, %c0_17] : memref<1x18x18x4xbf16, #tpu.memory_space<vmem>>, vector<1x16x16x4xbf16>
    %26 = vector.shape_cast %25 : vector<1x16x16x4xbf16> to vector<16x16x4xbf16>
    %27 = vector.shape_cast %26 : vector<16x16x4xbf16> to vector<256x4xbf16>
    %c2_18 = arith.constant 2 : index
    %c0_19 = arith.constant 0 : index
    %c0_20 = arith.constant 0 : index
    %28 = vector.load %arg3[%c2_18, %c0_19, %c0_20] : memref<9x4x128xbf16, #tpu.memory_space<vmem>>, vector<1x4x128xbf16>
    %29 = vector.shape_cast %28 : vector<1x4x128xbf16> to vector<4x128xbf16>
    %cst_21 = arith.constant dense<0.000000e+00> : vector<256x128xf32>
    %30 = tpu.matmul %27, %29, %cst_21 {dimension_numbers = #tpu.dot_dimension_numbers<[1], [0], [0], [1], [0, 0, 1, 1], [], []>} : vector<256x4xbf16>, vector<4x128xbf16>, vector<256x128xf32> -> vector<256x128xf32>
    %31 = arith.addf %22, %30 : vector<256x128xf32>
    %c1_i32 = arith.constant 1 : i32
    %32 = arith.addi %3, %c1_i32 : i32
    %c0_22 = arith.constant 0 : index
    %33 = arith.index_cast %32 : i32 to index
    %c0_23 = arith.constant 0 : index
    %c0_24 = arith.constant 0 : index
    %34 = vector.load %arg2[%c0_22, %33, %c0_23, %c0_24] : memref<1x18x18x4xbf16, #tpu.memory_space<vmem>>, vector<1x16x16x4xbf16>
    %35 = vector.shape_cast %34 : vector<1x16x16x4xbf16> to vector<16x16x4xbf16>
    %36 = vector.shape_cast %35 : vector<16x16x4xbf16> to vector<256x4xbf16>
    %c3 = arith.constant 3 : index
    %c0_25 = arith.constant 0 : index
    %c0_26 = arith.constant 0 : index
    %37 = vector.load %arg3[%c3, %c0_25, %c0_26] : memref<9x4x128xbf16, #tpu.memory_space<vmem>>, vector<1x4x128xbf16>
    %38 = vector.shape_cast %37 : vector<1x4x128xbf16> to vector<4x128xbf16>
    %cst_27 = arith.constant dense<0.000000e+00> : vector<256x128xf32>
    %39 = tpu.matmul %36, %38, %cst_27 {dimension_numbers = #tpu.dot_dimension_numbers<[1], [0], [0], [1], [0, 0, 1, 1], [], []>} : vector<256x4xbf16>, vector<4x128xbf16>, vector<256x128xf32> -> vector<256x128xf32>
    %40 = arith.addf %31, %39 : vector<256x128xf32>
    %c1_i32_28 = arith.constant 1 : i32
    %41 = arith.addi %3, %c1_i32_28 : i32
    %c0_29 = arith.constant 0 : index
    %42 = arith.index_cast %41 : i32 to index
    %c1_30 = arith.constant 1 : index
    %c0_31 = arith.constant 0 : index
    %43 = vector.load %arg2[%c0_29, %42, %c1_30, %c0_31] : memref<1x18x18x4xbf16, #tpu.memory_space<vmem>>, vector<1x16x16x4xbf16>
    %44 = vector.shape_cast %43 : vector<1x16x16x4xbf16> to vector<16x16x4xbf16>
    %45 = vector.shape_cast %44 : vector<16x16x4xbf16> to vector<256x4xbf16>
    %c4 = arith.constant 4 : index
    %c0_32 = arith.constant 0 : index
    %c0_33 = arith.constant 0 : index
    %46 = vector.load %arg3[%c4, %c0_32, %c0_33] : memref<9x4x128xbf16, #tpu.memory_space<vmem>>, vector<1x4x128xbf16>
    %47 = vector.shape_cast %46 : vector<1x4x128xbf16> to vector<4x128xbf16>
    %cst_34 = arith.constant dense<0.000000e+00> : vector<256x128xf32>
    %48 = tpu.matmul %45, %47, %cst_34 {dimension_numbers = #tpu.dot_dimension_numbers<[1], [0], [0], [1], [0, 0, 1, 1], [], []>} : vector<256x4xbf16>, vector<4x128xbf16>, vector<256x128xf32> -> vector<256x128xf32>
    %49 = arith.addf %40, %48 : vector<256x128xf32>
    %c1_i32_35 = arith.constant 1 : i32
    %50 = arith.addi %3, %c1_i32_35 : i32
    %c0_36 = arith.constant 0 : index
    %51 = arith.index_cast %50 : i32 to index
    %c2_37 = arith.constant 2 : index
    %c0_38 = arith.constant 0 : index
    %52 = vector.load %arg2[%c0_36, %51, %c2_37, %c0_38] : memref<1x18x18x4xbf16, #tpu.memory_space<vmem>>, vector<1x16x16x4xbf16>
    %53 = vector.shape_cast %52 : vector<1x16x16x4xbf16> to vector<16x16x4xbf16>
    %54 = vector.shape_cast %53 : vector<16x16x4xbf16> to vector<256x4xbf16>
    %c5 = arith.constant 5 : index
    %c0_39 = arith.constant 0 : index
    %c0_40 = arith.constant 0 : index
    %55 = vector.load %arg3[%c5, %c0_39, %c0_40] : memref<9x4x128xbf16, #tpu.memory_space<vmem>>, vector<1x4x128xbf16>
    %56 = vector.shape_cast %55 : vector<1x4x128xbf16> to vector<4x128xbf16>
    %cst_41 = arith.constant dense<0.000000e+00> : vector<256x128xf32>
    %57 = tpu.matmul %54, %56, %cst_41 {dimension_numbers = #tpu.dot_dimension_numbers<[1], [0], [0], [1], [0, 0, 1, 1], [], []>} : vector<256x4xbf16>, vector<4x128xbf16>, vector<256x128xf32> -> vector<256x128xf32>
    %58 = arith.addf %49, %57 : vector<256x128xf32>
    %c2_i32 = arith.constant 2 : i32
    %59 = arith.addi %3, %c2_i32 : i32
    %c0_42 = arith.constant 0 : index
    %60 = arith.index_cast %59 : i32 to index
    %c0_43 = arith.constant 0 : index
    %c0_44 = arith.constant 0 : index
    %61 = vector.load %arg2[%c0_42, %60, %c0_43, %c0_44] : memref<1x18x18x4xbf16, #tpu.memory_space<vmem>>, vector<1x16x16x4xbf16>
    %62 = vector.shape_cast %61 : vector<1x16x16x4xbf16> to vector<16x16x4xbf16>
    %63 = vector.shape_cast %62 : vector<16x16x4xbf16> to vector<256x4xbf16>
    %c6 = arith.constant 6 : index
    %c0_45 = arith.constant 0 : index
    %c0_46 = arith.constant 0 : index
    %64 = vector.load %arg3[%c6, %c0_45, %c0_46] : memref<9x4x128xbf16, #tpu.memory_space<vmem>>, vector<1x4x128xbf16>
    %65 = vector.shape_cast %64 : vector<1x4x128xbf16> to vector<4x128xbf16>
    %cst_47 = arith.constant dense<0.000000e+00> : vector<256x128xf32>
    %66 = tpu.matmul %63, %65, %cst_47 {dimension_numbers = #tpu.dot_dimension_numbers<[1], [0], [0], [1], [0, 0, 1, 1], [], []>} : vector<256x4xbf16>, vector<4x128xbf16>, vector<256x128xf32> -> vector<256x128xf32>
    %67 = arith.addf %58, %66 : vector<256x128xf32>
    %c2_i32_48 = arith.constant 2 : i32
    %68 = arith.addi %3, %c2_i32_48 : i32
    %c0_49 = arith.constant 0 : index
    %69 = arith.index_cast %68 : i32 to index
    %c1_50 = arith.constant 1 : index
    %c0_51 = arith.constant 0 : index
    %70 = vector.load %arg2[%c0_49, %69, %c1_50, %c0_51] : memref<1x18x18x4xbf16, #tpu.memory_space<vmem>>, vector<1x16x16x4xbf16>
    %71 = vector.shape_cast %70 : vector<1x16x16x4xbf16> to vector<16x16x4xbf16>
    %72 = vector.shape_cast %71 : vector<16x16x4xbf16> to vector<256x4xbf16>
    %c7 = arith.constant 7 : index
    %c0_52 = arith.constant 0 : index
    %c0_53 = arith.constant 0 : index
    %73 = vector.load %arg3[%c7, %c0_52, %c0_53] : memref<9x4x128xbf16, #tpu.memory_space<vmem>>, vector<1x4x128xbf16>
    %74 = vector.shape_cast %73 : vector<1x4x128xbf16> to vector<4x128xbf16>
    %cst_54 = arith.constant dense<0.000000e+00> : vector<256x128xf32>
    %75 = tpu.matmul %72, %74, %cst_54 {dimension_numbers = #tpu.dot_dimension_numbers<[1], [0], [0], [1], [0, 0, 1, 1], [], []>} : vector<256x4xbf16>, vector<4x128xbf16>, vector<256x128xf32> -> vector<256x128xf32>
    %76 = arith.addf %67, %75 : vector<256x128xf32>
    %c2_i32_55 = arith.constant 2 : i32
    %77 = arith.addi %3, %c2_i32_55 : i32
    %c0_56 = arith.constant 0 : index
    %78 = arith.index_cast %77 : i32 to index
    %c2_57 = arith.constant 2 : index
    %c0_58 = arith.constant 0 : index
    %79 = vector.load %arg2[%c0_56, %78, %c2_57, %c0_58] : memref<1x18x18x4xbf16, #tpu.memory_space<vmem>>, vector<1x16x16x4xbf16>
    %80 = vector.shape_cast %79 : vector<1x16x16x4xbf16> to vector<16x16x4xbf16>
    %81 = vector.shape_cast %80 : vector<16x16x4xbf16> to vector<256x4xbf16>
    %c8 = arith.constant 8 : index
    %c0_59 = arith.constant 0 : index
    %c0_60 = arith.constant 0 : index
    %82 = vector.load %arg3[%c8, %c0_59, %c0_60] : memref<9x4x128xbf16, #tpu.memory_space<vmem>>, vector<1x4x128xbf16>
    %83 = vector.shape_cast %82 : vector<1x4x128xbf16> to vector<4x128xbf16>
    %cst_61 = arith.constant dense<0.000000e+00> : vector<256x128xf32>
    %84 = tpu.matmul %81, %83, %cst_61 {dimension_numbers = #tpu.dot_dimension_numbers<[1], [0], [0], [1], [0, 0, 1, 1], [], []>} : vector<256x4xbf16>, vector<4x128xbf16>, vector<256x128xf32> -> vector<256x128xf32>
    %85 = arith.addf %76, %84 : vector<256x128xf32>
    %c0_62 = arith.constant 0 : index
    %c0_63 = arith.constant 0 : index
    %86 = vector.load %arg4[%c0_62, %c0_63] : memref<1x128xf32, #tpu.memory_space<vmem>>, vector<1x128xf32>
    %87 = vector.broadcast %86 : vector<1x128xf32> to vector<256x128xf32>
    %88 = arith.addf %85, %87 : vector<256x128xf32>
    %cst_64 = arith.constant 0.000000e+00 : f32
    %89 = vector.broadcast %cst_64 : f32 to vector<256x128xf32>
    %90 = arith.maximumf %88, %89 : vector<256x128xf32>
    %c0_65 = arith.constant 0 : index
    %c0_66 = arith.constant 0 : index
    %c0_67 = arith.constant 0 : index
    %91 = vector.load %arg5[%c0_65, %c0_66, %c0_67] : memref<1x256x128xf32, #tpu.memory_space<vmem>>, vector<1x256x128xf32>
    %92 = vector.shape_cast %91 : vector<1x256x128xf32> to vector<256x128xf32>
    %93 = vector.shape_cast %90 : vector<256x128xf32> to vector<1x256x128xf32>
    tpu.vector_store %arg5[%c0_65, %c0_66, %c0_67], %93 {strides = array<i32>} : memref<1x256x128xf32, #tpu.memory_space<vmem>>, vector<1x256x128xf32>,
    %c0_68 = arith.constant 0 : index
    %c0_69 = arith.constant 0 : index
    %c0_70 = arith.constant 0 : index
    %94 = vector.load %arg6[%c0_68, %c0_69, %c0_70] : memref<1x8x128xf32, #tpu.memory_space<vmem>>, vector<1x8x128xf32>
    %95 = vector.shape_cast %94 : vector<1x8x128xf32> to vector<8x128xf32>
    %96 = vector.shape_cast %90 : vector<256x128xf32> to vector<32x8x128xf32>
    %cst_71 = arith.constant dense<0.000000e+00> : vector<8x128xf32>
    %97 = vector.multi_reduction <add>, %96, %cst_71 [0] : vector<32x8x128xf32> to vector<8x128xf32>
    %98 = arith.addf %95, %97 : vector<8x128xf32>
    %c0_72 = arith.constant 0 : index
    %c0_73 = arith.constant 0 : index
    %c0_74 = arith.constant 0 : index
    %99 = vector.load %arg6[%c0_72, %c0_73, %c0_74] : memref<1x8x128xf32, #tpu.memory_space<vmem>>, vector<1x8x128xf32>
    %100 = vector.shape_cast %99 : vector<1x8x128xf32> to vector<8x128xf32>
    %101 = vector.shape_cast %98 : vector<8x128xf32> to vector<1x8x128xf32>
    tpu.vector_store %arg6[%c0_72, %c0_73, %c0_74], %101 {strides = array<i32>} : memref<1x8x128xf32, #tpu.memory_space<vmem>>, vector<1x8x128xf32>,
    %c0_75 = arith.constant 0 : index
    %c0_76 = arith.constant 0 : index
    %c0_77 = arith.constant 0 : index
    %102 = vector.load %arg7[%c0_75, %c0_76, %c0_77] : memref<1x8x128xf32, #tpu.memory_space<vmem>>, vector<1x8x128xf32>
    %103 = vector.shape_cast %102 : vector<1x8x128xf32> to vector<8x128xf32>
    %104 = arith.mulf %90, %90 : vector<256x128xf32>
    %105 = vector.shape_cast %104 : vector<256x128xf32> to vector<32x8x128xf32>
    %cst_78 = arith.constant dense<0.000000e+00> : vector<8x128xf32>
    %106 = vector.multi_reduction <add>, %105, %cst_78 [0] : vector<32x8x128xf32> to vector<8x128xf32>
    %107 = arith.addf %103, %106 : vector<8x128xf32>
    %c0_79 = arith.constant 0 : index
    %c0_80 = arith.constant 0 : index
    %c0_81 = arith.constant 0 : index
    %108 = vector.load %arg7[%c0_79, %c0_80, %c0_81] : memref<1x8x128xf32, #tpu.memory_space<vmem>>, vector<1x8x128xf32>
    %109 = vector.shape_cast %108 : vector<1x8x128xf32> to vector<8x128xf32>
    %110 = vector.shape_cast %107 : vector<8x128xf32> to vector<1x8x128xf32>
    tpu.vector_store %arg7[%c0_79, %c0_80, %c0_81], %110 {strides = array<i32>} : memref<1x8x128xf32, #tpu.memory_space<vmem>>, vector<1x8x128xf32>,
    return
  }
  func.func @transform_0(%arg0: i32, %arg1: i32) -> (i32, i32, i32, i32) {
    %c0_i32 = arith.constant 0 : i32
    %c0_i32_0 = arith.constant 0 : i32
    %c0_i32_1 = arith.constant 0 : i32
    %c0_i32_2 = arith.constant 0 : i32
    return %arg0, %c0_i32, %c0_i32_0, %c0_i32_1 : i32, i32, i32, i32
  }
  func.func @transform_1(%arg0: i32, %arg1: i32) -> (i32, i32, i32) {
    %c0_i32 = arith.constant 0 : i32
    %c0_i32_0 = arith.constant 0 : i32
    %c0_i32_1 = arith.constant 0 : i32
    %c0_i32_2 = arith.constant 0 : i32
    return %c0_i32, %c0_i32_0, %c0_i32_1 : i32, i32, i32
  }
  func.func @transform_2(%arg0: i32, %arg1: i32) -> (i32, i32) {
    %c0_i32 = arith.constant 0 : i32
    %c0_i32_0 = arith.constant 0 : i32
    %c0_i32_1 = arith.constant 0 : i32
    return %c0_i32, %c0_i32_0 : i32, i32
  }
  func.func @transform_3(%arg0: i32, %arg1: i32) -> (i32, i32, i32) {
    %c0_i32 = arith.constant 0 : i32
    %c0_i32_0 = arith.constant 0 : i32
    return %arg0, %arg1, %c0_i32 : i32, i32, i32
  }
  func.func @transform_4(%arg0: i32, %arg1: i32) -> (i32, i32, i32) {
    %c0_i32 = arith.constant 0 : i32
    %c0_i32_0 = arith.constant 0 : i32
    %c0_i32_1 = arith.constant 0 : i32
    return %arg0, %c0_i32, %c0_i32_0 : i32, i32, i32
  }
  func.func @transform_5(%arg0: i32, %arg1: i32) -> (i32, i32, i32) {
    %c0_i32 = arith.constant 0 : i32
    %c0_i32_0 = arith.constant 0 : i32
    %c0_i32_1 = arith.constant 0 : i32
    return %arg0, %c0_i32, %c0_i32_0 : i32, i32, i32
  }
}

</mosaic_0001>

<llo_original>
// kernel: tpu_custom_call.1
$region0: #{tpu_custom_call.1}
  #allocation0 [shape = 'u32[]', space=smem, size = 0x4, offset = 0x4, fixed_abs, tag = 'smem constant byte address 0x4 - core index']
  #allocation1 [shape = 'u32[72,128]{1,0:T(1,128)}', space=vmem, size = 0x9000, scoped, tag = 'internal scratch']
  %s0 = inlined_call_operand.vmem [shape: bf16[2,18,18,4], index: 0, kind: input, shape index: {}]
  %s1 = inlined_call_operand.vmem [shape: bf16[9,4,128], index: 1, kind: input, shape index: {}]
  %s2 = inlined_call_operand.vmem [shape: f32[1,128], index: 2, kind: input, shape index: {}]
  %s3 = inlined_call_operand.hbm [shape: f32[2,256,128], index: 3, kind: output, shape index: {0}]
  %s4 = inlined_call_operand.hbm [shape: f32[2,8,128], index: 4, kind: output, shape index: {1}]
  %s5 = inlined_call_operand.hbm [shape: f32[2,8,128], index: 5, kind: output, shape index: {2}]
  %6 = xla_tuple %s3, %s4, %s5
  %s7 = sld [smem:[#allocation0]]
  $region65: #{tpu_custom_call.1} parent=0
    _
  %s9 = ssub.s32 1, %s7
  %s10 = scalar_select 0, %s9, %s7
  $region1: #{tpu_custom_call.1} parent=0
    #allocation2 [shape = 'u8[262144]{0}', space=vmem, size = 0x40000, scoped, tag = 'output window, operand 0']
    #allocation3 [shape = 's32[2]{0}', space=sflag, size = 0x8, scoped, tag = 'scoped memory for tpu_custom_call.1']
    #allocation4 [shape = 'u8[8192]{0}', space=vmem, size = 0x2000, scoped, tag = 'output window, operand 1']
    #allocation5 [shape = 's32[2]{0}', space=sflag, size = 0x8, scoped, tag = 'scoped memory for tpu_custom_call.1']
    #allocation6 [shape = 'u8[8192]{0}', space=vmem, size = 0x2000, scoped, tag = 'output window, operand 2']
    %11 = vsyncpa [#allocation3], 0
    %s12 = scalar_lea.sflag [#allocation3], 1
    %13 = vsyncpa %s12, 0
    %14 = vsyncpa [#allocation5], 0
    %s15 = scalar_lea.sflag [#allocation5], 1
    %16 = vsyncpa %s15, 0
    loop: start=0, step=1, limit=4
    $region2: #{tpu_custom_call.1} parent=1 // loop_pre_header
      _
    $region3: #{tpu_custom_call.1} parent=1 // loop_header
      %s18 = sphi 0, %s22
      %p19 = scmp.ge.s32.totalorder %s18, 4
      %s25 = sphi 0, %s37
      %s26 = sphi 0, %s33
      %s27 = sphi 0, %s25
      %s28 = sphi 0, %s26
      %s29 = sphi 0, %s27
      %s30 = sphi 0, %s28
      %s40 = sphi 0, %s42
      %s43 = sphi 0, %s40
      %s44 = sphi 0, %s43
      %s60 = sphi 0, %s44
      %s64 = sphi 0, %s64
      %s66 = sphi 0, %s64
      %s67 = sphi 0, %s66
      %s81 = sphi 0, %s67
      %s85 = sphi 0, %s85
      %s87 = sphi 0, %s85
      %s88 = sphi 0, %s87
      %s102 = sphi 0, %s88
      %s110 = sphi 0, %s112
      %s113 = sphi 0, %s110
      %s114 = sphi 0, %s113
      %s130 = sphi 0, %s114
      %s136 = sphi 0, %s138
      %s139 = sphi 0, %s136
      %s140 = sphi 0, %s139
      %s156 = sphi 0, %s140
      %s162 = sphi 0, %s164
      %s165 = sphi 0, %s162
      %s166 = sphi 0, %s165
      %s182 = sphi 0, %s166
    $region4: #{tpu_custom_call.1} parent=1 // loop_header_branch
      %21 = sbr.rel (%p19) target = $region8
    $region5: #{tpu_custom_call.1} parent=1 // loop_body
      %s23 = ssub.s32 %s18, 1
      %s24 = ssub.s32 %s18, 2
      %s31 = sadd.s32 1, %s26
      %p32 = scmp.ge.s32.totalorder %s31, 1
      %s33 = scalar_select %p32, 0, %s31
      %s34 = sadd.s32 1, %s25
      %s35 = scalar_select %p32, %s34, %s25
      %p36 = scmp.ge.s32.totalorder %s35, 2
      %s37 = scalar_select %p36, 0, %s35
      %s38 = ssub.s32 %s25, %s37
      %p39 = scmp.eq.s32.totalorder %s38, 0
      %s41 = sadd.s32 %s40, 1
      %s42 = scalar_select %p39, %s40, %s41
      %p45 = pneg %p39
      %p46 = scmp.eq.s32.totalorder %s18, 1
      %p47 = por %p45, %p46
      %p48 = scmp.ne.s32.totalorder %s40, %s43
      %p49 = scmp.eq.s32.totalorder %s18, 0
      %p50 = por %p48, %p49
      %p51 = scmp.ne.s32.totalorder %s40, %s43
      %p52 = scmp.eq.s32.totalorder %s23, 1
      %p53 = por %p51, %p52
      %p54 = scmp.ne.s32.totalorder %s43, %s44
      %p55 = scmp.eq.s32.totalorder %s23, 0
      %p56 = por %p54, %p55
      %p57 = scmp.ne.s32.totalorder %s43, %s44
      %p58 = scmp.eq.s32.totalorder %s24, 1
      %p59 = por %p57, %p58
      %p61 = scmp.ne.s32.totalorder %s44, %s60
      %p62 = scmp.eq.s32.totalorder %s24, 0
      %p63 = por %p61, %p62
      %s65 = sadd.s32 %s64, 1
      %p68 = scmp.eq.s32.totalorder %s18, 1
      %p69 = scmp.ne.s32.totalorder %s64, %s66
      %p70 = scmp.eq.s32.totalorder %s18, 0
      %p71 = por %p69, %p70
      %p72 = scmp.ne.s32.totalorder %s64, %s66
      %p73 = scmp.eq.s32.totalorder %s23, 1
      %p74 = por %p72, %p73
      %p75 = scmp.ne.s32.totalorder %s66, %s67
      %p76 = scmp.eq.s32.totalorder %s23, 0
      %p77 = por %p75, %p76
      %p78 = scmp.ne.s32.totalorder %s66, %s67
      %p79 = scmp.eq.s32.totalorder %s24, 1
      %p80 = por %p78, %p79
      %p82 = scmp.ne.s32.totalorder %s67, %s81
      %p83 = scmp.eq.s32.totalorder %s24, 0
      %p84 = por %p82, %p83
      %s86 = sadd.s32 %s85, 1
      %p89 = scmp.eq.s32.totalorder %s18, 1
      %p90 = scmp.ne.s32.totalorder %s85, %s87
      %p91 = scmp.eq.s32.totalorder %s18, 0
      %p92 = por %p90, %p91
      %p93 = scmp.ne.s32.totalorder %s85, %s87
      %p94 = scmp.eq.s32.totalorder %s23, 1
      %p95 = por %p93, %p94
      %p96 = scmp.ne.s32.totalorder %s87, %s88
      %p97 = scmp.eq.s32.totalorder %s23, 0
      %p98 = por %p96, %p97
      %p99 = scmp.ne.s32.totalorder %s87, %s88
      %p100 = scmp.eq.s32.totalorder %s24, 1
      %p101 = por %p99, %p100
      %p103 = scmp.ne.s32.totalorder %s88, %s102
      %p104 = scmp.eq.s32.totalorder %s24, 0
      %p105 = por %p103, %p104
      %s106 = ssub.s32 %s25, %s37
      %s107 = ssub.s32 %s26, %s33
      %s108 = sor.u32 %s106, %s107
      %p109 = scmp.eq.s32.totalorder %s108, 0
      %s111 = sadd.s32 %s110, 1
      %s112 = scalar_select %p109, %s110, %s111
      %p115 = pneg %p109
      %p116 = scmp.eq.s32.totalorder %s18, 1
      %p117 = por %p115, %p116
      %p118 = scmp.ne.s32.totalorder %s110, %s113
      %p119 = scmp.eq.s32.totalorder %s18, 0
      %p120 = por %p118, %p119
      %p121 = scmp.ne.s32.totalorder %s110, %s113
      %p122 = scmp.eq.s32.totalorder %s23, 1
      %p123 = por %p121, %p122
      %p124 = scmp.ne.s32.totalorder %s113, %s114
      %p125 = scmp.eq.s32.totalorder %s23, 0
      %p126 = por %p124, %p125
      %p127 = scmp.ne.s32.totalorder %s113, %s114
      %p128 = scmp.eq.s32.totalorder %s24, 1
      %p129 = por %p127, %p128
      %p131 = scmp.ne.s32.totalorder %s114, %s130
      %p132 = scmp.eq.s32.totalorder %s24, 0
      %p133 = por %p131, %p132
      %s134 = ssub.s32 %s25, %s37
      %p135 = scmp.eq.s32.totalorder %s134, 0
      %s137 = sadd.s32 %s136, 1
      %s138 = scalar_select %p135, %s136, %s137
      %p141 = pneg %p135
      %p142 = scmp.eq.s32.totalorder %s18, 1
      %p143 = por %p141, %p142
      %p144 = scmp.ne.s32.totalorder %s136, %s139
      %p145 = scmp.eq.s32.totalorder %s18, 0
      %p146 = por %p144, %p145
      %p147 = scmp.ne.s32.totalorder %s136, %s139
      %p148 = scmp.eq.s32.totalorder %s23, 1
      %p149 = por %p147, %p148
      %p150 = scmp.ne.s32.totalorder %s139, %s140
      %p151 = scmp.eq.s32.totalorder %s23, 0
      %p152 = por %p150, %p151
      %p153 = scmp.ne.s32.totalorder %s139, %s140
      %p154 = scmp.eq.s32.totalorder %s24, 1
      %p155 = por %p153, %p154
      %p157 = scmp.ne.s32.totalorder %s140, %s156
      %p158 = scmp.eq.s32.totalorder %s24, 0
      %p159 = por %p157, %p158
      %s160 = ssub.s32 %s25, %s37
      %p161 = scmp.eq.s32.totalorder %s160, 0
      %s163 = sadd.s32 %s162, 1
      %s164 = scalar_select %p161, %s162, %s163
      %p167 = pneg %p161
      %p168 = scmp.eq.s32.totalorder %s18, 1
      %p169 = por %p167, %p168
      %p170 = scmp.ne.s32.totalorder %s162, %s165
      %p171 = scmp.eq.s32.totalorder %s18, 0
      %p172 = por %p170, %p171
      %p173 = scmp.ne.s32.totalorder %s162, %s165
      %p174 = scmp.eq.s32.totalorder %s23, 1
      %p175 = por %p173, %p174
      %p176 = scmp.ne.s32.totalorder %s165, %s166
      %p177 = scmp.eq.s32.totalorder %s23, 0
      %p178 = por %p176, %p177
      %p179 = scmp.ne.s32.totalorder %s165, %s166
      %p180 = scmp.eq.s32.totalorder %s24, 1
      %p181 = por %p179, %p180
      %p183 = scmp.ne.s32.totalorder %s166, %s182
      %p184 = scmp.eq.s32.totalorder %s24, 0
      %p185 = por %p183, %p184
      %p186 = scmp.le.s32.totalorder 1, %s18
      %p187 = scmp.lt.s32.totalorder %s18, 3
      %p188 = pnand %p186, %p187
      %p189 = pneg %p188
      // Predicated region
      $region9: #{tpu_custom_call.1} parent=5 // pred_check
        _
      $region10: #{tpu_custom_call.1} parent=5 // pred_check_branch
        %191 = sbr.rel (%p188) target = $region12
      $region11: #{tpu_custom_call.1} parent=5 // pred_region
        %s192 = ssub.s32 %s18, 1
        // Predicated region
        $region13: #{tpu_custom_call.1} parent=11 // pred_check
          %p193 = pneg %p77
        $region14: #{tpu_custom_call.1} parent=11 // pred_check_branch
          %195 = sbr.rel (%p193) target = $region16
        $region15: #{tpu_custom_call.1} parent=11 // pred_region
          _
        $region16: #{tpu_custom_call.1} parent=11 // pred_fallthru
          _
        // Predicated region
        $region17: #{tpu_custom_call.1} parent=11 // pred_check
          %p196 = pneg %p98
        $region18: #{tpu_custom_call.1} parent=11 // pred_check_branch
          %198 = sbr.rel (%p196) target = $region20
        $region19: #{tpu_custom_call.1} parent=11 // pred_region
          _
        $region20: #{tpu_custom_call.1} parent=11 // pred_fallthru
          _
      $region12: #{tpu_custom_call.1} parent=5 // pred_fallthru
        _
      %p199 = scmp.lt.s32.totalorder %s18, 2
      // Predicated region
      $region21: #{tpu_custom_call.1} parent=5 // pred_check
        %p200 = pneg %p199
      $region22: #{tpu_custom_call.1} parent=5 // pred_check_branch
        %202 = sbr.rel (%p200) target = $region24
      $region23: #{tpu_custom_call.1} parent=5 // pred_region
        // Predicated region
        $region25: #{tpu_custom_call.1} parent=23 // pred_check
          %p203 = pneg %p50
        $region26: #{tpu_custom_call.1} parent=23 // pred_check_branch
          %205 = sbr.rel (%p203) target = $region28
        $region27: #{tpu_custom_call.1} parent=23 // pred_region
          %p206 = scmp.lt.s32.totalorder %s25, 1
          %s207 = scalar_select %p206, %s25, 1
          %s208 = smul.addr %s207, 54
          %s209 = smul.addr %s208, 4
          %s210 = scalar_lea.vmem %s0, %s209
        $region28: #{tpu_custom_call.1} parent=23 // pred_fallthru
          _
      $region24: #{tpu_custom_call.1} parent=5 // pred_fallthru
        _
      %p211 = scmp.le.s32.totalorder 1, %s18
      %p212 = scmp.lt.s32.totalorder %s18, 3
      %p213 = pnand %p211, %p212
      %p214 = pneg %p213
      // Predicated region
      $region29: #{tpu_custom_call.1} parent=5 // pred_check
        _
      $region30: #{tpu_custom_call.1} parent=5 // pred_check_branch
        %216 = sbr.rel (%p213) target = $region32
      $region31: #{tpu_custom_call.1} parent=5 // pred_region
        %s217 = ssub.s32 %s18, 1
        %p218 = scmp.lt.s32.totalorder %s27, 1
        %s219 = scalar_select %p218, %s27, 1
        %s220 = smul.addr %s219, 54
        %s221 = smul.addr %s220, 4
        %s222 = scalar_lea.vmem %s0, %s221
        %p223 = pneg %p56
        %p224 = pneg %p53
        %p225 = pneg %p77
        %p226 = pneg %p74
        %p227 = pneg %p98
        %p228 = pneg %p95
        %p229 = pneg %p126
        %p230 = pneg %p123
        %s231 = sand.u32 %s113, 1
        %s232 = scalar_lea.sflag [#allocation3], %s231
        %s233 = sand.u32 %s113, 1
        %s234 = smul.addr %s233, 256
        %s235 = scalar_lea.vmem [#allocation2], %s234
        %p236 = pneg %p152
        %p237 = pneg %p149
        %s238 = sand.u32 %s23, 1
        %s239 = scalar_lea.sflag [#allocation5], %s238
        %s240 = sand.u32 %s139, 1
        %s241 = smul.addr %s240, 8
        %s242 = scalar_lea.vmem [#allocation4], %s241
        %p243 = pneg %p178
        %p244 = pneg %p175
        %s245 = sand.u32 %s23, 1
        %s246 = scalar_lea.sflag [#allocation5], %s245
        %s247 = sand.u32 %s165, 1
        %s248 = smul.addr %s247, 8
        %s249 = scalar_lea.vmem [#allocation6], %s248
        %p250 = scmp.lt.s32.totalorder %s27, 1
        %s251 = scalar_select %p250, %s27, 1
        %s252 = smul.addr %s251, 54
        %s253 = smul.addr %s252, 4
        %s254 = scalar_lea.vmem %s0, %s253
        %s255 = smul.u32 32, %s28
        %p257 = scmp.eq.s32.totalorder %s28, 0
        // Predicated region
        $region33: #{tpu_custom_call.1} parent=31 // pred_check
          %p258 = pneg %p257
        $region34: #{tpu_custom_call.1} parent=31 // pred_check_branch
          %260 = sbr.rel (%p258) target = $region36
        $region35: #{tpu_custom_call.1} parent=31 // pred_region
          %261 = vst [vmem:[%s242] sm:$0xff] 0.0
          %262 = vst [vmem:[%s249] sm:$0xff] 0.0
        $region36: #{tpu_custom_call.1} parent=31 // pred_fallthru
          _
        %s263 = smul.u32 %s28, 16
        %s264 = smul.u32 %s263, 3
        %s265 = smul.addr %s264, 4
        %s266 = scalar_lea.vmem %s254, %s265
        %v267 = vld [vmem:[%s266] sm:$0xf]
        %v268 = vld [vmem:[%s266 + $0x4] sm:$0xf]
        %v269 = vld [vmem:[%s266 + $0xc] sm:$0xf]
        %v270 = vld [vmem:[%s266 + $0x10] sm:$0xf]
        %v271 = vld [vmem:[%s266 + $0x18] sm:$0xf]
        %v272 = vld [vmem:[%s266 + $0x1c] sm:$0xf]
        %v273 = vld [vmem:[%s266 + $0x24] sm:$0xf]
        %v274 = vld [vmem:[%s266 + $0x28] sm:$0xf]
        %v275 = vld [vmem:[%s266 + $0x30] sm:$0xf]
        %v276 = vld [vmem:[%s266 + $0x34] sm:$0xf]
        %v277 = vld [vmem:[%s266 + $0x3c] sm:$0xf]
        %v278 = vld [vmem:[%s266 + $0x40] sm:$0xf]
        %v279 = vld [vmem:[%s266 + $0x48] sm:$0xf]
        %v280 = vld [vmem:[%s266 + $0x4c] sm:$0xf]
        %v281 = vld [vmem:[%s266 + $0x54] sm:$0xf]
        %v282 = vld [vmem:[%s266 + $0x58] sm:$0xf]
        %v283 = vld [vmem:[%s266 + $0x60] sm:$0xf]
        %v284 = vld [vmem:[%s266 + $0x64] sm:$0xf]
        %v285 = vld [vmem:[%s266 + $0x6c] sm:$0xf]
        %v286 = vld [vmem:[%s266 + $0x70] sm:$0xf]
        %v287 = vld [vmem:[%s266 + $0x78] sm:$0xf]
        %v288 = vld [vmem:[%s266 + $0x7c] sm:$0xf]
        %v289 = vld [vmem:[%s266 + $0x84] sm:$0xf]
        %v290 = vld [vmem:[%s266 + $0x88] sm:$0xf]
        %v291 = vld [vmem:[%s266 + $0x90] sm:$0xf]
        %v292 = vld [vmem:[%s266 + $0x94] sm:$0xf]
        %v293 = vld [vmem:[%s266 + $0x9c] sm:$0xf]
        %v294 = vld [vmem:[%s266 + $0xa0] sm:$0xf]
        %v295 = vld [vmem:[%s266 + $0xa8] sm:$0xf]
        %v296 = vld [vmem:[%s266 + $0xac] sm:$0xf]
        %v297 = vld [vmem:[%s266 + $0xb4] sm:$0xf]
        %v298 = vld [vmem:[%s266 + $0xb8] sm:$0xf]
        %v299 = vld [vmem:[%s1] sm:$0x3]
        %v300 = vld [vmem:[%s266 + $0x8] sm:$0x1]
        %v301 = vld [vmem:[%s266 + $0x14] sm:$0x1]
        %v302 = vld [vmem:[%s266 + $0x20] sm:$0x1]
        %v303 = vld [vmem:[%s266 + $0x2c] sm:$0x1]
        %v304 = vld [vmem:[%s266 + $0x38] sm:$0x1]
        %v305 = vld [vmem:[%s266 + $0x44] sm:$0x1]
        %v306 = vld [vmem:[%s266 + $0x50] sm:$0x1]
        %v307 = vld [vmem:[%s266 + $0x5c] sm:$0x1]
        %v308 = vld [vmem:[%s266 + $0x68] sm:$0x1]
        %v309 = vld [vmem:[%s266 + $0x74] sm:$0x1]
        %v310 = vld [vmem:[%s266 + $0x80] sm:$0x1]
        %v311 = vld [vmem:[%s266 + $0x8c] sm:$0x1]
        %v312 = vld [vmem:[%s266 + $0x98] sm:$0x1]
        %v313 = vld [vmem:[%s266 + $0xa4] sm:$0x1]
        %v314 = vld [vmem:[%s266 + $0xb0] sm:$0x1]
        %v315 = vld [vmem:[%s266 + $0xbc] sm:$0x1]
        %vm316 = vsmask.f32 3328
        %vm317 = vsmask.f32 7440
        %vm318 = vmor %vm316, %vm317
        %v320 = vshrl.u32 %v267, 16
        %v322 = vrot.slane %v320, 4
        %v323 = vshll.u32 %v267, 16
        %v325 = vrot.slane %v323, 5
        %v326 = vor.u32 %v322, %v325
        %v327 = vrot.slane %v326, 4
        %v329 = vshll.u32 %v268, 16
        %v331 = vrot.slane %v329, 5
        %v332 = vsel %vm318, %v327, %v331
        %v333 = vshrl.u32 %v268, 16
        %v335 = vrot.slane %v333, 4
        %v336 = vor.u32 %v335, %v331
        %v337 = vrot.slane %v336, 4
        %v339 = vshll.u32 %v300, 16
        %v341 = vrot.slane %v339, 5
        %v342 = vsel %vm318, %v337, %v341
        %v344 = vshrl.u32 %v269, 16
        %v346 = vrot.slane %v344, 4
        %v347 = vshll.u32 %v269, 16
        %v349 = vrot.slane %v347, 5
        %v350 = vor.u32 %v346, %v349
        %v351 = vrot.slane %v350, 4
        %v353 = vshll.u32 %v270, 16
        %v355 = vrot.slane %v353, 5
        %v356 = vsel %vm318, %v351, %v355
        %v357 = vshrl.u32 %v270, 16
        %v359 = vrot.slane %v357, 4
        %v360 = vor.u32 %v359, %v355
        %v361 = vrot.slane %v360, 4
        %v363 = vshll.u32 %v301, 16
        %v365 = vrot.slane %v363, 5
        %v366 = vsel %vm318, %v361, %v365
        %v368 = vshrl.u32 %v271, 16
        %v370 = vrot.slane %v368, 4
        %v371 = vshll.u32 %v271, 16
        %v373 = vrot.slane %v371, 5
        %v374 = vor.u32 %v370, %v373
        %v375 = vrot.slane %v374, 4
        %v377 = vshll.u32 %v272, 16
        %v379 = vrot.slane %v377, 5
        %v380 = vsel %vm318, %v375, %v379
        %v381 = vshrl.u32 %v272, 16
        %v383 = vrot.slane %v381, 4
        %v384 = vor.u32 %v383, %v379
        %v385 = vrot.slane %v384, 4
        %v387 = vshll.u32 %v302, 16
        %v389 = vrot.slane %v387, 5
        %v390 = vsel %vm318, %v385, %v389
        %v392 = vshrl.u32 %v273, 16
        %v394 = vrot.slane %v392, 4
        %v395 = vshll.u32 %v273, 16
        %v397 = vrot.slane %v395, 5
        %v398 = vor.u32 %v394, %v397
        %v399 = vrot.slane %v398, 4
        %v401 = vshll.u32 %v274, 16
        %v403 = vrot.slane %v401, 5
        %v404 = vsel %vm318, %v399, %v403
        %v405 = vshrl.u32 %v274, 16
        %v407 = vrot.slane %v405, 4
        %v408 = vor.u32 %v407, %v403
        %v409 = vrot.slane %v408, 4
        %v411 = vshll.u32 %v303, 16
        %v413 = vrot.slane %v411, 5
        %v414 = vsel %vm318, %v409, %v413
        %v416 = vshrl.u32 %v275, 16
        %v418 = vrot.slane %v416, 4
        %v419 = vshll.u32 %v275, 16
        %v421 = vrot.slane %v419, 5
        %v422 = vor.u32 %v418, %v421
        %v423 = vrot.slane %v422, 4
        %v425 = vshll.u32 %v276, 16
        %v427 = vrot.slane %v425, 5
        %v428 = vsel %vm318, %v423, %v427
        %v429 = vshrl.u32 %v276, 16
        %v431 = vrot.slane %v429, 4
        %v432 = vor.u32 %v431, %v427
        %v433 = vrot.slane %v432, 4
        %v435 = vshll.u32 %v304, 16
        %v437 = vrot.slane %v435, 5
        %v438 = vsel %vm318, %v433, %v437
        %v440 = vshrl.u32 %v277, 16
        %v442 = vrot.slane %v440, 4
        %v443 = vshll.u32 %v277, 16
        %v445 = vrot.slane %v443, 5
        %v446 = vor.u32 %v442, %v445
        %v447 = vrot.slane %v446, 4
        %v449 = vshll.u32 %v278, 16
        %v451 = vrot.slane %v449, 5
        %v452 = vsel %vm318, %v447, %v451
        %v453 = vshrl.u32 %v278, 16
        %v455 = vrot.slane %v453, 4
        %v456 = vor.u32 %v455, %v451
        %v457 = vrot.slane %v456, 4
        %v459 = vshll.u32 %v305, 16
        %v461 = vrot.slane %v459, 5
        %v462 = vsel %vm318, %v457, %v461
        %v464 = vshrl.u32 %v279, 16
        %v466 = vrot.slane %v464, 4
        %v467 = vshll.u32 %v279, 16
        %v469 = vrot.slane %v467, 5
        %v470 = vor.u32 %v466, %v469
        %v471 = vrot.slane %v470, 4
        %v473 = vshll.u32 %v280, 16
        %v475 = vrot.slane %v473, 5
        %v476 = vsel %vm318, %v471, %v475
        %v477 = vshrl.u32 %v280, 16
        %v479 = vrot.slane %v477, 4
        %v480 = vor.u32 %v479, %v475
        %v481 = vrot.slane %v480, 4
        %v483 = vshll.u32 %v306, 16
        %v485 = vrot.slane %v483, 5
        %v486 = vsel %vm318, %v481, %v485
        %v488 = vshrl.u32 %v281, 16
        %v490 = vrot.slane %v488, 4
        %v491 = vshll.u32 %v281, 16
        %v493 = vrot.slane %v491, 5
        %v494 = vor.u32 %v490, %v493
        %v495 = vrot.slane %v494, 4
        %v497 = vshll.u32 %v282, 16
        %v499 = vrot.slane %v497, 5
        %v500 = vsel %vm318, %v495, %v499
        %v501 = vshrl.u32 %v282, 16
        %v503 = vrot.slane %v501, 4
        %v504 = vor.u32 %v503, %v499
        %v505 = vrot.slane %v504, 4
        %v507 = vshll.u32 %v307, 16
        %v509 = vrot.slane %v507, 5
        %v510 = vsel %vm318, %v505, %v509
        %v512 = vshrl.u32 %v283, 16
        %v514 = vrot.slane %v512, 4
        %v515 = vshll.u32 %v283, 16
        %v517 = vrot.slane %v515, 5
        %v518 = vor.u32 %v514, %v517
        %v519 = vrot.slane %v518, 4
        %v521 = vshll.u32 %v284, 16
        %v523 = vrot.slane %v521, 5
        %v524 = vsel %vm318, %v519, %v523
        %v525 = vshrl.u32 %v284, 16
        %v527 = vrot.slane %v525, 4
        %v528 = vor.u32 %v527, %v523
        %v529 = vrot.slane %v528, 4
        %v531 = vshll.u32 %v308, 16
        %v533 = vrot.slane %v531, 5
        %v534 = vsel %vm318, %v529, %v533
        %v536 = vshrl.u32 %v285, 16
        %v538 = vrot.slane %v536, 4
        %v539 = vshll.u32 %v285, 16
        %v541 = vrot.slane %v539, 5
        %v542 = vor.u32 %v538, %v541
        %v543 = vrot.slane %v542, 4
        %v545 = vshll.u32 %v286, 16
        %v547 = vrot.slane %v545, 5
        %v548 = vsel %vm318, %v543, %v547
        %v549 = vshrl.u32 %v286, 16
        %v551 = vrot.slane %v549, 4
        %v552 = vor.u32 %v551, %v547
        %v553 = vrot.slane %v552, 4
        %v555 = vshll.u32 %v309, 16
        %v557 = vrot.slane %v555, 5
        %v558 = vsel %vm318, %v553, %v557
        %v560 = vshrl.u32 %v287, 16
        %v562 = vrot.slane %v560, 4
        %v563 = vshll.u32 %v287, 16
        %v565 = vrot.slane %v563, 5
        %v566 = vor.u32 %v562, %v565
        %v567 = vrot.slane %v566, 4
        %v569 = vshll.u32 %v288, 16
        %v571 = vrot.slane %v569, 5
        %v572 = vsel %vm318, %v567, %v571
        %v573 = vshrl.u32 %v288, 16
        %v575 = vrot.slane %v573, 4
        %v576 = vor.u32 %v575, %v571
        %v577 = vrot.slane %v576, 4
        %v579 = vshll.u32 %v310, 16
        %v581 = vrot.slane %v579, 5
        %v582 = vsel %vm318, %v577, %v581
        %v584 = vshrl.u32 %v289, 16
        %v586 = vrot.slane %v584, 4
        %v587 = vshll.u32 %v289, 16
        %v589 = vrot.slane %v587, 5
        %v590 = vor.u32 %v586, %v589
        %v591 = vrot.slane %v590, 4
        %v593 = vshll.u32 %v290, 16
        %v595 = vrot.slane %v593, 5
        %v596 = vsel %vm318, %v591, %v595
        %v597 = vshrl.u32 %v290, 16
        %v599 = vrot.slane %v597, 4
        %v600 = vor.u32 %v599, %v595
        %v601 = vrot.slane %v600, 4
        %v603 = vshll.u32 %v311, 16
        %v605 = vrot.slane %v603, 5
        %v606 = vsel %vm318, %v601, %v605
        %v608 = vshrl.u32 %v291, 16
        %v610 = vrot.slane %v608, 4
        %v611 = vshll.u32 %v291, 16
        %v613 = vrot.slane %v611, 5
        %v614 = vor.u32 %v610, %v613
        %v615 = vrot.slane %v614, 4
        %v617 = vshll.u32 %v292, 16
        %v619 = vrot.slane %v617, 5
        %v620 = vsel %vm318, %v615, %v619
        %v621 = vshrl.u32 %v292, 16
        %v623 = vrot.slane %v621, 4
        %v624 = vor.u32 %v623, %v619
        %v625 = vrot.slane %v624, 4
        %v627 = vshll.u32 %v312, 16
        %v629 = vrot.slane %v627, 5
        %v630 = vsel %vm318, %v625, %v629
        %v632 = vshrl.u32 %v293, 16
        %v634 = vrot.slane %v632, 4
        %v635 = vshll.u32 %v293, 16
        %v637 = vrot.slane %v635, 5
        %v638 = vor.u32 %v634, %v637
        %v639 = vrot.slane %v638, 4
        %v641 = vshll.u32 %v294, 16
        %v643 = vrot.slane %v641, 5
        %v644 = vsel %vm318, %v639, %v643
        %v645 = vshrl.u32 %v294, 16
        %v647 = vrot.slane %v645, 4
        %v648 = vor.u32 %v647, %v643
        %v649 = vrot.slane %v648, 4
        %v651 = vshll.u32 %v313, 16
        %v653 = vrot.slane %v651, 5
        %v654 = vsel %vm318, %v649, %v653
        %v656 = vshrl.u32 %v295, 16
        %v658 = vrot.slane %v656, 4
        %v659 = vshll.u32 %v295, 16
        %v661 = vrot.slane %v659, 5
        %v662 = vor.u32 %v658, %v661
        %v663 = vrot.slane %v662, 4
        %v665 = vshll.u32 %v296, 16
        %v667 = vrot.slane %v665, 5
        %v668 = vsel %vm318, %v663, %v667
        %v669 = vshrl.u32 %v296, 16
        %v671 = vrot.slane %v669, 4
        %v672 = vor.u32 %v671, %v667
        %v673 = vrot.slane %v672, 4
        %v675 = vshll.u32 %v314, 16
        %v677 = vrot.slane %v675, 5
        %v678 = vsel %vm318, %v673, %v677
        %v680 = vshrl.u32 %v297, 16
        %v682 = vrot.slane %v680, 4
        %v683 = vshll.u32 %v297, 16
        %v685 = vrot.slane %v683, 5
        %v686 = vor.u32 %v682, %v685
        %v687 = vrot.slane %v686, 4
        %v689 = vshll.u32 %v298, 16
        %v691 = vrot.slane %v689, 5
        %v692 = vsel %vm318, %v687, %v691
        %v693 = vshrl.u32 %v298, 16
        %v695 = vrot.slane %v693, 4
        %v696 = vor.u32 %v695, %v691
        %v697 = vrot.slane %v696, 4
        %v699 = vshll.u32 %v315, 16
        %v701 = vrot.slane %v699, 5
        %v702 = vsel %vm318, %v697, %v701
        %s703 = scalar_lea.vmem %s1, 2
        %v704 = vld [vmem:[%s703] sm:$0x3]
        %v705 = vunpack.c.l.b16 %v332
        %v706 = vunpack.c.l.b16 %v342
        %v707 = vunpack.c.l.b16 %v356
        %v708 = vunpack.c.l.b16 %v366
        %v709 = vunpack.c.l.b16 %v380
        %v710 = vunpack.c.l.b16 %v390
        %v711 = vunpack.c.l.b16 %v404
        %v712 = vunpack.c.l.b16 %v414
        %v713 = vunpack.c.l.b16 %v428
        %v714 = vunpack.c.l.b16 %v438
        %v715 = vunpack.c.l.b16 %v452
        %v716 = vunpack.c.l.b16 %v462
        %v717 = vunpack.c.l.b16 %v476
        %v718 = vunpack.c.l.b16 %v486
        %v719 = vunpack.c.l.b16 %v500
        %v720 = vunpack.c.l.b16 %v510
        %v721 = vunpack.c.l.b16 %v524
        %v722 = vunpack.c.l.b16 %v534
        %v723 = vunpack.c.l.b16 %v548
        %v724 = vunpack.c.l.b16 %v558
        %v725 = vunpack.c.l.b16 %v572
        %v726 = vunpack.c.l.b16 %v582
        %v727 = vunpack.c.l.b16 %v596
        %v728 = vunpack.c.l.b16 %v606
        %v729 = vunpack.c.l.b16 %v620
        %v730 = vunpack.c.l.b16 %v630
        %v731 = vunpack.c.l.b16 %v644
        %v732 = vunpack.c.l.b16 %v654
        %v733 = vunpack.c.l.b16 %v668
        %v734 = vunpack.c.l.b16 %v678
        %v735 = vunpack.c.l.b16 %v692
        %v736 = vunpack.c.l.b16 %v702
        %v737 = vpack.c.b16 %v706, %v705
        %v738 = vpack.c.b16 %v708, %v707
        %v739 = vpack.c.b16 %v710, %v709
        %v740 = vpack.c.b16 %v712, %v711
        %v741 = vpack.c.b16 %v714, %v713
        %v742 = vpack.c.b16 %v716, %v715
        %v743 = vpack.c.b16 %v718, %v717
        %v744 = vpack.c.b16 %v720, %v719
        %v745 = vpack.c.b16 %v722, %v721
        %v746 = vpack.c.b16 %v724, %v723
        %v747 = vpack.c.b16 %v726, %v725
        %v748 = vpack.c.b16 %v728, %v727
        %v749 = vpack.c.b16 %v730, %v729
        %v750 = vpack.c.b16 %v732, %v731
        %v751 = vpack.c.b16 %v734, %v733
        %v752 = vpack.c.b16 %v736, %v735
        %vm753 = vcmask 31744
        %v755 = vsel %vm753, %v737, 0
        %v758 = vsel %vm753, %v738, 0
        %v761 = vsel %vm753, %v739, 0
        %v764 = vsel %vm753, %v740, 0
        %v767 = vsel %vm753, %v741, 0
        %v770 = vsel %vm753, %v742, 0
        %v773 = vsel %vm753, %v743, 0
        %v776 = vsel %vm753, %v744, 0
        %v779 = vsel %vm753, %v745, 0
        %v782 = vsel %vm753, %v746, 0
        %v785 = vsel %vm753, %v747, 0
        %v788 = vsel %vm753, %v748, 0
        %v791 = vsel %vm753, %v749, 0
        %v794 = vsel %vm753, %v750, 0
        %v797 = vsel %vm753, %v751, 0
        %v800 = vsel %vm753, %v752, 0
        %vm802 = vcmask 1041408
        %v804 = vsel %vm802, %v704, 0
        %806 = vmatpush.bf16.msra.mxu0 0
        %807 = vmatpush.bf16.msra.mxu0 0
        %808 = vmatpush.bf16.msra.mxu0 0
        %809 = vmatpush.bf16.msra.mxu0 0
        %810 = vmatpush.bf16.msra.mxu0 0
        %811 = vmatpush.bf16.msra.mxu0 0
        %812 = vmatpush.bf16.msra.mxu0 0
        %813 = vmatpush.bf16.msra.mxu0 %v804
        %814 = vmatmul.bf16.gmra.mxu0 %v755
        %v815 = vpop.f32.mrf.mxu0
        %v816 = vadd.f32 0.0, %v815
        %v817 = vpop.f32.mrf.mxu0
        %v818 = vadd.f32 0.0, %v817
        %819 = vmatmul.bf16.gmra.mxu0 %v758
        %v820 = vpop.f32.mrf.mxu0
        %v821 = vadd.f32 0.0, %v820
        %v822 = vpop.f32.mrf.mxu0
        %v823 = vadd.f32 0.0, %v822
        %824 = vmatmul.bf16.gmra.mxu0 %v761
        %v825 = vpop.f32.mrf.mxu0
        %v826 = vadd.f32 0.0, %v825
        %v827 = vpop.f32.mrf.mxu0
        %v828 = vadd.f32 0.0, %v827
        %829 = vmatmul.bf16.gmra.mxu0 %v764
        %v830 = vpop.f32.mrf.mxu0
        %v831 = vadd.f32 0.0, %v830
        %v832 = vpop.f32.mrf.mxu0
        %v833 = vadd.f32 0.0, %v832
        %834 = vmatmul.bf16.gmra.mxu0 %v767
        %v835 = vpop.f32.mrf.mxu0
        %v836 = vadd.f32 0.0, %v835
        %v837 = vpop.f32.mrf.mxu0
        %v838 = vadd.f32 0.0, %v837
        %839 = vmatmul.bf16.gmra.mxu0 %v770
        %v840 = vpop.f32.mrf.mxu0
        %v841 = vadd.f32 0.0, %v840
        %v842 = vpop.f32.mrf.mxu0
        %v843 = vadd.f32 0.0, %v842
        %844 = vmatmul.bf16.gmra.mxu0 %v773
        %v845 = vpop.f32.mrf.mxu0
        %v846 = vadd.f32 0.0, %v845
        %v847 = vpop.f32.mrf.mxu0
        %v848 = vadd.f32 0.0, %v847
        %849 = vmatmul.bf16.gmra.mxu0 %v776
        %v850 = vpop.f32.mrf.mxu0
        %v851 = vadd.f32 0.0, %v850
        %v852 = vpop.f32.mrf.mxu0
        %v853 = vadd.f32 0.0, %v852
        %854 = vmatmul.bf16.gmra.mxu0 %v779
        %v855 = vpop.f32.mrf.mxu0
        %v856 = vadd.f32 0.0, %v855
        %v857 = vpop.f32.mrf.mxu0
        %v858 = vadd.f32 0.0, %v857
        %859 = vmatmul.bf16.gmra.mxu0 %v782
        %v860 = vpop.f32.mrf.mxu0
        %v861 = vadd.f32 0.0, %v860
        %v862 = vpop.f32.mrf.mxu0
        %v863 = vadd.f32 0.0, %v862
        %864 = vmatmul.bf16.gmra.mxu0 %v785
        %v865 = vpop.f32.mrf.mxu0
        %v866 = vadd.f32 0.0, %v865
        %v867 = vpop.f32.mrf.mxu0
        %v868 = vadd.f32 0.0, %v867
        %869 = vmatmul.bf16.gmra.mxu0 %v788
        %v870 = vpop.f32.mrf.mxu0
        %v871 = vadd.f32 0.0, %v870
        %v872 = vpop.f32.mrf.mxu0
        %v873 = vadd.f32 0.0, %v872
        %874 = vmatmul.bf16.gmra.mxu0 %v791
        %v875 = vpop.f32.mrf.mxu0
        %v876 = vadd.f32 0.0, %v875
        %v877 = vpop.f32.mrf.mxu0
        %v878 = vadd.f32 0.0, %v877
        %879 = vmatmul.bf16.gmra.mxu0 %v794
        %v880 = vpop.f32.mrf.mxu0
        %v881 = vadd.f32 0.0, %v880
        %v882 = vpop.f32.mrf.mxu0
        %v883 = vadd.f32 0.0, %v882
        %884 = vmatmul.bf16.gmra.mxu0 %v797
        %v885 = vpop.f32.mrf.mxu0
        %v886 = vadd.f32 0.0, %v885
        %v887 = vpop.f32.mrf.mxu0
        %v888 = vadd.f32 0.0, %v887
        %889 = vmatmul.bf16.gmra.mxu0 %v800
        %v890 = vpop.f32.mrf.mxu0
        %v891 = vadd.f32 0.0, %v890
        %v892 = vpop.f32.mrf.mxu0
        %v893 = vadd.f32 0.0, %v892
        %894 = vdwg.mxu0
        %v927 = vunpack.c.l.b16 %v267
        %v928 = vunpack.c.l.b16 %v268
        %v929 = vunpack.c.l.b16 %v269
        %v930 = vunpack.c.l.b16 %v270
        %v931 = vunpack.c.l.b16 %v271
        %v932 = vunpack.c.l.b16 %v272
        %v933 = vunpack.c.l.b16 %v273
        %v934 = vunpack.c.l.b16 %v274
        %v935 = vunpack.c.l.b16 %v275
        %v936 = vunpack.c.l.b16 %v276
        %v937 = vunpack.c.l.b16 %v277
        %v938 = vunpack.c.l.b16 %v278
        %v939 = vunpack.c.l.b16 %v279
        %v940 = vunpack.c.l.b16 %v280
        %v941 = vunpack.c.l.b16 %v281
        %v942 = vunpack.c.l.b16 %v282
        %v943 = vunpack.c.l.b16 %v283
        %v944 = vunpack.c.l.b16 %v284
        %v945 = vunpack.c.l.b16 %v285
        %v946 = vunpack.c.l.b16 %v286
        %v947 = vunpack.c.l.b16 %v287
        %v948 = vunpack.c.l.b16 %v288
        %v949 = vunpack.c.l.b16 %v289
        %v950 = vunpack.c.l.b16 %v290
        %v951 = vunpack.c.l.b16 %v291
        %v952 = vunpack.c.l.b16 %v292
        %v953 = vunpack.c.l.b16 %v293
        %v954 = vunpack.c.l.b16 %v294
        %v955 = vunpack.c.l.b16 %v295
        %v956 = vunpack.c.l.b16 %v296
        %v957 = vunpack.c.l.b16 %v297
        %v958 = vunpack.c.l.b16 %v298
        %v959 = vpack.c.b16 %v928, %v927
        %v960 = vpack.c.b16 %v930, %v929
        %v961 = vpack.c.b16 %v932, %v931
        %v962 = vpack.c.b16 %v934, %v933
        %v963 = vpack.c.b16 %v936, %v935
        %v964 = vpack.c.b16 %v938, %v937
        %v965 = vpack.c.b16 %v940, %v939
        %v966 = vpack.c.b16 %v942, %v941
        %v967 = vpack.c.b16 %v944, %v943
        %v968 = vpack.c.b16 %v946, %v945
        %v969 = vpack.c.b16 %v948, %v947
        %v970 = vpack.c.b16 %v950, %v949
        %v971 = vpack.c.b16 %v952, %v951
        %v972 = vpack.c.b16 %v954, %v953
        %v973 = vpack.c.b16 %v956, %v955
        %v974 = vpack.c.b16 %v958, %v957
        %v976 = vsel %vm753, %v959, 0
        %v979 = vsel %vm753, %v960, 0
        %v982 = vsel %vm753, %v961, 0
        %v985 = vsel %vm753, %v962, 0
        %v988 = vsel %vm753, %v963, 0
        %v991 = vsel %vm753, %v964, 0
        %v994 = vsel %vm753, %v965, 0
        %v997 = vsel %vm753, %v966, 0
        %v1000 = vsel %vm753, %v967, 0
        %v1003 = vsel %vm753, %v968, 0
        %v1006 = vsel %vm753, %v969, 0
        %v1009 = vsel %vm753, %v970, 0
        %v1012 = vsel %vm753, %v971, 0
        %v1015 = vsel %vm753, %v972, 0
        %v1018 = vsel %vm753, %v973, 0
        %v1021 = vsel %vm753, %v974, 0
        %v1024 = vsel %vm802, %v299, 0
        %1026 = vmatpush.bf16.msra.mxu0 0
        %1027 = vmatpush.bf16.msra.mxu0 0
        %1028 = vmatpush.bf16.msra.mxu0 0
        %1029 = vmatpush.bf16.msra.mxu0 0
        %1030 = vmatpush.bf16.msra.mxu0 0
        %1031 = vmatpush.bf16.msra.mxu0 0
        %1032 = vmatpush.bf16.msra.mxu0 0
        %1033 = vmatpush.bf16.msra.mxu0 %v1024
        %1034 = vmatmul.bf16.gmra.mxu0 %v976
        %v1035 = vpop.f32.mrf.mxu0
        %v1036 = vadd.f32 %v816, %v1035
        %v1037 = vpop.f32.mrf.mxu0
        %v1038 = vadd.f32 %v818, %v1037
        %1039 = vmatmul.bf16.gmra.mxu0 %v979
        %v1040 = vpop.f32.mrf.mxu0
        %v1041 = vadd.f32 %v821, %v1040
        %v1042 = vpop.f32.mrf.mxu0
        %v1043 = vadd.f32 %v823, %v1042
        %1044 = vmatmul.bf16.gmra.mxu0 %v982
        %v1045 = vpop.f32.mrf.mxu0
        %v1046 = vadd.f32 %v826, %v1045
        %v1047 = vpop.f32.mrf.mxu0
        %v1048 = vadd.f32 %v828, %v1047
        %1049 = vmatmul.bf16.gmra.mxu0 %v985
        %v1050 = vpop.f32.mrf.mxu0
        %v1051 = vadd.f32 %v831, %v1050
        %v1052 = vpop.f32.mrf.mxu0
        %v1053 = vadd.f32 %v833, %v1052
        %1054 = vmatmul.bf16.gmra.mxu0 %v988
        %v1055 = vpop.f32.mrf.mxu0
        %v1056 = vadd.f32 %v836, %v1055
        %v1057 = vpop.f32.mrf.mxu0
        %v1058 = vadd.f32 %v838, %v1057
        %1059 = vmatmul.bf16.gmra.mxu0 %v991
        %v1060 = vpop.f32.mrf.mxu0
        %v1061 = vadd.f32 %v841, %v1060
        %v1062 = vpop.f32.mrf.mxu0
        %v1063 = vadd.f32 %v843, %v1062
        %1064 = vmatmul.bf16.gmra.mxu0 %v994
        %v1065 = vpop.f32.mrf.mxu0
        %v1066 = vadd.f32 %v846, %v1065
        %v1067 = vpop.f32.mrf.mxu0
        %v1068 = vadd.f32 %v848, %v1067
        %1069 = vmatmul.bf16.gmra.mxu0 %v997
        %v1070 = vpop.f32.mrf.mxu0
        %v1071 = vadd.f32 %v851, %v1070
        %v1072 = vpop.f32.mrf.mxu0
        %v1073 = vadd.f32 %v853, %v1072
        %1074 = vmatmul.bf16.gmra.mxu0 %v1000
        %v1075 = vpop.f32.mrf.mxu0
        %v1076 = vadd.f32 %v856, %v1075
        %v1077 = vpop.f32.mrf.mxu0
        %v1078 = vadd.f32 %v858, %v1077
        %1079 = vmatmul.bf16.gmra.mxu0 %v1003
        %v1080 = vpop.f32.mrf.mxu0
        %v1081 = vadd.f32 %v861, %v1080
        %v1082 = vpop.f32.mrf.mxu0
        %v1083 = vadd.f32 %v863, %v1082
        %1084 = vmatmul.bf16.gmra.mxu0 %v1006
        %v1085 = vpop.f32.mrf.mxu0
        %v1086 = vadd.f32 %v866, %v1085
        %v1087 = vpop.f32.mrf.mxu0
        %v1088 = vadd.f32 %v868, %v1087
        %1089 = vmatmul.bf16.gmra.mxu0 %v1009
        %v1090 = vpop.f32.mrf.mxu0
        %v1091 = vadd.f32 %v871, %v1090
        %v1092 = vpop.f32.mrf.mxu0
        %v1093 = vadd.f32 %v873, %v1092
        %1094 = vmatmul.bf16.gmra.mxu0 %v1012
        %v1095 = vpop.f32.mrf.mxu0
        %v1096 = vadd.f32 %v876, %v1095
        %v1097 = vpop.f32.mrf.mxu0
        %v1098 = vadd.f32 %v878, %v1097
        %1099 = vmatmul.bf16.gmra.mxu0 %v1015
        %v1100 = vpop.f32.mrf.mxu0
        %v1101 = vadd.f32 %v881, %v1100
        %v1102 = vpop.f32.mrf.mxu0
        %v1103 = vadd.f32 %v883, %v1102
        %1104 = vmatmul.bf16.gmra.mxu0 %v1018
        %v1105 = vpop.f32.mrf.mxu0
        %v1106 = vadd.f32 %v886, %v1105
        %v1107 = vpop.f32.mrf.mxu0
        %v1108 = vadd.f32 %v888, %v1107
        %1109 = vmatmul.bf16.gmra.mxu0 %v1021
        %v1110 = vpop.f32.mrf.mxu0
        %v1111 = vadd.f32 %v891, %v1110
        %v1112 = vpop.f32.mrf.mxu0
        %v1113 = vadd.f32 %v893, %v1112
        %1114 = vdwg.mxu0
        %v1115 = vld [vmem:[%s266] sm:$0xe]
        %v1116 = vld [vmem:[%s266 + $0xc] sm:$0xe]
        %v1117 = vld [vmem:[%s266 + $0x18] sm:$0xe]
        %v1118 = vld [vmem:[%s266 + $0x24] sm:$0xe]
        %v1119 = vld [vmem:[%s266 + $0x30] sm:$0xe]
        %v1120 = vld [vmem:[%s266 + $0x3c] sm:$0xe]
        %v1121 = vld [vmem:[%s266 + $0x48] sm:$0xe]
        %v1122 = vld [vmem:[%s266 + $0x54] sm:$0xe]
        %v1123 = vld [vmem:[%s266 + $0x60] sm:$0xe]
        %v1124 = vld [vmem:[%s266 + $0x6c] sm:$0xe]
        %v1125 = vld [vmem:[%s266 + $0x78] sm:$0xe]
        %v1126 = vld [vmem:[%s266 + $0x84] sm:$0xe]
        %v1127 = vld [vmem:[%s266 + $0x90] sm:$0xe]
        %v1128 = vld [vmem:[%s266 + $0x9c] sm:$0xe]
        %v1129 = vld [vmem:[%s266 + $0xa8] sm:$0xe]
        %v1130 = vld [vmem:[%s266 + $0xb4] sm:$0xe]
        %vm1163 = vcmask 1042432
        %vm1164 = vcmask 1046532
        %vm1165 = vmor %vm1163, %vm1164
        %v1166 = vrot.slane %v1115, 5
        %v1167 = vrot.slane %v1166, 4
        %v1168 = vrot.slane %v268, 5
        %v1169 = vsel %vm1165, %v1167, %v1168
        %v1170 = vrot.slane %v1168, 4
        %v1171 = vrot.slane %v300, 5
        %v1172 = vsel %vm1165, %v1170, %v1171
        %v1173 = vrot.slane %v1116, 5
        %v1174 = vrot.slane %v1173, 4
        %v1175 = vrot.slane %v270, 5
        %v1176 = vsel %vm1165, %v1174, %v1175
        %v1177 = vrot.slane %v1175, 4
        %v1178 = vrot.slane %v301, 5
        %v1179 = vsel %vm1165, %v1177, %v1178
        %v1180 = vrot.slane %v1117, 5
        %v1181 = vrot.slane %v1180, 4
        %v1182 = vrot.slane %v272, 5
        %v1183 = vsel %vm1165, %v1181, %v1182
        %v1184 = vrot.slane %v1182, 4
        %v1185 = vrot.slane %v302, 5
        %v1186 = vsel %vm1165, %v1184, %v1185
        %v1187 = vrot.slane %v1118, 5
        %v1188 = vrot.slane %v1187, 4
        %v1189 = vrot.slane %v274, 5
        %v1190 = vsel %vm1165, %v1188, %v1189
        %v1191 = vrot.slane %v1189, 4
        %v1192 = vrot.slane %v303, 5
        %v1193 = vsel %vm1165, %v1191, %v1192
        %v1194 = vrot.slane %v1119, 5
        %v1195 = vrot.slane %v1194, 4
        %v1196 = vrot.slane %v276, 5
        %v1197 = vsel %vm1165, %v1195, %v1196
        %v1198 = vrot.slane %v1196, 4
        %v1199 = vrot.slane %v304, 5
        %v1200 = vsel %vm1165, %v1198, %v1199
        %v1201 = vrot.slane %v1120, 5
        %v1202 = vrot.slane %v1201, 4
        %v1203 = vrot.slane %v278, 5
        %v1204 = vsel %vm1165, %v1202, %v1203
        %v1205 = vrot.slane %v1203, 4
        %v1206 = vrot.slane %v305, 5
        %v1207 = vsel %vm1165, %v1205, %v1206
        %v1208 = vrot.slane %v1121, 5
        %v1209 = vrot.slane %v1208, 4
        %v1210 = vrot.slane %v280, 5
        %v1211 = vsel %vm1165, %v1209, %v1210
        %v1212 = vrot.slane %v1210, 4
        %v1213 = vrot.slane %v306, 5
        %v1214 = vsel %vm1165, %v1212, %v1213
        %v1215 = vrot.slane %v1122, 5
        %v1216 = vrot.slane %v1215, 4
        %v1217 = vrot.slane %v282, 5
        %v1218 = vsel %vm1165, %v1216, %v1217
        %v1219 = vrot.slane %v1217, 4
        %v1220 = vrot.slane %v307, 5
        %v1221 = vsel %vm1165, %v1219, %v1220
        %v1222 = vrot.slane %v1123, 5
        %v1223 = vrot.slane %v1222, 4
        %v1224 = vrot.slane %v284, 5
        %v1225 = vsel %vm1165, %v1223, %v1224
        %v1226 = vrot.slane %v1224, 4
        %v1227 = vrot.slane %v308, 5
        %v1228 = vsel %vm1165, %v1226, %v1227
        %v1229 = vrot.slane %v1124, 5
        %v1230 = vrot.slane %v1229, 4
        %v1231 = vrot.slane %v286, 5
        %v1232 = vsel %vm1165, %v1230, %v1231
        %v1233 = vrot.slane %v1231, 4
        %v1234 = vrot.slane %v309, 5
        %v1235 = vsel %vm1165, %v1233, %v1234
        %v1236 = vrot.slane %v1125, 5
        %v1237 = vrot.slane %v1236, 4
        %v1238 = vrot.slane %v288, 5
        %v1239 = vsel %vm1165, %v1237, %v1238
        %v1240 = vrot.slane %v1238, 4
        %v1241 = vrot.slane %v310, 5
        %v1242 = vsel %vm1165, %v1240, %v1241
        %v1243 = vrot.slane %v1126, 5
        %v1244 = vrot.slane %v1243, 4
        %v1245 = vrot.slane %v290, 5
        %v1246 = vsel %vm1165, %v1244, %v1245
        %v1247 = vrot.slane %v1245, 4
        %v1248 = vrot.slane %v311, 5
        %v1249 = vsel %vm1165, %v1247, %v1248
        %v1250 = vrot.slane %v1127, 5
        %v1251 = vrot.slane %v1250, 4
        %v1252 = vrot.slane %v292, 5
        %v1253 = vsel %vm1165, %v1251, %v1252
        %v1254 = vrot.slane %v1252, 4
        %v1255 = vrot.slane %v312, 5
        %v1256 = vsel %vm1165, %v1254, %v1255
        %v1257 = vrot.slane %v1128, 5
        %v1258 = vrot.slane %v1257, 4
        %v1259 = vrot.slane %v294, 5
        %v1260 = vsel %vm1165, %v1258, %v1259
        %v1261 = vrot.slane %v1259, 4
        %v1262 = vrot.slane %v313, 5
        %v1263 = vsel %vm1165, %v1261, %v1262
        %v1264 = vrot.slane %v1129, 5
        %v1265 = vrot.slane %v1264, 4
        %v1266 = vrot.slane %v296, 5
        %v1267 = vsel %vm1165, %v1265, %v1266
        %v1268 = vrot.slane %v1266, 4
        %v1269 = vrot.slane %v314, 5
        %v1270 = vsel %vm1165, %v1268, %v1269
        %v1271 = vrot.slane %v1130, 5
        %v1272 = vrot.slane %v1271, 4
        %v1273 = vrot.slane %v298, 5
        %v1274 = vsel %vm1165, %v1272, %v1273
        %v1275 = vrot.slane %v1273, 4
        %v1276 = vrot.slane %v315, 5
        %v1277 = vsel %vm1165, %v1275, %v1276
        %s1278 = scalar_lea.vmem %s1, 4
        %v1279 = vld [vmem:[%s1278] sm:$0x3]
        %v1280 = vunpack.c.l.b16 %v1169
        %v1281 = vunpack.c.l.b16 %v1172
        %v1282 = vunpack.c.l.b16 %v1176
        %v1283 = vunpack.c.l.b16 %v1179
        %v1284 = vunpack.c.l.b16 %v1183
        %v1285 = vunpack.c.l.b16 %v1186
        %v1286 = vunpack.c.l.b16 %v1190
        %v1287 = vunpack.c.l.b16 %v1193
        %v1288 = vunpack.c.l.b16 %v1197
        %v1289 = vunpack.c.l.b16 %v1200
        %v1290 = vunpack.c.l.b16 %v1204
        %v1291 = vunpack.c.l.b16 %v1207
        %v1292 = vunpack.c.l.b16 %v1211
        %v1293 = vunpack.c.l.b16 %v1214
        %v1294 = vunpack.c.l.b16 %v1218
        %v1295 = vunpack.c.l.b16 %v1221
        %v1296 = vunpack.c.l.b16 %v1225
        %v1297 = vunpack.c.l.b16 %v1228
        %v1298 = vunpack.c.l.b16 %v1232
        %v1299 = vunpack.c.l.b16 %v1235
        %v1300 = vunpack.c.l.b16 %v1239
        %v1301 = vunpack.c.l.b16 %v1242
        %v1302 = vunpack.c.l.b16 %v1246
        %v1303 = vunpack.c.l.b16 %v1249
        %v1304 = vunpack.c.l.b16 %v1253
        %v1305 = vunpack.c.l.b16 %v1256
        %v1306 = vunpack.c.l.b16 %v1260
        %v1307 = vunpack.c.l.b16 %v1263
        %v1308 = vunpack.c.l.b16 %v1267
        %v1309 = vunpack.c.l.b16 %v1270
        %v1310 = vunpack.c.l.b16 %v1274
        %v1311 = vunpack.c.l.b16 %v1277
        %v1312 = vpack.c.b16 %v1281, %v1280
        %v1313 = vpack.c.b16 %v1283, %v1282
        %v1314 = vpack.c.b16 %v1285, %v1284
        %v1315 = vpack.c.b16 %v1287, %v1286
        %v1316 = vpack.c.b16 %v1289, %v1288
        %v1317 = vpack.c.b16 %v1291, %v1290
        %v1318 = vpack.c.b16 %v1293, %v1292
        %v1319 = vpack.c.b16 %v1295, %v1294
        %v1320 = vpack.c.b16 %v1297, %v1296
        %v1321 = vpack.c.b16 %v1299, %v1298
        %v1322 = vpack.c.b16 %v1301, %v1300
        %v1323 = vpack.c.b16 %v1303, %v1302
        %v1324 = vpack.c.b16 %v1305, %v1304
        %v1325 = vpack.c.b16 %v1307, %v1306
        %v1326 = vpack.c.b16 %v1309, %v1308
        %v1327 = vpack.c.b16 %v1311, %v1310
        %v1329 = vsel %vm753, %v1312, 0
        %v1332 = vsel %vm753, %v1313, 0
        %v1335 = vsel %vm753, %v1314, 0
        %v1338 = vsel %vm753, %v1315, 0
        %v1341 = vsel %vm753, %v1316, 0
        %v1344 = vsel %vm753, %v1317, 0
        %v1347 = vsel %vm753, %v1318, 0
        %v1350 = vsel %vm753, %v1319, 0
        %v1353 = vsel %vm753, %v1320, 0
        %v1356 = vsel %vm753, %v1321, 0
        %v1359 = vsel %vm753, %v1322, 0
        %v1362 = vsel %vm753, %v1323, 0
        %v1365 = vsel %vm753, %v1324, 0
        %v1368 = vsel %vm753, %v1325, 0
        %v1371 = vsel %vm753, %v1326, 0
        %v1374 = vsel %vm753, %v1327, 0
        %v1377 = vsel %vm802, %v1279, 0
        %1379 = vmatpush.bf16.msra.mxu0 0
        %1380 = vmatpush.bf16.msra.mxu0 0
        %1381 = vmatpush.bf16.msra.mxu0 0
        %1382 = vmatpush.bf16.msra.mxu0 0
        %1383 = vmatpush.bf16.msra.mxu0 0
        %1384 = vmatpush.bf16.msra.mxu0 0
        %1385 = vmatpush.bf16.msra.mxu0 0
        %1386 = vmatpush.bf16.msra.mxu0 %v1377
        %1387 = vmatmul.bf16.gmra.mxu0 %v1329
        %v1388 = vpop.f32.mrf.mxu0
        %v1389 = vadd.f32 0.0, %v1388
        %v1390 = vpop.f32.mrf.mxu0
        %v1391 = vadd.f32 0.0, %v1390
        %1392 = vmatmul.bf16.gmra.mxu0 %v1332
        %v1393 = vpop.f32.mrf.mxu0
        %v1394 = vadd.f32 0.0, %v1393
        %v1395 = vpop.f32.mrf.mxu0
        %v1396 = vadd.f32 0.0, %v1395
        %1397 = vmatmul.bf16.gmra.mxu0 %v1335
        %v1398 = vpop.f32.mrf.mxu0
        %v1399 = vadd.f32 0.0, %v1398
        %v1400 = vpop.f32.mrf.mxu0
        %v1401 = vadd.f32 0.0, %v1400
        %1402 = vmatmul.bf16.gmra.mxu0 %v1338
        %v1403 = vpop.f32.mrf.mxu0
        %v1404 = vadd.f32 0.0, %v1403
        %v1405 = vpop.f32.mrf.mxu0
        %v1406 = vadd.f32 0.0, %v1405
        %1407 = vmatmul.bf16.gmra.mxu0 %v1341
        %v1408 = vpop.f32.mrf.mxu0
        %v1409 = vadd.f32 0.0, %v1408
        %v1410 = vpop.f32.mrf.mxu0
        %v1411 = vadd.f32 0.0, %v1410
        %1412 = vmatmul.bf16.gmra.mxu0 %v1344
        %v1413 = vpop.f32.mrf.mxu0
        %v1414 = vadd.f32 0.0, %v1413
        %v1415 = vpop.f32.mrf.mxu0
        %v1416 = vadd.f32 0.0, %v1415
        %1417 = vmatmul.bf16.gmra.mxu0 %v1347
        %v1418 = vpop.f32.mrf.mxu0
        %v1419 = vadd.f32 0.0, %v1418
        %v1420 = vpop.f32.mrf.mxu0
        %v1421 = vadd.f32 0.0, %v1420
        %1422 = vmatmul.bf16.gmra.mxu0 %v1350
        %v1423 = vpop.f32.mrf.mxu0
        %v1424 = vadd.f32 0.0, %v1423
        %v1425 = vpop.f32.mrf.mxu0
        %v1426 = vadd.f32 0.0, %v1425
        %1427 = vmatmul.bf16.gmra.mxu0 %v1353
        %v1428 = vpop.f32.mrf.mxu0
        %v1429 = vadd.f32 0.0, %v1428
        %v1430 = vpop.f32.mrf.mxu0
        %v1431 = vadd.f32 0.0, %v1430
        %1432 = vmatmul.bf16.gmra.mxu0 %v1356
        %v1433 = vpop.f32.mrf.mxu0
        %v1434 = vadd.f32 0.0, %v1433
        %v1435 = vpop.f32.mrf.mxu0
        %v1436 = vadd.f32 0.0, %v1435
        %1437 = vmatmul.bf16.gmra.mxu0 %v1359
        %v1438 = vpop.f32.mrf.mxu0
        %v1439 = vadd.f32 0.0, %v1438
        %v1440 = vpop.f32.mrf.mxu0
        %v1441 = vadd.f32 0.0, %v1440
        %1442 = vmatmul.bf16.gmra.mxu0 %v1362
        %v1443 = vpop.f32.mrf.mxu0
        %v1444 = vadd.f32 0.0, %v1443
        %v1445 = vpop.f32.mrf.mxu0
        %v1446 = vadd.f32 0.0, %v1445
        %1447 = vmatmul.bf16.gmra.mxu0 %v1365
        %v1448 = vpop.f32.mrf.mxu0
        %v1449 = vadd.f32 0.0, %v1448
        %v1450 = vpop.f32.mrf.mxu0
        %v1451 = vadd.f32 0.0, %v1450
        %1452 = vmatmul.bf16.gmra.mxu0 %v1368
        %v1453 = vpop.f32.mrf.mxu0
        %v1454 = vadd.f32 0.0, %v1453
        %v1455 = vpop.f32.mrf.mxu0
        %v1456 = vadd.f32 0.0, %v1455
        %1457 = vmatmul.bf16.gmra.mxu0 %v1371
        %v1458 = vpop.f32.mrf.mxu0
        %v1459 = vadd.f32 0.0, %v1458
        %v1460 = vpop.f32.mrf.mxu0
        %v1461 = vadd.f32 0.0, %v1460
        %1462 = vmatmul.bf16.gmra.mxu0 %v1374
        %v1463 = vpop.f32.mrf.mxu0
        %v1464 = vadd.f32 0.0, %v1463
        %v1465 = vpop.f32.mrf.mxu0
        %v1466 = vadd.f32 0.0, %v1465
        %1467 = vdwg.mxu0
        %v1468 = vadd.f32 %v1036, %v1389
        %v1469 = vadd.f32 %v1038, %v1391
        %v1470 = vadd.f32 %v1041, %v1394
        %v1471 = vadd.f32 %v1043, %v1396
        %v1472 = vadd.f32 %v1046, %v1399
        %v1473 = vadd.f32 %v1048, %v1401
        %v1474 = vadd.f32 %v1051, %v1404
        %v1475 = vadd.f32 %v1053, %v1406
        %v1476 = vadd.f32 %v1056, %v1409
        %v1477 = vadd.f32 %v1058, %v1411
        %v1478 = vadd.f32 %v1061, %v1414
        %v1479 = vadd.f32 %v1063, %v1416
        %v1480 = vadd.f32 %v1066, %v1419
        %v1481 = vadd.f32 %v1068, %v1421
        %v1482 = vadd.f32 %v1071, %v1424
        %v1483 = vadd.f32 %v1073, %v1426
        %v1484 = vadd.f32 %v1076, %v1429
        %v1485 = vadd.f32 %v1078, %v1431
        %v1486 = vadd.f32 %v1081, %v1434
        %v1487 = vadd.f32 %v1083, %v1436
        %v1488 = vadd.f32 %v1086, %v1439
        %v1489 = vadd.f32 %v1088, %v1441
        %v1490 = vadd.f32 %v1091, %v1444
        %v1491 = vadd.f32 %v1093, %v1446
        %v1492 = vadd.f32 %v1096, %v1449
        %v1493 = vadd.f32 %v1098, %v1451
        %v1494 = vadd.f32 %v1101, %v1454
        %v1495 = vadd.f32 %v1103, %v1456
        %v1496 = vadd.f32 %v1106, %v1459
        %v1497 = vadd.f32 %v1108, %v1461
        %v1498 = vadd.f32 %v1111, %v1464
        %v1499 = vadd.f32 %v1113, %v1466
        %s1500 = sadd.s32 %s263, 1
        %s1501 = smul.u32 %s1500, 3
        %s1502 = smul.addr %s1501, 4
        %s1503 = scalar_lea.vmem %s254, %s1502
        %v1504 = vld [vmem:[%s1503] sm:$0xf]
        %v1505 = vld [vmem:[%s1503 + $0x4] sm:$0xf]
        %v1506 = vld [vmem:[%s1503 + $0xc] sm:$0xf]
        %v1507 = vld [vmem:[%s1503 + $0x10] sm:$0xf]
        %v1508 = vld [vmem:[%s1503 + $0x18] sm:$0xf]
        %v1509 = vld [vmem:[%s1503 + $0x1c] sm:$0xf]
        %v1510 = vld [vmem:[%s1503 + $0x24] sm:$0xf]
        %v1511 = vld [vmem:[%s1503 + $0x28] sm:$0xf]
        %v1512 = vld [vmem:[%s1503 + $0x30] sm:$0xf]
        %v1513 = vld [vmem:[%s1503 + $0x34] sm:$0xf]
        %v1514 = vld [vmem:[%s1503 + $0x3c] sm:$0xf]
        %v1515 = vld [vmem:[%s1503 + $0x40] sm:$0xf]
        %v1516 = vld [vmem:[%s1503 + $0x48] sm:$0xf]
        %v1517 = vld [vmem:[%s1503 + $0x4c] sm:$0xf]
        %v1518 = vld [vmem:[%s1503 + $0x54] sm:$0xf]
        %v1519 = vld [vmem:[%s1503 + $0x58] sm:$0xf]
        %v1520 = vld [vmem:[%s1503 + $0x60] sm:$0xf]
        %v1521 = vld [vmem:[%s1503 + $0x64] sm:$0xf]
        %v1522 = vld [vmem:[%s1503 + $0x6c] sm:$0xf]
        %v1523 = vld [vmem:[%s1503 + $0x70] sm:$0xf]
        %v1524 = vld [vmem:[%s1503 + $0x78] sm:$0xf]
        %v1525 = vld [vmem:[%s1503 + $0x7c] sm:$0xf]
        %v1526 = vld [vmem:[%s1503 + $0x84] sm:$0xf]
        %v1527 = vld [vmem:[%s1503 + $0x88] sm:$0xf]
        %v1528 = vld [vmem:[%s1503 + $0x90] sm:$0xf]
        %v1529 = vld [vmem:[%s1503 + $0x94] sm:$0xf]
        %v1530 = vld [vmem:[%s1503 + $0x9c] sm:$0xf]
        %v1531 = vld [vmem:[%s1503 + $0xa0] sm:$0xf]
        %v1532 = vld [vmem:[%s1503 + $0xa8] sm:$0xf]
        %v1533 = vld [vmem:[%s1503 + $0xac] sm:$0xf]
        %v1534 = vld [vmem:[%s1503 + $0xb4] sm:$0xf]
        %v1535 = vld [vmem:[%s1503 + $0xb8] sm:$0xf]
        %s1536 = scalar_lea.vmem %s1, 6
        %v1537 = vld [vmem:[%s1536] sm:$0x3]
        %v1570 = vunpack.c.l.b16 %v1504
        %v1571 = vunpack.c.l.b16 %v1505
        %v1572 = vunpack.c.l.b16 %v1506
        %v1573 = vunpack.c.l.b16 %v1507
        %v1574 = vunpack.c.l.b16 %v1508
        %v1575 = vunpack.c.l.b16 %v1509
        %v1576 = vunpack.c.l.b16 %v1510
        %v1577 = vunpack.c.l.b16 %v1511
        %v1578 = vunpack.c.l.b16 %v1512
        %v1579 = vunpack.c.l.b16 %v1513
        %v1580 = vunpack.c.l.b16 %v1514
        %v1581 = vunpack.c.l.b16 %v1515
        %v1582 = vunpack.c.l.b16 %v1516
        %v1583 = vunpack.c.l.b16 %v1517
        %v1584 = vunpack.c.l.b16 %v1518
        %v1585 = vunpack.c.l.b16 %v1519
        %v1586 = vunpack.c.l.b16 %v1520
        %v1587 = vunpack.c.l.b16 %v1521
        %v1588 = vunpack.c.l.b16 %v1522
        %v1589 = vunpack.c.l.b16 %v1523
        %v1590 = vunpack.c.l.b16 %v1524
        %v1591 = vunpack.c.l.b16 %v1525
        %v1592 = vunpack.c.l.b16 %v1526
        %v1593 = vunpack.c.l.b16 %v1527
        %v1594 = vunpack.c.l.b16 %v1528
        %v1595 = vunpack.c.l.b16 %v1529
        %v1596 = vunpack.c.l.b16 %v1530
        %v1597 = vunpack.c.l.b16 %v1531
        %v1598 = vunpack.c.l.b16 %v1532
        %v1599 = vunpack.c.l.b16 %v1533
        %v1600 = vunpack.c.l.b16 %v1534
        %v1601 = vunpack.c.l.b16 %v1535
        %v1602 = vpack.c.b16 %v1571, %v1570
        %v1603 = vpack.c.b16 %v1573, %v1572
        %v1604 = vpack.c.b16 %v1575, %v1574
        %v1605 = vpack.c.b16 %v1577, %v1576
        %v1606 = vpack.c.b16 %v1579, %v1578
        %v1607 = vpack.c.b16 %v1581, %v1580
        %v1608 = vpack.c.b16 %v1583, %v1582
        %v1609 = vpack.c.b16 %v1585, %v1584
        %v1610 = vpack.c.b16 %v1587, %v1586
        %v1611 = vpack.c.b16 %v1589, %v1588
        %v1612 = vpack.c.b16 %v1591, %v1590
        %v1613 = vpack.c.b16 %v1593, %v1592
        %v1614 = vpack.c.b16 %v1595, %v1594
        %v1615 = vpack.c.b16 %v1597, %v1596
        %v1616 = vpack.c.b16 %v1599, %v1598
        %v1617 = vpack.c.b16 %v1601, %v1600
        %v1619 = vsel %vm753, %v1602, 0
        %v1622 = vsel %vm753, %v1603, 0
        %v1625 = vsel %vm753, %v1604, 0
        %v1628 = vsel %vm753, %v1605, 0
        %v1631 = vsel %vm753, %v1606, 0
        %v1634 = vsel %vm753, %v1607, 0
        %v1637 = vsel %vm753, %v1608, 0
        %v1640 = vsel %vm753, %v1609, 0
        %v1643 = vsel %vm753, %v1610, 0
        %v1646 = vsel %vm753, %v1611, 0
        %v1649 = vsel %vm753, %v1612, 0
        %v1652 = vsel %vm753, %v1613, 0
        %v1655 = vsel %vm753, %v1614, 0
        %v1658 = vsel %vm753, %v1615, 0
        %v1661 = vsel %vm753, %v1616, 0
        %v1664 = vsel %vm753, %v1617, 0
        %v1667 = vsel %vm802, %v1537, 0
        %1669 = vmatpush.bf16.msra.mxu0 0
        %1670 = vmatpush.bf16.msra.mxu0 0
        %1671 = vmatpush.bf16.msra.mxu0 0
        %1672 = vmatpush.bf16.msra.mxu0 0
        %1673 = vmatpush.bf16.msra.mxu0 0
        %1674 = vmatpush.bf16.msra.mxu0 0
        %1675 = vmatpush.bf16.msra.mxu0 0
        %1676 = vmatpush.bf16.msra.mxu0 %v1667
        %1677 = vmatmul.bf16.gmra.mxu0 %v1619
        %v1678 = vpop.f32.mrf.mxu0
        %v1679 = vadd.f32 0.0, %v1678
        %v1680 = vpop.f32.mrf.mxu0
        %v1681 = vadd.f32 0.0, %v1680
        %1682 = vmatmul.bf16.gmra.mxu0 %v1622
        %v1683 = vpop.f32.mrf.mxu0
        %v1684 = vadd.f32 0.0, %v1683
        %v1685 = vpop.f32.mrf.mxu0
        %v1686 = vadd.f32 0.0, %v1685
        %1687 = vmatmul.bf16.gmra.mxu0 %v1625
        %v1688 = vpop.f32.mrf.mxu0
        %v1689 = vadd.f32 0.0, %v1688
        %v1690 = vpop.f32.mrf.mxu0
        %v1691 = vadd.f32 0.0, %v1690
        %1692 = vmatmul.bf16.gmra.mxu0 %v1628
        %v1693 = vpop.f32.mrf.mxu0
        %v1694 = vadd.f32 0.0, %v1693
        %v1695 = vpop.f32.mrf.mxu0
        %v1696 = vadd.f32 0.0, %v1695
        %1697 = vmatmul.bf16.gmra.mxu0 %v1631
        %v1698 = vpop.f32.mrf.mxu0
        %v1699 = vadd.f32 0.0, %v1698
        %v1700 = vpop.f32.mrf.mxu0
        %v1701 = vadd.f32 0.0, %v1700
        %1702 = vmatmul.bf16.gmra.mxu0 %v1634
        %v1703 = vpop.f32.mrf.mxu0
        %v1704 = vadd.f32 0.0, %v1703
        %v1705 = vpop.f32.mrf.mxu0
        %v1706 = vadd.f32 0.0, %v1705
        %1707 = vmatmul.bf16.gmra.mxu0 %v1637
        %v1708 = vpop.f32.mrf.mxu0
        %v1709 = vadd.f32 0.0, %v1708
        %v1710 = vpop.f32.mrf.mxu0
        %v1711 = vadd.f32 0.0, %v1710
        %1712 = vmatmul.bf16.gmra.mxu0 %v1640
        %v1713 = vpop.f32.mrf.mxu0
        %v1714 = vadd.f32 0.0, %v1713
        %v1715 = vpop.f32.mrf.mxu0
        %v1716 = vadd.f32 0.0, %v1715
        %1717 = vmatmul.bf16.gmra.mxu0 %v1643
        %v1718 = vpop.f32.mrf.mxu0
        %v1719 = vadd.f32 0.0, %v1718
        %v1720 = vpop.f32.mrf.mxu0
        %v1721 = vadd.f32 0.0, %v1720
        %1722 = vmatmul.bf16.gmra.mxu0 %v1646
        %v1723 = vpop.f32.mrf.mxu0
        %v1724 = vadd.f32 0.0, %v1723
        %v1725 = vpop.f32.mrf.mxu0
        %v1726 = vadd.f32 0.0, %v1725
        %1727 = vmatmul.bf16.gmra.mxu0 %v1649
        %v1728 = vpop.f32.mrf.mxu0
        %v1729 = vadd.f32 0.0, %v1728
        %v1730 = vpop.f32.mrf.mxu0
        %v1731 = vadd.f32 0.0, %v1730
        %1732 = vmatmul.bf16.gmra.mxu0 %v1652
        %v1733 = vpop.f32.mrf.mxu0
        %v1734 = vadd.f32 0.0, %v1733
        %v1735 = vpop.f32.mrf.mxu0
        %v1736 = vadd.f32 0.0, %v1735
        %1737 = vmatmul.bf16.gmra.mxu0 %v1655
        %v1738 = vpop.f32.mrf.mxu0
        %v1739 = vadd.f32 0.0, %v1738
        %v1740 = vpop.f32.mrf.mxu0
        %v1741 = vadd.f32 0.0, %v1740
        %1742 = vmatmul.bf16.gmra.mxu0 %v1658
        %v1743 = vpop.f32.mrf.mxu0
        %v1744 = vadd.f32 0.0, %v1743
        %v1745 = vpop.f32.mrf.mxu0
        %v1746 = vadd.f32 0.0, %v1745
        %1747 = vmatmul.bf16.gmra.mxu0 %v1661
        %v1748 = vpop.f32.mrf.mxu0
        %v1749 = vadd.f32 0.0, %v1748
        %v1750 = vpop.f32.mrf.mxu0
        %v1751 = vadd.f32 0.0, %v1750
        %1752 = vmatmul.bf16.gmra.mxu0 %v1664
        %v1753 = vpop.f32.mrf.mxu0
        %v1754 = vadd.f32 0.0, %v1753
        %v1755 = vpop.f32.mrf.mxu0
        %v1756 = vadd.f32 0.0, %v1755
        %1757 = vdwg.mxu0
        %v1758 = vadd.f32 %v1468, %v1679
        %v1759 = vadd.f32 %v1469, %v1681
        %v1760 = vadd.f32 %v1470, %v1684
        %v1761 = vadd.f32 %v1471, %v1686
        %v1762 = vadd.f32 %v1472, %v1689
        %v1763 = vadd.f32 %v1473, %v1691
        %v1764 = vadd.f32 %v1474, %v1694
        %v1765 = vadd.f32 %v1475, %v1696
        %v1766 = vadd.f32 %v1476, %v1699
        %v1767 = vadd.f32 %v1477, %v1701
        %v1768 = vadd.f32 %v1478, %v1704
        %v1769 = vadd.f32 %v1479, %v1706
        %v1770 = vadd.f32 %v1480, %v1709
        %v1771 = vadd.f32 %v1481, %v1711
        %v1772 = vadd.f32 %v1482, %v1714
        %v1773 = vadd.f32 %v1483, %v1716
        %v1774 = vadd.f32 %v1484, %v1719
        %v1775 = vadd.f32 %v1485, %v1721
        %v1776 = vadd.f32 %v1486, %v1724
        %v1777 = vadd.f32 %v1487, %v1726
        %v1778 = vadd.f32 %v1488, %v1729
        %v1779 = vadd.f32 %v1489, %v1731
        %v1780 = vadd.f32 %v1490, %v1734
        %v1781 = vadd.f32 %v1491, %v1736
        %v1782 = vadd.f32 %v1492, %v1739
        %v1783 = vadd.f32 %v1493, %v1741
        %v1784 = vadd.f32 %v1494, %v1744
        %v1785 = vadd.f32 %v1495, %v1746
        %v1786 = vadd.f32 %v1496, %v1749
        %v1787 = vadd.f32 %v1497, %v1751
        %v1788 = vadd.f32 %v1498, %v1754
        %v1789 = vadd.f32 %v1499, %v1756
        %v1790 = vld [vmem:[%s1503] sm:$0xf]
        %v1791 = vld [vmem:[%s1503 + $0x4] sm:$0xf]
        %v1792 = vld [vmem:[%s1503 + $0x8] sm:$0x1]
        %v1793 = vld [vmem:[%s1503 + $0xc] sm:$0xf]
        %v1794 = vld [vmem:[%s1503 + $0x10] sm:$0xf]
        %v1795 = vld [vmem:[%s1503 + $0x14] sm:$0x1]
        %v1796 = vld [vmem:[%s1503 + $0x18] sm:$0xf]
        %v1797 = vld [vmem:[%s1503 + $0x1c] sm:$0xf]
        %v1798 = vld [vmem:[%s1503 + $0x20] sm:$0x1]
        %v1799 = vld [vmem:[%s1503 + $0x24] sm:$0xf]
        %v1800 = vld [vmem:[%s1503 + $0x28] sm:$0xf]
        %v1801 = vld [vmem:[%s1503 + $0x2c] sm:$0x1]
        %v1802 = vld [vmem:[%s1503 + $0x30] sm:$0xf]
        %v1803 = vld [vmem:[%s1503 + $0x34] sm:$0xf]
        %v1804 = vld [vmem:[%s1503 + $0x38] sm:$0x1]
        %v1805 = vld [vmem:[%s1503 + $0x3c] sm:$0xf]
        %v1806 = vld [vmem:[%s1503 + $0x40] sm:$0xf]
        %v1807 = vld [vmem:[%s1503 + $0x44] sm:$0x1]
        %v1808 = vld [vmem:[%s1503 + $0x48] sm:$0xf]
        %v1809 = vld [vmem:[%s1503 + $0x4c] sm:$0xf]
        %v1810 = vld [vmem:[%s1503 + $0x50] sm:$0x1]
        %v1811 = vld [vmem:[%s1503 + $0x54] sm:$0xf]
        %v1812 = vld [vmem:[%s1503 + $0x58] sm:$0xf]
        %v1813 = vld [vmem:[%s1503 + $0x5c] sm:$0x1]
        %v1814 = vld [vmem:[%s1503 + $0x60] sm:$0xf]
        %v1815 = vld [vmem:[%s1503 + $0x64] sm:$0xf]
        %v1816 = vld [vmem:[%s1503 + $0x68] sm:$0x1]
        %v1817 = vld [vmem:[%s1503 + $0x6c] sm:$0xf]
        %v1818 = vld [vmem:[%s1503 + $0x70] sm:$0xf]
        %v1819 = vld [vmem:[%s1503 + $0x74] sm:$0x1]
        %v1820 = vld [vmem:[%s1503 + $0x78] sm:$0xf]
        %v1821 = vld [vmem:[%s1503 + $0x7c] sm:$0xf]
        %v1822 = vld [vmem:[%s1503 + $0x80] sm:$0x1]
        %v1823 = vld [vmem:[%s1503 + $0x84] sm:$0xf]
        %v1824 = vld [vmem:[%s1503 + $0x88] sm:$0xf]
        %v1825 = vld [vmem:[%s1503 + $0x8c] sm:$0x1]
        %v1826 = vld [vmem:[%s1503 + $0x90] sm:$0xf]
        %v1827 = vld [vmem:[%s1503 + $0x94] sm:$0xf]
        %v1828 = vld [vmem:[%s1503 + $0x98] sm:$0x1]
        %v1829 = vld [vmem:[%s1503 + $0x9c] sm:$0xf]
        %v1830 = vld [vmem:[%s1503 + $0xa0] sm:$0xf]
        %v1831 = vld [vmem:[%s1503 + $0xa4] sm:$0x1]
        %v1832 = vld [vmem:[%s1503 + $0xa8] sm:$0xf]
        %v1833 = vld [vmem:[%s1503 + $0xac] sm:$0xf]
        %v1834 = vld [vmem:[%s1503 + $0xb0] sm:$0x1]
        %v1835 = vld [vmem:[%s1503 + $0xb4] sm:$0xf]
        %v1836 = vld [vmem:[%s1503 + $0xb8] sm:$0xf]
        %v1837 = vld [vmem:[%s1503 + $0xbc] sm:$0x1]
        %v1839 = vshrl.u32 %v1790, 16
        %v1841 = vrot.slane %v1839, 4
        %v1842 = vshll.u32 %v1790, 16
        %v1844 = vrot.slane %v1842, 5
        %v1845 = vor.u32 %v1841, %v1844
        %v1846 = vrot.slane %v1845, 4
        %v1848 = vshll.u32 %v1791, 16
        %v1850 = vrot.slane %v1848, 5
        %v1851 = vsel %vm318, %v1846, %v1850
        %v1852 = vshrl.u32 %v1791, 16
        %v1854 = vrot.slane %v1852, 4
        %v1855 = vor.u32 %v1854, %v1850
        %v1856 = vrot.slane %v1855, 4
        %v1858 = vshll.u32 %v1792, 16
        %v1860 = vrot.slane %v1858, 5
        %v1861 = vsel %vm318, %v1856, %v1860
        %v1863 = vshrl.u32 %v1793, 16
        %v1865 = vrot.slane %v1863, 4
        %v1866 = vshll.u32 %v1793, 16
        %v1868 = vrot.slane %v1866, 5
        %v1869 = vor.u32 %v1865, %v1868
        %v1870 = vrot.slane %v1869, 4
        %v1872 = vshll.u32 %v1794, 16
        %v1874 = vrot.slane %v1872, 5
        %v1875 = vsel %vm318, %v1870, %v1874
        %v1876 = vshrl.u32 %v1794, 16
        %v1878 = vrot.slane %v1876, 4
        %v1879 = vor.u32 %v1878, %v1874
        %v1880 = vrot.slane %v1879, 4
        %v1882 = vshll.u32 %v1795, 16
        %v1884 = vrot.slane %v1882, 5
        %v1885 = vsel %vm318, %v1880, %v1884
        %v1887 = vshrl.u32 %v1796, 16
        %v1889 = vrot.slane %v1887, 4
        %v1890 = vshll.u32 %v1796, 16
        %v1892 = vrot.slane %v1890, 5
        %v1893 = vor.u32 %v1889, %v1892
        %v1894 = vrot.slane %v1893, 4
        %v1896 = vshll.u32 %v1797, 16
        %v1898 = vrot.slane %v1896, 5
        %v1899 = vsel %vm318, %v1894, %v1898
        %v1900 = vshrl.u32 %v1797, 16
        %v1902 = vrot.slane %v1900, 4
        %v1903 = vor.u32 %v1902, %v1898
        %v1904 = vrot.slane %v1903, 4
        %v1906 = vshll.u32 %v1798, 16
        %v1908 = vrot.slane %v1906, 5
        %v1909 = vsel %vm318, %v1904, %v1908
        %v1911 = vshrl.u32 %v1799, 16
        %v1913 = vrot.slane %v1911, 4
        %v1914 = vshll.u32 %v1799, 16
        %v1916 = vrot.slane %v1914, 5
        %v1917 = vor.u32 %v1913, %v1916
        %v1918 = vrot.slane %v1917, 4
        %v1920 = vshll.u32 %v1800, 16
        %v1922 = vrot.slane %v1920, 5
        %v1923 = vsel %vm318, %v1918, %v1922
        %v1924 = vshrl.u32 %v1800, 16
        %v1926 = vrot.slane %v1924, 4
        %v1927 = vor.u32 %v1926, %v1922
        %v1928 = vrot.slane %v1927, 4
        %v1930 = vshll.u32 %v1801, 16
        %v1932 = vrot.slane %v1930, 5
        %v1933 = vsel %vm318, %v1928, %v1932
        %v1935 = vshrl.u32 %v1802, 16
        %v1937 = vrot.slane %v1935, 4
        %v1938 = vshll.u32 %v1802, 16
        %v1940 = vrot.slane %v1938, 5
        %v1941 = vor.u32 %v1937, %v1940
        %v1942 = vrot.slane %v1941, 4
        %v1944 = vshll.u32 %v1803, 16
        %v1946 = vrot.slane %v1944, 5
        %v1947 = vsel %vm318, %v1942, %v1946
        %v1948 = vshrl.u32 %v1803, 16
        %v1950 = vrot.slane %v1948, 4
        %v1951 = vor.u32 %v1950, %v1946
        %v1952 = vrot.slane %v1951, 4
        %v1954 = vshll.u32 %v1804, 16
        %v1956 = vrot.slane %v1954, 5
        %v1957 = vsel %vm318, %v1952, %v1956
        %v1959 = vshrl.u32 %v1805, 16
        %v1961 = vrot.slane %v1959, 4
        %v1962 = vshll.u32 %v1805, 16
        %v1964 = vrot.slane %v1962, 5
        %v1965 = vor.u32 %v1961, %v1964
        %v1966 = vrot.slane %v1965, 4
        %v1968 = vshll.u32 %v1806, 16
        %v1970 = vrot.slane %v1968, 5
        %v1971 = vsel %vm318, %v1966, %v1970
        %v1972 = vshrl.u32 %v1806, 16
        %v1974 = vrot.slane %v1972, 4
        %v1975 = vor.u32 %v1974, %v1970
        %v1976 = vrot.slane %v1975, 4
        %v1978 = vshll.u32 %v1807, 16
        %v1980 = vrot.slane %v1978, 5
        %v1981 = vsel %vm318, %v1976, %v1980
        %v1983 = vshrl.u32 %v1808, 16
        %v1985 = vrot.slane %v1983, 4
        %v1986 = vshll.u32 %v1808, 16
        %v1988 = vrot.slane %v1986, 5
        %v1989 = vor.u32 %v1985, %v1988
        %v1990 = vrot.slane %v1989, 4
        %v1992 = vshll.u32 %v1809, 16
        %v1994 = vrot.slane %v1992, 5
        %v1995 = vsel %vm318, %v1990, %v1994
        %v1996 = vshrl.u32 %v1809, 16
        %v1998 = vrot.slane %v1996, 4
        %v1999 = vor.u32 %v1998, %v1994
        %v2000 = vrot.slane %v1999, 4
        %v2002 = vshll.u32 %v1810, 16
        %v2004 = vrot.slane %v2002, 5
        %v2005 = vsel %vm318, %v2000, %v2004
        %v2007 = vshrl.u32 %v1811, 16
        %v2009 = vrot.slane %v2007, 4
        %v2010 = vshll.u32 %v1811, 16
        %v2012 = vrot.slane %v2010, 5
        %v2013 = vor.u32 %v2009, %v2012
        %v2014 = vrot.slane %v2013, 4
        %v2016 = vshll.u32 %v1812, 16
        %v2018 = vrot.slane %v2016, 5
        %v2019 = vsel %vm318, %v2014, %v2018
        %v2020 = vshrl.u32 %v1812, 16
        %v2022 = vrot.slane %v2020, 4
        %v2023 = vor.u32 %v2022, %v2018
        %v2024 = vrot.slane %v2023, 4
        %v2026 = vshll.u32 %v1813, 16
        %v2028 = vrot.slane %v2026, 5
        %v2029 = vsel %vm318, %v2024, %v2028
        %v2031 = vshrl.u32 %v1814, 16
        %v2033 = vrot.slane %v2031, 4
        %v2034 = vshll.u32 %v1814, 16
        %v2036 = vrot.slane %v2034, 5
        %v2037 = vor.u32 %v2033, %v2036
        %v2038 = vrot.slane %v2037, 4
        %v2040 = vshll.u32 %v1815, 16
        %v2042 = vrot.slane %v2040, 5
        %v2043 = vsel %vm318, %v2038, %v2042
        %v2044 = vshrl.u32 %v1815, 16
        %v2046 = vrot.slane %v2044, 4
        %v2047 = vor.u32 %v2046, %v2042
        %v2048 = vrot.slane %v2047, 4
        %v2050 = vshll.u32 %v1816, 16
        %v2052 = vrot.slane %v2050, 5
        %v2053 = vsel %vm318, %v2048, %v2052
        %v2055 = vshrl.u32 %v1817, 16
        %v2057 = vrot.slane %v2055, 4
        %v2058 = vshll.u32 %v1817, 16
        %v2060 = vrot.slane %v2058, 5
        %v2061 = vor.u32 %v2057, %v2060
        %v2062 = vrot.slane %v2061, 4
        %v2064 = vshll.u32 %v1818, 16
        %v2066 = vrot.slane %v2064, 5
        %v2067 = vsel %vm318, %v2062, %v2066
        %v2068 = vshrl.u32 %v1818, 16
        %v2070 = vrot.slane %v2068, 4
        %v2071 = vor.u32 %v2070, %v2066
        %v2072 = vrot.slane %v2071, 4
        %v2074 = vshll.u32 %v1819, 16
        %v2076 = vrot.slane %v2074, 5
        %v2077 = vsel %vm318, %v2072, %v2076
        %v2079 = vshrl.u32 %v1820, 16
        %v2081 = vrot.slane %v2079, 4
        %v2082 = vshll.u32 %v1820, 16
        %v2084 = vrot.slane %v2082, 5
        %v2085 = vor.u32 %v2081, %v2084
        %v2086 = vrot.slane %v2085, 4
        %v2088 = vshll.u32 %v1821, 16
        %v2090 = vrot.slane %v2088, 5
        %v2091 = vsel %vm318, %v2086, %v2090
        %v2092 = vshrl.u32 %v1821, 16
        %v2094 = vrot.slane %v2092, 4
        %v2095 = vor.u32 %v2094, %v2090
        %v2096 = vrot.slane %v2095, 4
        %v2098 = vshll.u32 %v1822, 16
        %v2100 = vrot.slane %v2098, 5
        %v2101 = vsel %vm318, %v2096, %v2100
        %v2103 = vshrl.u32 %v1823, 16
        %v2105 = vrot.slane %v2103, 4
        %v2106 = vshll.u32 %v1823, 16
        %v2108 = vrot.slane %v2106, 5
        %v2109 = vor.u32 %v2105, %v2108
        %v2110 = vrot.slane %v2109, 4
        %v2112 = vshll.u32 %v1824, 16
        %v2114 = vrot.slane %v2112, 5
        %v2115 = vsel %vm318, %v2110, %v2114
        %v2116 = vshrl.u32 %v1824, 16
        %v2118 = vrot.slane %v2116, 4
        %v2119 = vor.u32 %v2118, %v2114
        %v2120 = vrot.slane %v2119, 4
        %v2122 = vshll.u32 %v1825, 16
        %v2124 = vrot.slane %v2122, 5
        %v2125 = vsel %vm318, %v2120, %v2124
        %v2127 = vshrl.u32 %v1826, 16
        %v2129 = vrot.slane %v2127, 4
        %v2130 = vshll.u32 %v1826, 16
        %v2132 = vrot.slane %v2130, 5
        %v2133 = vor.u32 %v2129, %v2132
        %v2134 = vrot.slane %v2133, 4
        %v2136 = vshll.u32 %v1827, 16
        %v2138 = vrot.slane %v2136, 5
        %v2139 = vsel %vm318, %v2134, %v2138
        %v2140 = vshrl.u32 %v1827, 16
        %v2142 = vrot.slane %v2140, 4
        %v2143 = vor.u32 %v2142, %v2138
        %v2144 = vrot.slane %v2143, 4
        %v2146 = vshll.u32 %v1828, 16
        %v2148 = vrot.slane %v2146, 5
        %v2149 = vsel %vm318, %v2144, %v2148
        %v2151 = vshrl.u32 %v1829, 16
        %v2153 = vrot.slane %v2151, 4
        %v2154 = vshll.u32 %v1829, 16
        %v2156 = vrot.slane %v2154, 5
        %v2157 = vor.u32 %v2153, %v2156
        %v2158 = vrot.slane %v2157, 4
        %v2160 = vshll.u32 %v1830, 16
        %v2162 = vrot.slane %v2160, 5
        %v2163 = vsel %vm318, %v2158, %v2162
        %v2164 = vshrl.u32 %v1830, 16
        %v2166 = vrot.slane %v2164, 4
        %v2167 = vor.u32 %v2166, %v2162
        %v2168 = vrot.slane %v2167, 4
        %v2170 = vshll.u32 %v1831, 16
        %v2172 = vrot.slane %v2170, 5
        %v2173 = vsel %vm318, %v2168, %v2172
        %v2175 = vshrl.u32 %v1832, 16
        %v2177 = vrot.slane %v2175, 4
        %v2178 = vshll.u32 %v1832, 16
        %v2180 = vrot.slane %v2178, 5
        %v2181 = vor.u32 %v2177, %v2180
        %v2182 = vrot.slane %v2181, 4
        %v2184 = vshll.u32 %v1833, 16
        %v2186 = vrot.slane %v2184, 5
        %v2187 = vsel %vm318, %v2182, %v2186
        %v2188 = vshrl.u32 %v1833, 16
        %v2190 = vrot.slane %v2188, 4
        %v2191 = vor.u32 %v2190, %v2186
        %v2192 = vrot.slane %v2191, 4
        %v2194 = vshll.u32 %v1834, 16
        %v2196 = vrot.slane %v2194, 5
        %v2197 = vsel %vm318, %v2192, %v2196
        %v2199 = vshrl.u32 %v1835, 16
        %v2201 = vrot.slane %v2199, 4
        %v2202 = vshll.u32 %v1835, 16
        %v2204 = vrot.slane %v2202, 5
        %v2205 = vor.u32 %v2201, %v2204
        %v2206 = vrot.slane %v2205, 4
        %v2208 = vshll.u32 %v1836, 16
        %v2210 = vrot.slane %v2208, 5
        %v2211 = vsel %vm318, %v2206, %v2210
        %v2212 = vshrl.u32 %v1836, 16
        %v2214 = vrot.slane %v2212, 4
        %v2215 = vor.u32 %v2214, %v2210
        %v2216 = vrot.slane %v2215, 4
        %v2218 = vshll.u32 %v1837, 16
        %v2220 = vrot.slane %v2218, 5
        %v2221 = vsel %vm318, %v2216, %v2220
        %s2222 = scalar_lea.vmem %s1, 8
        %v2223 = vld [vmem:[%s2222] sm:$0x3]
        %v2224 = vunpack.c.l.b16 %v1851
        %v2225 = vunpack.c.l.b16 %v1861
        %v2226 = vunpack.c.l.b16 %v1875
        %v2227 = vunpack.c.l.b16 %v1885
        %v2228 = vunpack.c.l.b16 %v1899
        %v2229 = vunpack.c.l.b16 %v1909
        %v2230 = vunpack.c.l.b16 %v1923
        %v2231 = vunpack.c.l.b16 %v1933
        %v2232 = vunpack.c.l.b16 %v1947
        %v2233 = vunpack.c.l.b16 %v1957
        %v2234 = vunpack.c.l.b16 %v1971
        %v2235 = vunpack.c.l.b16 %v1981
        %v2236 = vunpack.c.l.b16 %v1995
        %v2237 = vunpack.c.l.b16 %v2005
        %v2238 = vunpack.c.l.b16 %v2019
        %v2239 = vunpack.c.l.b16 %v2029
        %v2240 = vunpack.c.l.b16 %v2043
        %v2241 = vunpack.c.l.b16 %v2053
        %v2242 = vunpack.c.l.b16 %v2067
        %v2243 = vunpack.c.l.b16 %v2077
        %v2244 = vunpack.c.l.b16 %v2091
        %v2245 = vunpack.c.l.b16 %v2101
        %v2246 = vunpack.c.l.b16 %v2115
        %v2247 = vunpack.c.l.b16 %v2125
        %v2248 = vunpack.c.l.b16 %v2139
        %v2249 = vunpack.c.l.b16 %v2149
        %v2250 = vunpack.c.l.b16 %v2163
        %v2251 = vunpack.c.l.b16 %v2173
        %v2252 = vunpack.c.l.b16 %v2187
        %v2253 = vunpack.c.l.b16 %v2197
        %v2254 = vunpack.c.l.b16 %v2211
        %v2255 = vunpack.c.l.b16 %v2221
        %v2256 = vpack.c.b16 %v2225, %v2224
        %v2257 = vpack.c.b16 %v2227, %v2226
        %v2258 = vpack.c.b16 %v2229, %v2228
        %v2259 = vpack.c.b16 %v2231, %v2230
        %v2260 = vpack.c.b16 %v2233, %v2232
        %v2261 = vpack.c.b16 %v2235, %v2234
        %v2262 = vpack.c.b16 %v2237, %v2236
        %v2263 = vpack.c.b16 %v2239, %v2238
        %v2264 = vpack.c.b16 %v2241, %v2240
        %v2265 = vpack.c.b16 %v2243, %v2242
        %v2266 = vpack.c.b16 %v2245, %v2244
        %v2267 = vpack.c.b16 %v2247, %v2246
        %v2268 = vpack.c.b16 %v2249, %v2248
        %v2269 = vpack.c.b16 %v2251, %v2250
        %v2270 = vpack.c.b16 %v2253, %v2252
        %v2271 = vpack.c.b16 %v2255, %v2254
        %v2273 = vsel %vm753, %v2256, 0
        %v2276 = vsel %vm753, %v2257, 0
        %v2279 = vsel %vm753, %v2258, 0
        %v2282 = vsel %vm753, %v2259, 0
        %v2285 = vsel %vm753, %v2260, 0
        %v2288 = vsel %vm753, %v2261, 0
        %v2291 = vsel %vm753, %v2262, 0
        %v2294 = vsel %vm753, %v2263, 0
        %v2297 = vsel %vm753, %v2264, 0
        %v2300 = vsel %vm753, %v2265, 0
        %v2303 = vsel %vm753, %v2266, 0
        %v2306 = vsel %vm753, %v2267, 0
        %v2309 = vsel %vm753, %v2268, 0
        %v2312 = vsel %vm753, %v2269, 0
        %v2315 = vsel %vm753, %v2270, 0
        %v2318 = vsel %vm753, %v2271, 0
        %v2321 = vsel %vm802, %v2223, 0
        %2323 = vmatpush.bf16.msra.mxu0 0
        %2324 = vmatpush.bf16.msra.mxu0 0
        %2325 = vmatpush.bf16.msra.mxu0 0
        %2326 = vmatpush.bf16.msra.mxu0 0
        %2327 = vmatpush.bf16.msra.mxu0 0
        %2328 = vmatpush.bf16.msra.mxu0 0
        %2329 = vmatpush.bf16.msra.mxu0 0
        %2330 = vmatpush.bf16.msra.mxu0 %v2321
        %2331 = vmatmul.bf16.gmra.mxu0 %v2273
        %v2332 = vpop.f32.mrf.mxu0
        %v2333 = vadd.f32 0.0, %v2332
        %v2334 = vpop.f32.mrf.mxu0
        %v2335 = vadd.f32 0.0, %v2334
        %2336 = vmatmul.bf16.gmra.mxu0 %v2276
        %v2337 = vpop.f32.mrf.mxu0
        %v2338 = vadd.f32 0.0, %v2337
        %v2339 = vpop.f32.mrf.mxu0
        %v2340 = vadd.f32 0.0, %v2339
        %2341 = vmatmul.bf16.gmra.mxu0 %v2279
        %v2342 = vpop.f32.mrf.mxu0
        %v2343 = vadd.f32 0.0, %v2342
        %v2344 = vpop.f32.mrf.mxu0
        %v2345 = vadd.f32 0.0, %v2344
        %2346 = vmatmul.bf16.gmra.mxu0 %v2282
        %v2347 = vpop.f32.mrf.mxu0
        %v2348 = vadd.f32 0.0, %v2347
        %v2349 = vpop.f32.mrf.mxu0
        %v2350 = vadd.f32 0.0, %v2349
        %2351 = vmatmul.bf16.gmra.mxu0 %v2285
        %v2352 = vpop.f32.mrf.mxu0
        %v2353 = vadd.f32 0.0, %v2352
        %v2354 = vpop.f32.mrf.mxu0
        %v2355 = vadd.f32 0.0, %v2354
        %2356 = vmatmul.bf16.gmra.mxu0 %v2288
        %v2357 = vpop.f32.mrf.mxu0
        %v2358 = vadd.f32 0.0, %v2357
        %v2359 = vpop.f32.mrf.mxu0
        %v2360 = vadd.f32 0.0, %v2359
        %2361 = vmatmul.bf16.gmra.mxu0 %v2291
        %v2362 = vpop.f32.mrf.mxu0
        %v2363 = vadd.f32 0.0, %v2362
        %v2364 = vpop.f32.mrf.mxu0
        %v2365 = vadd.f32 0.0, %v2364
        %2366 = vmatmul.bf16.gmra.mxu0 %v2294
        %v2367 = vpop.f32.mrf.mxu0
        %v2368 = vadd.f32 0.0, %v2367
        %v2369 = vpop.f32.mrf.mxu0
        %v2370 = vadd.f32 0.0, %v2369
        %2371 = vmatmul.bf16.gmra.mxu0 %v2297
        %v2372 = vpop.f32.mrf.mxu0
        %v2373 = vadd.f32 0.0, %v2372
        %v2374 = vpop.f32.mrf.mxu0
        %v2375 = vadd.f32 0.0, %v2374
        %2376 = vmatmul.bf16.gmra.mxu0 %v2300
        %v2377 = vpop.f32.mrf.mxu0
        %v2378 = vadd.f32 0.0, %v2377
        %v2379 = vpop.f32.mrf.mxu0
        %v2380 = vadd.f32 0.0, %v2379
        %2381 = vmatmul.bf16.gmra.mxu0 %v2303
        %v2382 = vpop.f32.mrf.mxu0
        %v2383 = vadd.f32 0.0, %v2382
        %v2384 = vpop.f32.mrf.mxu0
        %v2385 = vadd.f32 0.0, %v2384
        %2386 = vmatmul.bf16.gmra.mxu0 %v2306
        %v2387 = vpop.f32.mrf.mxu0
        %v2388 = vadd.f32 0.0, %v2387
        %v2389 = vpop.f32.mrf.mxu0
        %v2390 = vadd.f32 0.0, %v2389
        %2391 = vmatmul.bf16.gmra.mxu0 %v2309
        %v2392 = vpop.f32.mrf.mxu0
        %v2393 = vadd.f32 0.0, %v2392
        %v2394 = vpop.f32.mrf.mxu0
        %v2395 = vadd.f32 0.0, %v2394
        %2396 = vmatmul.bf16.gmra.mxu0 %v2312
        %v2397 = vpop.f32.mrf.mxu0
        %v2398 = vadd.f32 0.0, %v2397
        %v2399 = vpop.f32.mrf.mxu0
        %v2400 = vadd.f32 0.0, %v2399
        %2401 = vmatmul.bf16.gmra.mxu0 %v2315
        %v2402 = vpop.f32.mrf.mxu0
        %v2403 = vadd.f32 0.0, %v2402
        %v2404 = vpop.f32.mrf.mxu0
        %v2405 = vadd.f32 0.0, %v2404
        %2406 = vmatmul.bf16.gmra.mxu0 %v2318
        %v2407 = vpop.f32.mrf.mxu0
        %v2408 = vadd.f32 0.0, %v2407
        %v2409 = vpop.f32.mrf.mxu0
        %v2410 = vadd.f32 0.0, %v2409
        %2411 = vdwg.mxu0
        %v2412 = vadd.f32 %v1758, %v2333
        %v2413 = vadd.f32 %v1759, %v2335
        %v2414 = vadd.f32 %v1760, %v2338
        %v2415 = vadd.f32 %v1761, %v2340
        %v2416 = vadd.f32 %v1762, %v2343
        %v2417 = vadd.f32 %v1763, %v2345
        %v2418 = vadd.f32 %v1764, %v2348
        %v2419 = vadd.f32 %v1765, %v2350
        %v2420 = vadd.f32 %v1766, %v2353
        %v2421 = vadd.f32 %v1767, %v2355
        %v2422 = vadd.f32 %v1768, %v2358
        %v2423 = vadd.f32 %v1769, %v2360
        %v2424 = vadd.f32 %v1770, %v2363
        %v2425 = vadd.f32 %v1771, %v2365
        %v2426 = vadd.f32 %v1772, %v2368
        %v2427 = vadd.f32 %v1773, %v2370
        %v2428 = vadd.f32 %v1774, %v2373
        %v2429 = vadd.f32 %v1775, %v2375
        %v2430 = vadd.f32 %v1776, %v2378
        %v2431 = vadd.f32 %v1777, %v2380
        %v2432 = vadd.f32 %v1778, %v2383
        %v2433 = vadd.f32 %v1779, %v2385
        %v2434 = vadd.f32 %v1780, %v2388
        %v2435 = vadd.f32 %v1781, %v2390
        %v2436 = vadd.f32 %v1782, %v2393
        %v2437 = vadd.f32 %v1783, %v2395
        %v2438 = vadd.f32 %v1784, %v2398
        %v2439 = vadd.f32 %v1785, %v2400
        %v2440 = vadd.f32 %v1786, %v2403
        %v2441 = vadd.f32 %v1787, %v2405
        %v2442 = vadd.f32 %v1788, %v2408
        %v2443 = vadd.f32 %v1789, %v2410
        %v2444 = vld [vmem:[%s1503] sm:$0xe]
        %v2445 = vld [vmem:[%s1503 + $0xc] sm:$0xe]
        %v2446 = vld [vmem:[%s1503 + $0x18] sm:$0xe]
        %v2447 = vld [vmem:[%s1503 + $0x24] sm:$0xe]
        %v2448 = vld [vmem:[%s1503 + $0x30] sm:$0xe]
        %v2449 = vld [vmem:[%s1503 + $0x3c] sm:$0xe]
        %v2450 = vld [vmem:[%s1503 + $0x48] sm:$0xe]
        %v2451 = vld [vmem:[%s1503 + $0x54] sm:$0xe]
        %v2452 = vld [vmem:[%s1503 + $0x60] sm:$0xe]
        %v2453 = vld [vmem:[%s1503 + $0x6c] sm:$0xe]
        %v2454 = vld [vmem:[%s1503 + $0x78] sm:$0xe]
        %v2455 = vld [vmem:[%s1503 + $0x84] sm:$0xe]
        %v2456 = vld [vmem:[%s1503 + $0x90] sm:$0xe]
        %v2457 = vld [vmem:[%s1503 + $0x9c] sm:$0xe]
        %v2458 = vld [vmem:[%s1503 + $0xa8] sm:$0xe]
        %v2459 = vld [vmem:[%s1503 + $0xb4] sm:$0xe]
        %v2508 = vrot.slane %v2444, 5
        %v2509 = vrot.slane %v2508, 4
        %v2510 = vrot.slane %v1791, 5
        %v2511 = vsel %vm1165, %v2509, %v2510
        %v2512 = vrot.slane %v2510, 4
        %v2513 = vrot.slane %v1792, 5
        %v2514 = vsel %vm1165, %v2512, %v2513
        %v2515 = vrot.slane %v2445, 5
        %v2516 = vrot.slane %v2515, 4
        %v2517 = vrot.slane %v1794, 5
        %v2518 = vsel %vm1165, %v2516, %v2517
        %v2519 = vrot.slane %v2517, 4
        %v2520 = vrot.slane %v1795, 5
        %v2521 = vsel %vm1165, %v2519, %v2520
        %v2522 = vrot.slane %v2446, 5
        %v2523 = vrot.slane %v2522, 4
        %v2524 = vrot.slane %v1797, 5
        %v2525 = vsel %vm1165, %v2523, %v2524
        %v2526 = vrot.slane %v2524, 4
        %v2527 = vrot.slane %v1798, 5
        %v2528 = vsel %vm1165, %v2526, %v2527
        %v2529 = vrot.slane %v2447, 5
        %v2530 = vrot.slane %v2529, 4
        %v2531 = vrot.slane %v1800, 5
        %v2532 = vsel %vm1165, %v2530, %v2531
        %v2533 = vrot.slane %v2531, 4
        %v2534 = vrot.slane %v1801, 5
        %v2535 = vsel %vm1165, %v2533, %v2534
        %v2536 = vrot.slane %v2448, 5
        %v2537 = vrot.slane %v2536, 4
        %v2538 = vrot.slane %v1803, 5
        %v2539 = vsel %vm1165, %v2537, %v2538
        %v2540 = vrot.slane %v2538, 4
        %v2541 = vrot.slane %v1804, 5
        %v2542 = vsel %vm1165, %v2540, %v2541
        %v2543 = vrot.slane %v2449, 5
        %v2544 = vrot.slane %v2543, 4
        %v2545 = vrot.slane %v1806, 5
        %v2546 = vsel %vm1165, %v2544, %v2545
        %v2547 = vrot.slane %v2545, 4
        %v2548 = vrot.slane %v1807, 5
        %v2549 = vsel %vm1165, %v2547, %v2548
        %v2550 = vrot.slane %v2450, 5
        %v2551 = vrot.slane %v2550, 4
        %v2552 = vrot.slane %v1809, 5
        %v2553 = vsel %vm1165, %v2551, %v2552
        %v2554 = vrot.slane %v2552, 4
        %v2555 = vrot.slane %v1810, 5
        %v2556 = vsel %vm1165, %v2554, %v2555
        %v2557 = vrot.slane %v2451, 5
        %v2558 = vrot.slane %v2557, 4
        %v2559 = vrot.slane %v1812, 5
        %v2560 = vsel %vm1165, %v2558, %v2559
        %v2561 = vrot.slane %v2559, 4
        %v2562 = vrot.slane %v1813, 5
        %v2563 = vsel %vm1165, %v2561, %v2562
        %v2564 = vrot.slane %v2452, 5
        %v2565 = vrot.slane %v2564, 4
        %v2566 = vrot.slane %v1815, 5
        %v2567 = vsel %vm1165, %v2565, %v2566
        %v2568 = vrot.slane %v2566, 4
        %v2569 = vrot.slane %v1816, 5
        %v2570 = vsel %vm1165, %v2568, %v2569
        %v2571 = vrot.slane %v2453, 5
        %v2572 = vrot.slane %v2571, 4
        %v2573 = vrot.slane %v1818, 5
        %v2574 = vsel %vm1165, %v2572, %v2573
        %v2575 = vrot.slane %v2573, 4
        %v2576 = vrot.slane %v1819, 5
        %v2577 = vsel %vm1165, %v2575, %v2576
        %v2578 = vrot.slane %v2454, 5
        %v2579 = vrot.slane %v2578, 4
        %v2580 = vrot.slane %v1821, 5
        %v2581 = vsel %vm1165, %v2579, %v2580
        %v2582 = vrot.slane %v2580, 4
        %v2583 = vrot.slane %v1822, 5
        %v2584 = vsel %vm1165, %v2582, %v2583
        %v2585 = vrot.slane %v2455, 5
        %v2586 = vrot.slane %v2585, 4
        %v2587 = vrot.slane %v1824, 5
        %v2588 = vsel %vm1165, %v2586, %v2587
        %v2589 = vrot.slane %v2587, 4
        %v2590 = vrot.slane %v1825, 5
        %v2591 = vsel %vm1165, %v2589, %v2590
        %v2592 = vrot.slane %v2456, 5
        %v2593 = vrot.slane %v2592, 4
        %v2594 = vrot.slane %v1827, 5
        %v2595 = vsel %vm1165, %v2593, %v2594
        %v2596 = vrot.slane %v2594, 4
        %v2597 = vrot.slane %v1828, 5
        %v2598 = vsel %vm1165, %v2596, %v2597
        %v2599 = vrot.slane %v2457, 5
        %v2600 = vrot.slane %v2599, 4
        %v2601 = vrot.slane %v1830, 5
        %v2602 = vsel %vm1165, %v2600, %v2601
        %v2603 = vrot.slane %v2601, 4
        %v2604 = vrot.slane %v1831, 5
        %v2605 = vsel %vm1165, %v2603, %v2604
        %v2606 = vrot.slane %v2458, 5
        %v2607 = vrot.slane %v2606, 4
        %v2608 = vrot.slane %v1833, 5
        %v2609 = vsel %vm1165, %v2607, %v2608
        %v2610 = vrot.slane %v2608, 4
        %v2611 = vrot.slane %v1834, 5
        %v2612 = vsel %vm1165, %v2610, %v2611
        %v2613 = vrot.slane %v2459, 5
        %v2614 = vrot.slane %v2613, 4
        %v2615 = vrot.slane %v1836, 5
        %v2616 = vsel %vm1165, %v2614, %v2615
        %v2617 = vrot.slane %v2615, 4
        %v2618 = vrot.slane %v1837, 5
        %v2619 = vsel %vm1165, %v2617, %v2618
        %s2620 = scalar_lea.vmem %s1, 10
        %v2621 = vld [vmem:[%s2620] sm:$0x3]
        %v2622 = vunpack.c.l.b16 %v2511
        %v2623 = vunpack.c.l.b16 %v2514
        %v2624 = vunpack.c.l.b16 %v2518
        %v2625 = vunpack.c.l.b16 %v2521
        %v2626 = vunpack.c.l.b16 %v2525
        %v2627 = vunpack.c.l.b16 %v2528
        %v2628 = vunpack.c.l.b16 %v2532
        %v2629 = vunpack.c.l.b16 %v2535
        %v2630 = vunpack.c.l.b16 %v2539
        %v2631 = vunpack.c.l.b16 %v2542
        %v2632 = vunpack.c.l.b16 %v2546
        %v2633 = vunpack.c.l.b16 %v2549
        %v2634 = vunpack.c.l.b16 %v2553
        %v2635 = vunpack.c.l.b16 %v2556
        %v2636 = vunpack.c.l.b16 %v2560
        %v2637 = vunpack.c.l.b16 %v2563
        %v2638 = vunpack.c.l.b16 %v2567
        %v2639 = vunpack.c.l.b16 %v2570
        %v2640 = vunpack.c.l.b16 %v2574
        %v2641 = vunpack.c.l.b16 %v2577
        %v2642 = vunpack.c.l.b16 %v2581
        %v2643 = vunpack.c.l.b16 %v2584
        %v2644 = vunpack.c.l.b16 %v2588
        %v2645 = vunpack.c.l.b16 %v2591
        %v2646 = vunpack.c.l.b16 %v2595
        %v2647 = vunpack.c.l.b16 %v2598
        %v2648 = vunpack.c.l.b16 %v2602
        %v2649 = vunpack.c.l.b16 %v2605
        %v2650 = vunpack.c.l.b16 %v2609
        %v2651 = vunpack.c.l.b16 %v2612
        %v2652 = vunpack.c.l.b16 %v2616
        %v2653 = vunpack.c.l.b16 %v2619
        %v2654 = vpack.c.b16 %v2623, %v2622
        %v2655 = vpack.c.b16 %v2625, %v2624
        %v2656 = vpack.c.b16 %v2627, %v2626
        %v2657 = vpack.c.b16 %v2629, %v2628
        %v2658 = vpack.c.b16 %v2631, %v2630
        %v2659 = vpack.c.b16 %v2633, %v2632
        %v2660 = vpack.c.b16 %v2635, %v2634
        %v2661 = vpack.c.b16 %v2637, %v2636
        %v2662 = vpack.c.b16 %v2639, %v2638
        %v2663 = vpack.c.b16 %v2641, %v2640
        %v2664 = vpack.c.b16 %v2643, %v2642
        %v2665 = vpack.c.b16 %v2645, %v2644
        %v2666 = vpack.c.b16 %v2647, %v2646
        %v2667 = vpack.c.b16 %v2649, %v2648
        %v2668 = vpack.c.b16 %v2651, %v2650
        %v2669 = vpack.c.b16 %v2653, %v2652
        %v2671 = vsel %vm753, %v2654, 0
        %v2674 = vsel %vm753, %v2655, 0
        %v2677 = vsel %vm753, %v2656, 0
        %v2680 = vsel %vm753, %v2657, 0
        %v2683 = vsel %vm753, %v2658, 0
        %v2686 = vsel %vm753, %v2659, 0
        %v2689 = vsel %vm753, %v2660, 0
        %v2692 = vsel %vm753, %v2661, 0
        %v2695 = vsel %vm753, %v2662, 0
        %v2698 = vsel %vm753, %v2663, 0
        %v2701 = vsel %vm753, %v2664, 0
        %v2704 = vsel %vm753, %v2665, 0
        %v2707 = vsel %vm753, %v2666, 0
        %v2710 = vsel %vm753, %v2667, 0
        %v2713 = vsel %vm753, %v2668, 0
        %v2716 = vsel %vm753, %v2669, 0
        %v2719 = vsel %vm802, %v2621, 0
        %2721 = vmatpush.bf16.msra.mxu0 0
        %2722 = vmatpush.bf16.msra.mxu0 0
        %2723 = vmatpush.bf16.msra.mxu0 0
        %2724 = vmatpush.bf16.msra.mxu0 0
        %2725 = vmatpush.bf16.msra.mxu0 0
        %2726 = vmatpush.bf16.msra.mxu0 0
        %2727 = vmatpush.bf16.msra.mxu0 0
        %2728 = vmatpush.bf16.msra.mxu0 %v2719
        %2729 = vmatmul.bf16.gmra.mxu0 %v2671
        %v2730 = vpop.f32.mrf.mxu0
        %v2731 = vadd.f32 0.0, %v2730
        %v2732 = vpop.f32.mrf.mxu0
        %v2733 = vadd.f32 0.0, %v2732
        %2734 = vmatmul.bf16.gmra.mxu0 %v2674
        %v2735 = vpop.f32.mrf.mxu0
        %v2736 = vadd.f32 0.0, %v2735
        %v2737 = vpop.f32.mrf.mxu0
        %v2738 = vadd.f32 0.0, %v2737
        %2739 = vmatmul.bf16.gmra.mxu0 %v2677
        %v2740 = vpop.f32.mrf.mxu0
        %v2741 = vadd.f32 0.0, %v2740
        %v2742 = vpop.f32.mrf.mxu0
        %v2743 = vadd.f32 0.0, %v2742
        %2744 = vmatmul.bf16.gmra.mxu0 %v2680
        %v2745 = vpop.f32.mrf.mxu0
        %v2746 = vadd.f32 0.0, %v2745
        %v2747 = vpop.f32.mrf.mxu0
        %v2748 = vadd.f32 0.0, %v2747
        %2749 = vmatmul.bf16.gmra.mxu0 %v2683
        %v2750 = vpop.f32.mrf.mxu0
        %v2751 = vadd.f32 0.0, %v2750
        %v2752 = vpop.f32.mrf.mxu0
        %v2753 = vadd.f32 0.0, %v2752
        %2754 = vmatmul.bf16.gmra.mxu0 %v2686
        %v2755 = vpop.f32.mrf.mxu0
        %v2756 = vadd.f32 0.0, %v2755
        %v2757 = vpop.f32.mrf.mxu0
        %v2758 = vadd.f32 0.0, %v2757
        %2759 = vmatmul.bf16.gmra.mxu0 %v2689
        %v2760 = vpop.f32.mrf.mxu0
        %v2761 = vadd.f32 0.0, %v2760
        %v2762 = vpop.f32.mrf.mxu0
        %v2763 = vadd.f32 0.0, %v2762
        %2764 = vmatmul.bf16.gmra.mxu0 %v2692
        %v2765 = vpop.f32.mrf.mxu0
        %v2766 = vadd.f32 0.0, %v2765
        %v2767 = vpop.f32.mrf.mxu0
        %v2768 = vadd.f32 0.0, %v2767
        %2769 = vmatmul.bf16.gmra.mxu0 %v2695
        %v2770 = vpop.f32.mrf.mxu0
        %v2771 = vadd.f32 0.0, %v2770
        %v2772 = vpop.f32.mrf.mxu0
        %v2773 = vadd.f32 0.0, %v2772
        %2774 = vmatmul.bf16.gmra.mxu0 %v2698
        %v2775 = vpop.f32.mrf.mxu0
        %v2776 = vadd.f32 0.0, %v2775
        %v2777 = vpop.f32.mrf.mxu0
        %v2778 = vadd.f32 0.0, %v2777
        %2779 = vmatmul.bf16.gmra.mxu0 %v2701
        %v2780 = vpop.f32.mrf.mxu0
        %v2781 = vadd.f32 0.0, %v2780
        %v2782 = vpop.f32.mrf.mxu0
        %v2783 = vadd.f32 0.0, %v2782
        %2784 = vmatmul.bf16.gmra.mxu0 %v2704
        %v2785 = vpop.f32.mrf.mxu0
        %v2786 = vadd.f32 0.0, %v2785
        %v2787 = vpop.f32.mrf.mxu0
        %v2788 = vadd.f32 0.0, %v2787
        %2789 = vmatmul.bf16.gmra.mxu0 %v2707
        %v2790 = vpop.f32.mrf.mxu0
        %v2791 = vadd.f32 0.0, %v2790
        %v2792 = vpop.f32.mrf.mxu0
        %v2793 = vadd.f32 0.0, %v2792
        %2794 = vmatmul.bf16.gmra.mxu0 %v2710
        %v2795 = vpop.f32.mrf.mxu0
        %v2796 = vadd.f32 0.0, %v2795
        %v2797 = vpop.f32.mrf.mxu0
        %v2798 = vadd.f32 0.0, %v2797
        %2799 = vmatmul.bf16.gmra.mxu0 %v2713
        %v2800 = vpop.f32.mrf.mxu0
        %v2801 = vadd.f32 0.0, %v2800
        %v2802 = vpop.f32.mrf.mxu0
        %v2803 = vadd.f32 0.0, %v2802
        %2804 = vmatmul.bf16.gmra.mxu0 %v2716
        %v2805 = vpop.f32.mrf.mxu0
        %v2806 = vadd.f32 0.0, %v2805
        %v2807 = vpop.f32.mrf.mxu0
        %v2808 = vadd.f32 0.0, %v2807
        %2809 = vdwg.mxu0
        %v2810 = vadd.f32 %v2412, %v2731
        %v2811 = vadd.f32 %v2413, %v2733
        %v2812 = vadd.f32 %v2414, %v2736
        %v2813 = vadd.f32 %v2415, %v2738
        %v2814 = vadd.f32 %v2416, %v2741
        %v2815 = vadd.f32 %v2417, %v2743
        %v2816 = vadd.f32 %v2418, %v2746
        %v2817 = vadd.f32 %v2419, %v2748
        %v2818 = vadd.f32 %v2420, %v2751
        %v2819 = vadd.f32 %v2421, %v2753
        %v2820 = vadd.f32 %v2422, %v2756
        %v2821 = vadd.f32 %v2423, %v2758
        %v2822 = vadd.f32 %v2424, %v2761
        %v2823 = vadd.f32 %v2425, %v2763
        %v2824 = vadd.f32 %v2426, %v2766
        %v2825 = vadd.f32 %v2427, %v2768
        %v2826 = vadd.f32 %v2428, %v2771
        %v2827 = vadd.f32 %v2429, %v2773
        %v2828 = vadd.f32 %v2430, %v2776
        %v2829 = vadd.f32 %v2431, %v2778
        %v2830 = vadd.f32 %v2432, %v2781
        %v2831 = vadd.f32 %v2433, %v2783
        %v2832 = vadd.f32 %v2434, %v2786
        %v2833 = vadd.f32 %v2435, %v2788
        %v2834 = vadd.f32 %v2436, %v2791
        %v2835 = vadd.f32 %v2437, %v2793
        %v2836 = vadd.f32 %v2438, %v2796
        %v2837 = vadd.f32 %v2439, %v2798
        %v2838 = vadd.f32 %v2440, %v2801
        %v2839 = vadd.f32 %v2441, %v2803
        %v2840 = vadd.f32 %v2442, %v2806
        %v2841 = vadd.f32 %v2443, %v2808
        %s2842 = sadd.s32 %s263, 2
        %s2843 = smul.u32 %s2842, 3
        %s2844 = smul.addr %s2843, 4
        %s2845 = scalar_lea.vmem %s254, %s2844
        %v2846 = vld [vmem:[%s2845] sm:$0xf]
        %v2847 = vld [vmem:[%s2845 + $0x4] sm:$0xf]
        %v2848 = vld [vmem:[%s2845 + $0xc] sm:$0xf]
        %v2849 = vld [vmem:[%s2845 + $0x10] sm:$0xf]
        %v2850 = vld [vmem:[%s2845 + $0x18] sm:$0xf]
        %v2851 = vld [vmem:[%s2845 + $0x1c] sm:$0xf]
        %v2852 = vld [vmem:[%s2845 + $0x24] sm:$0xf]
        %v2853 = vld [vmem:[%s2845 + $0x28] sm:$0xf]
        %v2854 = vld [vmem:[%s2845 + $0x30] sm:$0xf]
        %v2855 = vld [vmem:[%s2845 + $0x34] sm:$0xf]
        %v2856 = vld [vmem:[%s2845 + $0x3c] sm:$0xf]
        %v2857 = vld [vmem:[%s2845 + $0x40] sm:$0xf]
        %v2858 = vld [vmem:[%s2845 + $0x48] sm:$0xf]
        %v2859 = vld [vmem:[%s2845 + $0x4c] sm:$0xf]
        %v2860 = vld [vmem:[%s2845 + $0x54] sm:$0xf]
        %v2861 = vld [vmem:[%s2845 + $0x58] sm:$0xf]
        %v2862 = vld [vmem:[%s2845 + $0x60] sm:$0xf]
        %v2863 = vld [vmem:[%s2845 + $0x64] sm:$0xf]
        %v2864 = vld [vmem:[%s2845 + $0x6c] sm:$0xf]
        %v2865 = vld [vmem:[%s2845 + $0x70] sm:$0xf]
        %v2866 = vld [vmem:[%s2845 + $0x78] sm:$0xf]
        %v2867 = vld [vmem:[%s2845 + $0x7c] sm:$0xf]
        %v2868 = vld [vmem:[%s2845 + $0x84] sm:$0xf]
        %v2869 = vld [vmem:[%s2845 + $0x88] sm:$0xf]
        %v2870 = vld [vmem:[%s2845 + $0x90] sm:$0xf]
        %v2871 = vld [vmem:[%s2845 + $0x94] sm:$0xf]
        %v2872 = vld [vmem:[%s2845 + $0x9c] sm:$0xf]
        %v2873 = vld [vmem:[%s2845 + $0xa0] sm:$0xf]
        %v2874 = vld [vmem:[%s2845 + $0xa8] sm:$0xf]
        %v2875 = vld [vmem:[%s2845 + $0xac] sm:$0xf]
        %v2876 = vld [vmem:[%s2845 + $0xb4] sm:$0xf]
        %v2877 = vld [vmem:[%s2845 + $0xb8] sm:$0xf]
        %s2878 = scalar_lea.vmem %s1, 12
        %v2879 = vld [vmem:[%s2878] sm:$0x3]
        %v2912 = vunpack.c.l.b16 %v2846
        %v2913 = vunpack.c.l.b16 %v2847
        %v2914 = vunpack.c.l.b16 %v2848
        %v2915 = vunpack.c.l.b16 %v2849
        %v2916 = vunpack.c.l.b16 %v2850
        %v2917 = vunpack.c.l.b16 %v2851
        %v2918 = vunpack.c.l.b16 %v2852
        %v2919 = vunpack.c.l.b16 %v2853
        %v2920 = vunpack.c.l.b16 %v2854
        %v2921 = vunpack.c.l.b16 %v2855
        %v2922 = vunpack.c.l.b16 %v2856
        %v2923 = vunpack.c.l.b16 %v2857
        %v2924 = vunpack.c.l.b16 %v2858
        %v2925 = vunpack.c.l.b16 %v2859
        %v2926 = vunpack.c.l.b16 %v2860
        %v2927 = vunpack.c.l.b16 %v2861
        %v2928 = vunpack.c.l.b16 %v2862
        %v2929 = vunpack.c.l.b16 %v2863
        %v2930 = vunpack.c.l.b16 %v2864
        %v2931 = vunpack.c.l.b16 %v2865
        %v2932 = vunpack.c.l.b16 %v2866
        %v2933 = vunpack.c.l.b16 %v2867
        %v2934 = vunpack.c.l.b16 %v2868
        %v2935 = vunpack.c.l.b16 %v2869
        %v2936 = vunpack.c.l.b16 %v2870
        %v2937 = vunpack.c.l.b16 %v2871
        %v2938 = vunpack.c.l.b16 %v2872
        %v2939 = vunpack.c.l.b16 %v2873
        %v2940 = vunpack.c.l.b16 %v2874
        %v2941 = vunpack.c.l.b16 %v2875
        %v2942 = vunpack.c.l.b16 %v2876
        %v2943 = vunpack.c.l.b16 %v2877
        %v2944 = vpack.c.b16 %v2913, %v2912
        %v2945 = vpack.c.b16 %v2915, %v2914
        %v2946 = vpack.c.b16 %v2917, %v2916
        %v2947 = vpack.c.b16 %v2919, %v2918
        %v2948 = vpack.c.b16 %v2921, %v2920
        %v2949 = vpack.c.b16 %v2923, %v2922
        %v2950 = vpack.c.b16 %v2925, %v2924
        %v2951 = vpack.c.b16 %v2927, %v2926
        %v2952 = vpack.c.b16 %v2929, %v2928
        %v2953 = vpack.c.b16 %v2931, %v2930
        %v2954 = vpack.c.b16 %v2933, %v2932
        %v2955 = vpack.c.b16 %v2935, %v2934
        %v2956 = vpack.c.b16 %v2937, %v2936
        %v2957 = vpack.c.b16 %v2939, %v2938
        %v2958 = vpack.c.b16 %v2941, %v2940
        %v2959 = vpack.c.b16 %v2943, %v2942
        %v2961 = vsel %vm753, %v2944, 0
        %v2964 = vsel %vm753, %v2945, 0
        %v2967 = vsel %vm753, %v2946, 0
        %v2970 = vsel %vm753, %v2947, 0
        %v2973 = vsel %vm753, %v2948, 0
        %v2976 = vsel %vm753, %v2949, 0
        %v2979 = vsel %vm753, %v2950, 0
        %v2982 = vsel %vm753, %v2951, 0
        %v2985 = vsel %vm753, %v2952, 0
        %v2988 = vsel %vm753, %v2953, 0
        %v2991 = vsel %vm753, %v2954, 0
        %v2994 = vsel %vm753, %v2955, 0
        %v2997 = vsel %vm753, %v2956, 0
        %v3000 = vsel %vm753, %v2957, 0
        %v3003 = vsel %vm753, %v2958, 0
        %v3006 = vsel %vm753, %v2959, 0
        %v3009 = vsel %vm802, %v2879, 0
        %3011 = vmatpush.bf16.msra.mxu0 0
        %3012 = vmatpush.bf16.msra.mxu0 0
        %3013 = vmatpush.bf16.msra.mxu0 0
        %3014 = vmatpush.bf16.msra.mxu0 0
        %3015 = vmatpush.bf16.msra.mxu0 0
        %3016 = vmatpush.bf16.msra.mxu0 0
        %3017 = vmatpush.bf16.msra.mxu0 0
        %3018 = vmatpush.bf16.msra.mxu0 %v3009
        %3019 = vmatmul.bf16.gmra.mxu0 %v2961
        %v3020 = vpop.f32.mrf.mxu0
        %v3021 = vadd.f32 0.0, %v3020
        %v3022 = vpop.f32.mrf.mxu0
        %v3023 = vadd.f32 0.0, %v3022
        %3024 = vmatmul.bf16.gmra.mxu0 %v2964
        %v3025 = vpop.f32.mrf.mxu0
        %v3026 = vadd.f32 0.0, %v3025
        %v3027 = vpop.f32.mrf.mxu0
        %v3028 = vadd.f32 0.0, %v3027
        %3029 = vmatmul.bf16.gmra.mxu0 %v2967
        %v3030 = vpop.f32.mrf.mxu0
        %v3031 = vadd.f32 0.0, %v3030
        %v3032 = vpop.f32.mrf.mxu0
        %v3033 = vadd.f32 0.0, %v3032
        %3034 = vmatmul.bf16.gmra.mxu0 %v2970
        %v3035 = vpop.f32.mrf.mxu0
        %v3036 = vadd.f32 0.0, %v3035
        %v3037 = vpop.f32.mrf.mxu0
        %v3038 = vadd.f32 0.0, %v3037
        %3039 = vmatmul.bf16.gmra.mxu0 %v2973
        %v3040 = vpop.f32.mrf.mxu0
        %v3041 = vadd.f32 0.0, %v3040
        %v3042 = vpop.f32.mrf.mxu0
        %v3043 = vadd.f32 0.0, %v3042
        %3044 = vmatmul.bf16.gmra.mxu0 %v2976
        %v3045 = vpop.f32.mrf.mxu0
        %v3046 = vadd.f32 0.0, %v3045
        %v3047 = vpop.f32.mrf.mxu0
        %v3048 = vadd.f32 0.0, %v3047
        %3049 = vmatmul.bf16.gmra.mxu0 %v2979
        %v3050 = vpop.f32.mrf.mxu0
        %v3051 = vadd.f32 0.0, %v3050
        %v3052 = vpop.f32.mrf.mxu0
        %v3053 = vadd.f32 0.0, %v3052
        %3054 = vmatmul.bf16.gmra.mxu0 %v2982
        %v3055 = vpop.f32.mrf.mxu0
        %v3056 = vadd.f32 0.0, %v3055
        %v3057 = vpop.f32.mrf.mxu0
        %v3058 = vadd.f32 0.0, %v3057
        %3059 = vmatmul.bf16.gmra.mxu0 %v2985
        %v3060 = vpop.f32.mrf.mxu0
        %v3061 = vadd.f32 0.0, %v3060
        %v3062 = vpop.f32.mrf.mxu0
        %v3063 = vadd.f32 0.0, %v3062
        %3064 = vmatmul.bf16.gmra.mxu0 %v2988
        %v3065 = vpop.f32.mrf.mxu0
        %v3066 = vadd.f32 0.0, %v3065
        %v3067 = vpop.f32.mrf.mxu0
        %v3068 = vadd.f32 0.0, %v3067
        %3069 = vmatmul.bf16.gmra.mxu0 %v2991
        %v3070 = vpop.f32.mrf.mxu0
        %v3071 = vadd.f32 0.0, %v3070
        %v3072 = vpop.f32.mrf.mxu0
        %v3073 = vadd.f32 0.0, %v3072
        %3074 = vmatmul.bf16.gmra.mxu0 %v2994
        %v3075 = vpop.f32.mrf.mxu0
        %v3076 = vadd.f32 0.0, %v3075
        %v3077 = vpop.f32.mrf.mxu0
        %v3078 = vadd.f32 0.0, %v3077
        %3079 = vmatmul.bf16.gmra.mxu0 %v2997
        %v3080 = vpop.f32.mrf.mxu0
        %v3081 = vadd.f32 0.0, %v3080
        %v3082 = vpop.f32.mrf.mxu0
        %v3083 = vadd.f32 0.0, %v3082
        %3084 = vmatmul.bf16.gmra.mxu0 %v3000
        %v3085 = vpop.f32.mrf.mxu0
        %v3086 = vadd.f32 0.0, %v3085
        %v3087 = vpop.f32.mrf.mxu0
        %v3088 = vadd.f32 0.0, %v3087
        %3089 = vmatmul.bf16.gmra.mxu0 %v3003
        %v3090 = vpop.f32.mrf.mxu0
        %v3091 = vadd.f32 0.0, %v3090
        %v3092 = vpop.f32.mrf.mxu0
        %v3093 = vadd.f32 0.0, %v3092
        %3094 = vmatmul.bf16.gmra.mxu0 %v3006
        %v3095 = vpop.f32.mrf.mxu0
        %v3096 = vadd.f32 0.0, %v3095
        %v3097 = vpop.f32.mrf.mxu0
        %v3098 = vadd.f32 0.0, %v3097
        %3099 = vdwg.mxu0
        %v3100 = vadd.f32 %v2810, %v3021
        %v3101 = vadd.f32 %v2811, %v3023
        %v3102 = vadd.f32 %v2812, %v3026
        %v3103 = vadd.f32 %v2813, %v3028
        %v3104 = vadd.f32 %v2814, %v3031
        %v3105 = vadd.f32 %v2815, %v3033
        %v3106 = vadd.f32 %v2816, %v3036
        %v3107 = vadd.f32 %v2817, %v3038
        %v3108 = vadd.f32 %v2818, %v3041
        %v3109 = vadd.f32 %v2819, %v3043
        %v3110 = vadd.f32 %v2820, %v3046
        %v3111 = vadd.f32 %v2821, %v3048
        %v3112 = vadd.f32 %v2822, %v3051
        %v3113 = vadd.f32 %v2823, %v3053
        %v3114 = vadd.f32 %v2824, %v3056
        %v3115 = vadd.f32 %v2825, %v3058
        %v3116 = vadd.f32 %v2826, %v3061
        %v3117 = vadd.f32 %v2827, %v3063
        %v3118 = vadd.f32 %v2828, %v3066
        %v3119 = vadd.f32 %v2829, %v3068
        %v3120 = vadd.f32 %v2830, %v3071
        %v3121 = vadd.f32 %v2831, %v3073
        %v3122 = vadd.f32 %v2832, %v3076
        %v3123 = vadd.f32 %v2833, %v3078
        %v3124 = vadd.f32 %v2834, %v3081
        %v3125 = vadd.f32 %v2835, %v3083
        %v3126 = vadd.f32 %v2836, %v3086
        %v3127 = vadd.f32 %v2837, %v3088
        %v3128 = vadd.f32 %v2838, %v3091
        %v3129 = vadd.f32 %v2839, %v3093
        %v3130 = vadd.f32 %v2840, %v3096
        %v3131 = vadd.f32 %v2841, %v3098
        %v3132 = vld [vmem:[%s2845] sm:$0xf]
        %v3133 = vld [vmem:[%s2845 + $0x4] sm:$0xf]
        %v3134 = vld [vmem:[%s2845 + $0x8] sm:$0x1]
        %v3135 = vld [vmem:[%s2845 + $0xc] sm:$0xf]
        %v3136 = vld [vmem:[%s2845 + $0x10] sm:$0xf]
        %v3137 = vld [vmem:[%s2845 + $0x14] sm:$0x1]
        %v3138 = vld [vmem:[%s2845 + $0x18] sm:$0xf]
        %v3139 = vld [vmem:[%s2845 + $0x1c] sm:$0xf]
        %v3140 = vld [vmem:[%s2845 + $0x20] sm:$0x1]
        %v3141 = vld [vmem:[%s2845 + $0x24] sm:$0xf]
        %v3142 = vld [vmem:[%s2845 + $0x28] sm:$0xf]
        %v3143 = vld [vmem:[%s2845 + $0x2c] sm:$0x1]
        %v3144 = vld [vmem:[%s2845 + $0x30] sm:$0xf]
        %v3145 = vld [vmem:[%s2845 + $0x34] sm:$0xf]
        %v3146 = vld [vmem:[%s2845 + $0x38] sm:$0x1]
        %v3147 = vld [vmem:[%s2845 + $0x3c] sm:$0xf]
        %v3148 = vld [vmem:[%s2845 + $0x40] sm:$0xf]
        %v3149 = vld [vmem:[%s2845 + $0x44] sm:$0x1]
        %v3150 = vld [vmem:[%s2845 + $0x48] sm:$0xf]
        %v3151 = vld [vmem:[%s2845 + $0x4c] sm:$0xf]
        %v3152 = vld [vmem:[%s2845 + $0x50] sm:$0x1]
        %v3153 = vld [vmem:[%s2845 + $0x54] sm:$0xf]
        %v3154 = vld [vmem:[%s2845 + $0x58] sm:$0xf]
        %v3155 = vld [vmem:[%s2845 + $0x5c] sm:$0x1]
        %v3156 = vld [vmem:[%s2845 + $0x60] sm:$0xf]
        %v3157 = vld [vmem:[%s2845 + $0x64] sm:$0xf]
        %v3158 = vld [vmem:[%s2845 + $0x68] sm:$0x1]
        %v3159 = vld [vmem:[%s2845 + $0x6c] sm:$0xf]
        %v3160 = vld [vmem:[%s2845 + $0x70] sm:$0xf]
        %v3161 = vld [vmem:[%s2845 + $0x74] sm:$0x1]
        %v3162 = vld [vmem:[%s2845 + $0x78] sm:$0xf]
        %v3163 = vld [vmem:[%s2845 + $0x7c] sm:$0xf]
        %v3164 = vld [vmem:[%s2845 + $0x80] sm:$0x1]
        %v3165 = vld [vmem:[%s2845 + $0x84] sm:$0xf]
        %v3166 = vld [vmem:[%s2845 + $0x88] sm:$0xf]
        %v3167 = vld [vmem:[%s2845 + $0x8c] sm:$0x1]
        %v3168 = vld [vmem:[%s2845 + $0x90] sm:$0xf]
        %v3169 = vld [vmem:[%s2845 + $0x94] sm:$0xf]
        %v3170 = vld [vmem:[%s2845 + $0x98] sm:$0x1]
        %v3171 = vld [vmem:[%s2845 + $0x9c] sm:$0xf]
        %v3172 = vld [vmem:[%s2845 + $0xa0] sm:$0xf]
        %v3173 = vld [vmem:[%s2845 + $0xa4] sm:$0x1]
        %v3174 = vld [vmem:[%s2845 + $0xa8] sm:$0xf]
        %v3175 = vld [vmem:[%s2845 + $0xac] sm:$0xf]
        %v3176 = vld [vmem:[%s2845 + $0xb0] sm:$0x1]
        %v3177 = vld [vmem:[%s2845 + $0xb4] sm:$0xf]
        %v3178 = vld [vmem:[%s2845 + $0xb8] sm:$0xf]
        %v3179 = vld [vmem:[%s2845 + $0xbc] sm:$0x1]
        %v3181 = vshrl.u32 %v3132, 16
        %v3183 = vrot.slane %v3181, 4
        %v3184 = vshll.u32 %v3132, 16
        %v3186 = vrot.slane %v3184, 5
        %v3187 = vor.u32 %v3183, %v3186
        %v3188 = vrot.slane %v3187, 4
        %v3190 = vshll.u32 %v3133, 16
        %v3192 = vrot.slane %v3190, 5
        %v3193 = vsel %vm318, %v3188, %v3192
        %v3194 = vshrl.u32 %v3133, 16
        %v3196 = vrot.slane %v3194, 4
        %v3197 = vor.u32 %v3196, %v3192
        %v3198 = vrot.slane %v3197, 4
        %v3200 = vshll.u32 %v3134, 16
        %v3202 = vrot.slane %v3200, 5
        %v3203 = vsel %vm318, %v3198, %v3202
        %v3205 = vshrl.u32 %v3135, 16
        %v3207 = vrot.slane %v3205, 4
        %v3208 = vshll.u32 %v3135, 16
        %v3210 = vrot.slane %v3208, 5
        %v3211 = vor.u32 %v3207, %v3210
        %v3212 = vrot.slane %v3211, 4
        %v3214 = vshll.u32 %v3136, 16
        %v3216 = vrot.slane %v3214, 5
        %v3217 = vsel %vm318, %v3212, %v3216
        %v3218 = vshrl.u32 %v3136, 16
        %v3220 = vrot.slane %v3218, 4
        %v3221 = vor.u32 %v3220, %v3216
        %v3222 = vrot.slane %v3221, 4
        %v3224 = vshll.u32 %v3137, 16
        %v3226 = vrot.slane %v3224, 5
        %v3227 = vsel %vm318, %v3222, %v3226
        %v3229 = vshrl.u32 %v3138, 16
        %v3231 = vrot.slane %v3229, 4
        %v3232 = vshll.u32 %v3138, 16
        %v3234 = vrot.slane %v3232, 5
        %v3235 = vor.u32 %v3231, %v3234
        %v3236 = vrot.slane %v3235, 4
        %v3238 = vshll.u32 %v3139, 16
        %v3240 = vrot.slane %v3238, 5
        %v3241 = vsel %vm318, %v3236, %v3240
        %v3242 = vshrl.u32 %v3139, 16
        %v3244 = vrot.slane %v3242, 4
        %v3245 = vor.u32 %v3244, %v3240
        %v3246 = vrot.slane %v3245, 4
        %v3248 = vshll.u32 %v3140, 16
        %v3250 = vrot.slane %v3248, 5
        %v3251 = vsel %vm318, %v3246, %v3250
        %v3253 = vshrl.u32 %v3141, 16
        %v3255 = vrot.slane %v3253, 4
        %v3256 = vshll.u32 %v3141, 16
        %v3258 = vrot.slane %v3256, 5
        %v3259 = vor.u32 %v3255, %v3258
        %v3260 = vrot.slane %v3259, 4
        %v3262 = vshll.u32 %v3142, 16
        %v3264 = vrot.slane %v3262, 5
        %v3265 = vsel %vm318, %v3260, %v3264
        %v3266 = vshrl.u32 %v3142, 16
        %v3268 = vrot.slane %v3266, 4
        %v3269 = vor.u32 %v3268, %v3264
        %v3270 = vrot.slane %v3269, 4
        %v3272 = vshll.u32 %v3143, 16
        %v3274 = vrot.slane %v3272, 5
        %v3275 = vsel %vm318, %v3270, %v3274
        %v3277 = vshrl.u32 %v3144, 16
        %v3279 = vrot.slane %v3277, 4
        %v3280 = vshll.u32 %v3144, 16
        %v3282 = vrot.slane %v3280, 5
        %v3283 = vor.u32 %v3279, %v3282
        %v3284 = vrot.slane %v3283, 4
        %v3286 = vshll.u32 %v3145, 16
        %v3288 = vrot.slane %v3286, 5
        %v3289 = vsel %vm318, %v3284, %v3288
        %v3290 = vshrl.u32 %v3145, 16
        %v3292 = vrot.slane %v3290, 4
        %v3293 = vor.u32 %v3292, %v3288
        %v3294 = vrot.slane %v3293, 4
        %v3296 = vshll.u32 %v3146, 16
        %v3298 = vrot.slane %v3296, 5
        %v3299 = vsel %vm318, %v3294, %v3298
        %v3301 = vshrl.u32 %v3147, 16
        %v3303 = vrot.slane %v3301, 4
        %v3304 = vshll.u32 %v3147, 16
        %v3306 = vrot.slane %v3304, 5
        %v3307 = vor.u32 %v3303, %v3306
        %v3308 = vrot.slane %v3307, 4
        %v3310 = vshll.u32 %v3148, 16
        %v3312 = vrot.slane %v3310, 5
        %v3313 = vsel %vm318, %v3308, %v3312
        %v3314 = vshrl.u32 %v3148, 16
        %v3316 = vrot.slane %v3314, 4
        %v3317 = vor.u32 %v3316, %v3312
        %v3318 = vrot.slane %v3317, 4
        %v3320 = vshll.u32 %v3149, 16
        %v3322 = vrot.slane %v3320, 5
        %v3323 = vsel %vm318, %v3318, %v3322
        %v3325 = vshrl.u32 %v3150, 16
        %v3327 = vrot.slane %v3325, 4
        %v3328 = vshll.u32 %v3150, 16
        %v3330 = vrot.slane %v3328, 5
        %v3331 = vor.u32 %v3327, %v3330
        %v3332 = vrot.slane %v3331, 4
        %v3334 = vshll.u32 %v3151, 16
        %v3336 = vrot.slane %v3334, 5
        %v3337 = vsel %vm318, %v3332, %v3336
        %v3338 = vshrl.u32 %v3151, 16
        %v3340 = vrot.slane %v3338, 4
        %v3341 = vor.u32 %v3340, %v3336
        %v3342 = vrot.slane %v3341, 4
        %v3344 = vshll.u32 %v3152, 16
        %v3346 = vrot.slane %v3344, 5
        %v3347 = vsel %vm318, %v3342, %v3346
        %v3349 = vshrl.u32 %v3153, 16
        %v3351 = vrot.slane %v3349, 4
        %v3352 = vshll.u32 %v3153, 16
        %v3354 = vrot.slane %v3352, 5
        %v3355 = vor.u32 %v3351, %v3354
        %v3356 = vrot.slane %v3355, 4
        %v3358 = vshll.u32 %v3154, 16
        %v3360 = vrot.slane %v3358, 5
        %v3361 = vsel %vm318, %v3356, %v3360
        %v3362 = vshrl.u32 %v3154, 16
        %v3364 = vrot.slane %v3362, 4
        %v3365 = vor.u32 %v3364, %v3360
        %v3366 = vrot.slane %v3365, 4
        %v3368 = vshll.u32 %v3155, 16
        %v3370 = vrot.slane %v3368, 5
        %v3371 = vsel %vm318, %v3366, %v3370
        %v3373 = vshrl.u32 %v3156, 16
        %v3375 = vrot.slane %v3373, 4
        %v3376 = vshll.u32 %v3156, 16
        %v3378 = vrot.slane %v3376, 5
        %v3379 = vor.u32 %v3375, %v3378
        %v3380 = vrot.slane %v3379, 4
        %v3382 = vshll.u32 %v3157, 16
        %v3384 = vrot.slane %v3382, 5
        %v3385 = vsel %vm318, %v3380, %v3384
        %v3386 = vshrl.u32 %v3157, 16
        %v3388 = vrot.slane %v3386, 4
        %v3389 = vor.u32 %v3388, %v3384
        %v3390 = vrot.slane %v3389, 4
        %v3392 = vshll.u32 %v3158, 16
        %v3394 = vrot.slane %v3392, 5
        %v3395 = vsel %vm318, %v3390, %v3394
        %v3397 = vshrl.u32 %v3159, 16
        %v3399 = vrot.slane %v3397, 4
        %v3400 = vshll.u32 %v3159, 16
        %v3402 = vrot.slane %v3400, 5
        %v3403 = vor.u32 %v3399, %v3402
        %v3404 = vrot.slane %v3403, 4
        %v3406 = vshll.u32 %v3160, 16
        %v3408 = vrot.slane %v3406, 5
        %v3409 = vsel %vm318, %v3404, %v3408
        %v3410 = vshrl.u32 %v3160, 16
        %v3412 = vrot.slane %v3410, 4
        %v3413 = vor.u32 %v3412, %v3408
        %v3414 = vrot.slane %v3413, 4
        %v3416 = vshll.u32 %v3161, 16
        %v3418 = vrot.slane %v3416, 5
        %v3419 = vsel %vm318, %v3414, %v3418
        %v3421 = vshrl.u32 %v3162, 16
        %v3423 = vrot.slane %v3421, 4
        %v3424 = vshll.u32 %v3162, 16
        %v3426 = vrot.slane %v3424, 5
        %v3427 = vor.u32 %v3423, %v3426
        %v3428 = vrot.slane %v3427, 4
        %v3430 = vshll.u32 %v3163, 16
        %v3432 = vrot.slane %v3430, 5
        %v3433 = vsel %vm318, %v3428, %v3432
        %v3434 = vshrl.u32 %v3163, 16
        %v3436 = vrot.slane %v3434, 4
        %v3437 = vor.u32 %v3436, %v3432
        %v3438 = vrot.slane %v3437, 4
        %v3440 = vshll.u32 %v3164, 16
        %v3442 = vrot.slane %v3440, 5
        %v3443 = vsel %vm318, %v3438, %v3442
        %v3445 = vshrl.u32 %v3165, 16
        %v3447 = vrot.slane %v3445, 4
        %v3448 = vshll.u32 %v3165, 16
        %v3450 = vrot.slane %v3448, 5
        %v3451 = vor.u32 %v3447, %v3450
        %v3452 = vrot.slane %v3451, 4
        %v3454 = vshll.u32 %v3166, 16
        %v3456 = vrot.slane %v3454, 5
        %v3457 = vsel %vm318, %v3452, %v3456
        %v3458 = vshrl.u32 %v3166, 16
        %v3460 = vrot.slane %v3458, 4
        %v3461 = vor.u32 %v3460, %v3456
        %v3462 = vrot.slane %v3461, 4
        %v3464 = vshll.u32 %v3167, 16
        %v3466 = vrot.slane %v3464, 5
        %v3467 = vsel %vm318, %v3462, %v3466
        %v3469 = vshrl.u32 %v3168, 16
        %v3471 = vrot.slane %v3469, 4
        %v3472 = vshll.u32 %v3168, 16
        %v3474 = vrot.slane %v3472, 5
        %v3475 = vor.u32 %v3471, %v3474
        %v3476 = vrot.slane %v3475, 4
        %v3478 = vshll.u32 %v3169, 16
        %v3480 = vrot.slane %v3478, 5
        %v3481 = vsel %vm318, %v3476, %v3480
        %v3482 = vshrl.u32 %v3169, 16
        %v3484 = vrot.slane %v3482, 4
        %v3485 = vor.u32 %v3484, %v3480
        %v3486 = vrot.slane %v3485, 4
        %v3488 = vshll.u32 %v3170, 16
        %v3490 = vrot.slane %v3488, 5
        %v3491 = vsel %vm318, %v3486, %v3490
        %v3493 = vshrl.u32 %v3171, 16
        %v3495 = vrot.slane %v3493, 4
        %v3496 = vshll.u32 %v3171, 16
        %v3498 = vrot.slane %v3496, 5
        %v3499 = vor.u32 %v3495, %v3498
        %v3500 = vrot.slane %v3499, 4
        %v3502 = vshll.u32 %v3172, 16
        %v3504 = vrot.slane %v3502, 5
        %v3505 = vsel %vm318, %v3500, %v3504
        %v3506 = vshrl.u32 %v3172, 16
        %v3508 = vrot.slane %v3506, 4
        %v3509 = vor.u32 %v3508, %v3504
        %v3510 = vrot.slane %v3509, 4
        %v3512 = vshll.u32 %v3173, 16
        %v3514 = vrot.slane %v3512, 5
        %v3515 = vsel %vm318, %v3510, %v3514
        %v3517 = vshrl.u32 %v3174, 16
        %v3519 = vrot.slane %v3517, 4
        %v3520 = vshll.u32 %v3174, 16
        %v3522 = vrot.slane %v3520, 5
        %v3523 = vor.u32 %v3519, %v3522
        %v3524 = vrot.slane %v3523, 4
        %v3526 = vshll.u32 %v3175, 16
        %v3528 = vrot.slane %v3526, 5
        %v3529 = vsel %vm318, %v3524, %v3528
        %v3530 = vshrl.u32 %v3175, 16
        %v3532 = vrot.slane %v3530, 4
        %v3533 = vor.u32 %v3532, %v3528
        %v3534 = vrot.slane %v3533, 4
        %v3536 = vshll.u32 %v3176, 16
        %v3538 = vrot.slane %v3536, 5
        %v3539 = vsel %vm318, %v3534, %v3538
        %v3541 = vshrl.u32 %v3177, 16
        %v3543 = vrot.slane %v3541, 4
        %v3544 = vshll.u32 %v3177, 16
        %v3546 = vrot.slane %v3544, 5
        %v3547 = vor.u32 %v3543, %v3546
        %v3548 = vrot.slane %v3547, 4
        %v3550 = vshll.u32 %v3178, 16
        %v3552 = vrot.slane %v3550, 5
        %v3553 = vsel %vm318, %v3548, %v3552
        %v3554 = vshrl.u32 %v3178, 16
        %v3556 = vrot.slane %v3554, 4
        %v3557 = vor.u32 %v3556, %v3552
        %v3558 = vrot.slane %v3557, 4
        %v3560 = vshll.u32 %v3179, 16
        %v3562 = vrot.slane %v3560, 5
        %v3563 = vsel %vm318, %v3558, %v3562
        %s3564 = scalar_lea.vmem %s1, 14
        %v3565 = vld [vmem:[%s3564] sm:$0x3]
        %v3566 = vunpack.c.l.b16 %v3193
        %v3567 = vunpack.c.l.b16 %v3203
        %v3568 = vunpack.c.l.b16 %v3217
        %v3569 = vunpack.c.l.b16 %v3227
        %v3570 = vunpack.c.l.b16 %v3241
        %v3571 = vunpack.c.l.b16 %v3251
        %v3572 = vunpack.c.l.b16 %v3265
        %v3573 = vunpack.c.l.b16 %v3275
        %v3574 = vunpack.c.l.b16 %v3289
        %v3575 = vunpack.c.l.b16 %v3299
        %v3576 = vunpack.c.l.b16 %v3313
        %v3577 = vunpack.c.l.b16 %v3323
        %v3578 = vunpack.c.l.b16 %v3337
        %v3579 = vunpack.c.l.b16 %v3347
        %v3580 = vunpack.c.l.b16 %v3361
        %v3581 = vunpack.c.l.b16 %v3371
        %v3582 = vunpack.c.l.b16 %v3385
        %v3583 = vunpack.c.l.b16 %v3395
        %v3584 = vunpack.c.l.b16 %v3409
        %v3585 = vunpack.c.l.b16 %v3419
        %v3586 = vunpack.c.l.b16 %v3433
        %v3587 = vunpack.c.l.b16 %v3443
        %v3588 = vunpack.c.l.b16 %v3457
        %v3589 = vunpack.c.l.b16 %v3467
        %v3590 = vunpack.c.l.b16 %v3481
        %v3591 = vunpack.c.l.b16 %v3491
        %v3592 = vunpack.c.l.b16 %v3505
        %v3593 = vunpack.c.l.b16 %v3515
        %v3594 = vunpack.c.l.b16 %v3529
        %v3595 = vunpack.c.l.b16 %v3539
        %v3596 = vunpack.c.l.b16 %v3553
        %v3597 = vunpack.c.l.b16 %v3563
        %v3598 = vpack.c.b16 %v3567, %v3566
        %v3599 = vpack.c.b16 %v3569, %v3568
        %v3600 = vpack.c.b16 %v3571, %v3570
        %v3601 = vpack.c.b16 %v3573, %v3572
        %v3602 = vpack.c.b16 %v3575, %v3574
        %v3603 = vpack.c.b16 %v3577, %v3576
        %v3604 = vpack.c.b16 %v3579, %v3578
        %v3605 = vpack.c.b16 %v3581, %v3580
        %v3606 = vpack.c.b16 %v3583, %v3582
        %v3607 = vpack.c.b16 %v3585, %v3584
        %v3608 = vpack.c.b16 %v3587, %v3586
        %v3609 = vpack.c.b16 %v3589, %v3588
        %v3610 = vpack.c.b16 %v3591, %v3590
        %v3611 = vpack.c.b16 %v3593, %v3592
        %v3612 = vpack.c.b16 %v3595, %v3594
        %v3613 = vpack.c.b16 %v3597, %v3596
        %v3615 = vsel %vm753, %v3598, 0
        %v3618 = vsel %vm753, %v3599, 0
        %v3621 = vsel %vm753, %v3600, 0
        %v3624 = vsel %vm753, %v3601, 0
        %v3627 = vsel %vm753, %v3602, 0
        %v3630 = vsel %vm753, %v3603, 0
        %v3633 = vsel %vm753, %v3604, 0
        %v3636 = vsel %vm753, %v3605, 0
        %v3639 = vsel %vm753, %v3606, 0
        %v3642 = vsel %vm753, %v3607, 0
        %v3645 = vsel %vm753, %v3608, 0
        %v3648 = vsel %vm753, %v3609, 0
        %v3651 = vsel %vm753, %v3610, 0
        %v3654 = vsel %vm753, %v3611, 0
        %v3657 = vsel %vm753, %v3612, 0
        %v3660 = vsel %vm753, %v3613, 0
        %v3663 = vsel %vm802, %v3565, 0
        %3665 = vmatpush.bf16.msra.mxu0 0
        %3666 = vmatpush.bf16.msra.mxu0 0
        %3667 = vmatpush.bf16.msra.mxu0 0
        %3668 = vmatpush.bf16.msra.mxu0 0
        %3669 = vmatpush.bf16.msra.mxu0 0
        %3670 = vmatpush.bf16.msra.mxu0 0
        %3671 = vmatpush.bf16.msra.mxu0 0
        %3672 = vmatpush.bf16.msra.mxu0 %v3663
        %3673 = vmatmul.bf16.gmra.mxu0 %v3615
        %v3674 = vpop.f32.mrf.mxu0
        %v3675 = vadd.f32 0.0, %v3674
        %v3676 = vpop.f32.mrf.mxu0
        %v3677 = vadd.f32 0.0, %v3676
        %3678 = vmatmul.bf16.gmra.mxu0 %v3618
        %v3679 = vpop.f32.mrf.mxu0
        %v3680 = vadd.f32 0.0, %v3679
        %v3681 = vpop.f32.mrf.mxu0
        %v3682 = vadd.f32 0.0, %v3681
        %3683 = vmatmul.bf16.gmra.mxu0 %v3621
        %v3684 = vpop.f32.mrf.mxu0
        %v3685 = vadd.f32 0.0, %v3684
        %v3686 = vpop.f32.mrf.mxu0
        %v3687 = vadd.f32 0.0, %v3686
        %3688 = vmatmul.bf16.gmra.mxu0 %v3624
        %v3689 = vpop.f32.mrf.mxu0
        %v3690 = vadd.f32 0.0, %v3689
        %v3691 = vpop.f32.mrf.mxu0
        %v3692 = vadd.f32 0.0, %v3691
        %3693 = vmatmul.bf16.gmra.mxu0 %v3627
        %v3694 = vpop.f32.mrf.mxu0
        %v3695 = vadd.f32 0.0, %v3694
        %v3696 = vpop.f32.mrf.mxu0
        %v3697 = vadd.f32 0.0, %v3696
        %3698 = vmatmul.bf16.gmra.mxu0 %v3630
        %v3699 = vpop.f32.mrf.mxu0
        %v3700 = vadd.f32 0.0, %v3699
        %v3701 = vpop.f32.mrf.mxu0
        %v3702 = vadd.f32 0.0, %v3701
        %3703 = vmatmul.bf16.gmra.mxu0 %v3633
        %v3704 = vpop.f32.mrf.mxu0
        %v3705 = vadd.f32 0.0, %v3704
        %v3706 = vpop.f32.mrf.mxu0
        %v3707 = vadd.f32 0.0, %v3706
        %3708 = vmatmul.bf16.gmra.mxu0 %v3636
        %v3709 = vpop.f32.mrf.mxu0
        %v3710 = vadd.f32 0.0, %v3709
        %v3711 = vpop.f32.mrf.mxu0
        %v3712 = vadd.f32 0.0, %v3711
        %3713 = vmatmul.bf16.gmra.mxu0 %v3639
        %v3714 = vpop.f32.mrf.mxu0
        %v3715 = vadd.f32 0.0, %v3714
        %v3716 = vpop.f32.mrf.mxu0
        %v3717 = vadd.f32 0.0, %v3716
        %3718 = vmatmul.bf16.gmra.mxu0 %v3642
        %v3719 = vpop.f32.mrf.mxu0
        %v3720 = vadd.f32 0.0, %v3719
        %v3721 = vpop.f32.mrf.mxu0
        %v3722 = vadd.f32 0.0, %v3721
        %3723 = vmatmul.bf16.gmra.mxu0 %v3645
        %v3724 = vpop.f32.mrf.mxu0
        %v3725 = vadd.f32 0.0, %v3724
        %v3726 = vpop.f32.mrf.mxu0
        %v3727 = vadd.f32 0.0, %v3726
        %3728 = vmatmul.bf16.gmra.mxu0 %v3648
        %v3729 = vpop.f32.mrf.mxu0
        %v3730 = vadd.f32 0.0, %v3729
        %v3731 = vpop.f32.mrf.mxu0
        %v3732 = vadd.f32 0.0, %v3731
        %3733 = vmatmul.bf16.gmra.mxu0 %v3651
        %v3734 = vpop.f32.mrf.mxu0
        %v3735 = vadd.f32 0.0, %v3734
        %v3736 = vpop.f32.mrf.mxu0
        %v3737 = vadd.f32 0.0, %v3736
        %3738 = vmatmul.bf16.gmra.mxu0 %v3654
        %v3739 = vpop.f32.mrf.mxu0
        %v3740 = vadd.f32 0.0, %v3739
        %v3741 = vpop.f32.mrf.mxu0
        %v3742 = vadd.f32 0.0, %v3741
        %3743 = vmatmul.bf16.gmra.mxu0 %v3657
        %v3744 = vpop.f32.mrf.mxu0
        %v3745 = vadd.f32 0.0, %v3744
        %v3746 = vpop.f32.mrf.mxu0
        %v3747 = vadd.f32 0.0, %v3746
        %3748 = vmatmul.bf16.gmra.mxu0 %v3660
        %v3749 = vpop.f32.mrf.mxu0
        %v3750 = vadd.f32 0.0, %v3749
        %v3751 = vpop.f32.mrf.mxu0
        %v3752 = vadd.f32 0.0, %v3751
        %3753 = vdwg.mxu0
        %v3754 = vadd.f32 %v3100, %v3675
        %v3755 = vadd.f32 %v3101, %v3677
        %v3756 = vadd.f32 %v3102, %v3680
        %v3757 = vadd.f32 %v3103, %v3682
        %v3758 = vadd.f32 %v3104, %v3685
        %v3759 = vadd.f32 %v3105, %v3687
        %v3760 = vadd.f32 %v3106, %v3690
        %v3761 = vadd.f32 %v3107, %v3692
        %v3762 = vadd.f32 %v3108, %v3695
        %v3763 = vadd.f32 %v3109, %v3697
        %v3764 = vadd.f32 %v3110, %v3700
        %v3765 = vadd.f32 %v3111, %v3702
        %v3766 = vadd.f32 %v3112, %v3705
        %v3767 = vadd.f32 %v3113, %v3707
        %v3768 = vadd.f32 %v3114, %v3710
        %v3769 = vadd.f32 %v3115, %v3712
        %v3770 = vadd.f32 %v3116, %v3715
        %v3771 = vadd.f32 %v3117, %v3717
        %v3772 = vadd.f32 %v3118, %v3720
        %v3773 = vadd.f32 %v3119, %v3722
        %v3774 = vadd.f32 %v3120, %v3725
        %v3775 = vadd.f32 %v3121, %v3727
        %v3776 = vadd.f32 %v3122, %v3730
        %v3777 = vadd.f32 %v3123, %v3732
        %v3778 = vadd.f32 %v3124, %v3735
        %v3779 = vadd.f32 %v3125, %v3737
        %v3780 = vadd.f32 %v3126, %v3740
        %v3781 = vadd.f32 %v3127, %v3742
        %v3782 = vadd.f32 %v3128, %v3745
        %v3783 = vadd.f32 %v3129, %v3747
        %v3784 = vadd.f32 %v3130, %v3750
        %v3785 = vadd.f32 %v3131, %v3752
        %v3786 = vld [vmem:[%s2845] sm:$0xe]
        %v3787 = vld [vmem:[%s2845 + $0xc] sm:$0xe]
        %v3788 = vld [vmem:[%s2845 + $0x18] sm:$0xe]
        %v3789 = vld [vmem:[%s2845 + $0x24] sm:$0xe]
        %v3790 = vld [vmem:[%s2845 + $0x30] sm:$0xe]
        %v3791 = vld [vmem:[%s2845 + $0x3c] sm:$0xe]
        %v3792 = vld [vmem:[%s2845 + $0x48] sm:$0xe]
        %v3793 = vld [vmem:[%s2845 + $0x54] sm:$0xe]
        %v3794 = vld [vmem:[%s2845 + $0x60] sm:$0xe]
        %v3795 = vld [vmem:[%s2845 + $0x6c] sm:$0xe]
        %v3796 = vld [vmem:[%s2845 + $0x78] sm:$0xe]
        %v3797 = vld [vmem:[%s2845 + $0x84] sm:$0xe]
        %v3798 = vld [vmem:[%s2845 + $0x90] sm:$0xe]
        %v3799 = vld [vmem:[%s2845 + $0x9c] sm:$0xe]
        %v3800 = vld [vmem:[%s2845 + $0xa8] sm:$0xe]
        %v3801 = vld [vmem:[%s2845 + $0xb4] sm:$0xe]
        %v3850 = vrot.slane %v3786, 5
        %v3851 = vrot.slane %v3850, 4
        %v3852 = vrot.slane %v3133, 5
        %v3853 = vsel %vm1165, %v3851, %v3852
        %v3854 = vrot.slane %v3852, 4
        %v3855 = vrot.slane %v3134, 5
        %v3856 = vsel %vm1165, %v3854, %v3855
        %v3857 = vrot.slane %v3787, 5
        %v3858 = vrot.slane %v3857, 4
        %v3859 = vrot.slane %v3136, 5
        %v3860 = vsel %vm1165, %v3858, %v3859
        %v3861 = vrot.slane %v3859, 4
        %v3862 = vrot.slane %v3137, 5
        %v3863 = vsel %vm1165, %v3861, %v3862
        %v3864 = vrot.slane %v3788, 5
        %v3865 = vrot.slane %v3864, 4
        %v3866 = vrot.slane %v3139, 5
        %v3867 = vsel %vm1165, %v3865, %v3866
        %v3868 = vrot.slane %v3866, 4
        %v3869 = vrot.slane %v3140, 5
        %v3870 = vsel %vm1165, %v3868, %v3869
        %v3871 = vrot.slane %v3789, 5
        %v3872 = vrot.slane %v3871, 4
        %v3873 = vrot.slane %v3142, 5
        %v3874 = vsel %vm1165, %v3872, %v3873
        %v3875 = vrot.slane %v3873, 4
        %v3876 = vrot.slane %v3143, 5
        %v3877 = vsel %vm1165, %v3875, %v3876
        %v3878 = vrot.slane %v3790, 5
        %v3879 = vrot.slane %v3878, 4
        %v3880 = vrot.slane %v3145, 5
        %v3881 = vsel %vm1165, %v3879, %v3880
        %v3882 = vrot.slane %v3880, 4
        %v3883 = vrot.slane %v3146, 5
        %v3884 = vsel %vm1165, %v3882, %v3883
        %v3885 = vrot.slane %v3791, 5
        %v3886 = vrot.slane %v3885, 4
        %v3887 = vrot.slane %v3148, 5
        %v3888 = vsel %vm1165, %v3886, %v3887
        %v3889 = vrot.slane %v3887, 4
        %v3890 = vrot.slane %v3149, 5
        %v3891 = vsel %vm1165, %v3889, %v3890
        %v3892 = vrot.slane %v3792, 5
        %v3893 = vrot.slane %v3892, 4
        %v3894 = vrot.slane %v3151, 5
        %v3895 = vsel %vm1165, %v3893, %v3894
        %v3896 = vrot.slane %v3894, 4
        %v3897 = vrot.slane %v3152, 5
        %v3898 = vsel %vm1165, %v3896, %v3897
        %v3899 = vrot.slane %v3793, 5
        %v3900 = vrot.slane %v3899, 4
        %v3901 = vrot.slane %v3154, 5
        %v3902 = vsel %vm1165, %v3900, %v3901
        %v3903 = vrot.slane %v3901, 4
        %v3904 = vrot.slane %v3155, 5
        %v3905 = vsel %vm1165, %v3903, %v3904
        %v3906 = vrot.slane %v3794, 5
        %v3907 = vrot.slane %v3906, 4
        %v3908 = vrot.slane %v3157, 5
        %v3909 = vsel %vm1165, %v3907, %v3908
        %v3910 = vrot.slane %v3908, 4
        %v3911 = vrot.slane %v3158, 5
        %v3912 = vsel %vm1165, %v3910, %v3911
        %v3913 = vrot.slane %v3795, 5
        %v3914 = vrot.slane %v3913, 4
        %v3915 = vrot.slane %v3160, 5
        %v3916 = vsel %vm1165, %v3914, %v3915
        %v3917 = vrot.slane %v3915, 4
        %v3918 = vrot.slane %v3161, 5
        %v3919 = vsel %vm1165, %v3917, %v3918
        %v3920 = vrot.slane %v3796, 5
        %v3921 = vrot.slane %v3920, 4
        %v3922 = vrot.slane %v3163, 5
        %v3923 = vsel %vm1165, %v3921, %v3922
        %v3924 = vrot.slane %v3922, 4
        %v3925 = vrot.slane %v3164, 5
        %v3926 = vsel %vm1165, %v3924, %v3925
        %v3927 = vrot.slane %v3797, 5
        %v3928 = vrot.slane %v3927, 4
        %v3929 = vrot.slane %v3166, 5
        %v3930 = vsel %vm1165, %v3928, %v3929
        %v3931 = vrot.slane %v3929, 4
        %v3932 = vrot.slane %v3167, 5
        %v3933 = vsel %vm1165, %v3931, %v3932
        %v3934 = vrot.slane %v3798, 5
        %v3935 = vrot.slane %v3934, 4
        %v3936 = vrot.slane %v3169, 5
        %v3937 = vsel %vm1165, %v3935, %v3936
        %v3938 = vrot.slane %v3936, 4
        %v3939 = vrot.slane %v3170, 5
        %v3940 = vsel %vm1165, %v3938, %v3939
        %v3941 = vrot.slane %v3799, 5
        %v3942 = vrot.slane %v3941, 4
        %v3943 = vrot.slane %v3172, 5
        %v3944 = vsel %vm1165, %v3942, %v3943
        %v3945 = vrot.slane %v3943, 4
        %v3946 = vrot.slane %v3173, 5
        %v3947 = vsel %vm1165, %v3945, %v3946
        %v3948 = vrot.slane %v3800, 5
        %v3949 = vrot.slane %v3948, 4
        %v3950 = vrot.slane %v3175, 5
        %v3951 = vsel %vm1165, %v3949, %v3950
        %v3952 = vrot.slane %v3950, 4
        %v3953 = vrot.slane %v3176, 5
        %v3954 = vsel %vm1165, %v3952, %v3953
        %v3955 = vrot.slane %v3801, 5
        %v3956 = vrot.slane %v3955, 4
        %v3957 = vrot.slane %v3178, 5
        %v3958 = vsel %vm1165, %v3956, %v3957
        %v3959 = vrot.slane %v3957, 4
        %v3960 = vrot.slane %v3179, 5
        %v3961 = vsel %vm1165, %v3959, %v3960
        %s3962 = scalar_lea.vmem %s1, 16
        %v3963 = vld [vmem:[%s3962] sm:$0x3]
        %v3964 = vunpack.c.l.b16 %v3853
        %v3965 = vunpack.c.l.b16 %v3856
        %v3966 = vunpack.c.l.b16 %v3860
        %v3967 = vunpack.c.l.b16 %v3863
        %v3968 = vunpack.c.l.b16 %v3867
        %v3969 = vunpack.c.l.b16 %v3870
        %v3970 = vunpack.c.l.b16 %v3874
        %v3971 = vunpack.c.l.b16 %v3877
        %v3972 = vunpack.c.l.b16 %v3881
        %v3973 = vunpack.c.l.b16 %v3884
        %v3974 = vunpack.c.l.b16 %v3888
        %v3975 = vunpack.c.l.b16 %v3891
        %v3976 = vunpack.c.l.b16 %v3895
        %v3977 = vunpack.c.l.b16 %v3898
        %v3978 = vunpack.c.l.b16 %v3902
        %v3979 = vunpack.c.l.b16 %v3905
        %v3980 = vunpack.c.l.b16 %v3909
        %v3981 = vunpack.c.l.b16 %v3912
        %v3982 = vunpack.c.l.b16 %v3916
        %v3983 = vunpack.c.l.b16 %v3919
        %v3984 = vunpack.c.l.b16 %v3923
        %v3985 = vunpack.c.l.b16 %v3926
        %v3986 = vunpack.c.l.b16 %v3930
        %v3987 = vunpack.c.l.b16 %v3933
        %v3988 = vunpack.c.l.b16 %v3937
        %v3989 = vunpack.c.l.b16 %v3940
        %v3990 = vunpack.c.l.b16 %v3944
        %v3991 = vunpack.c.l.b16 %v3947
        %v3992 = vunpack.c.l.b16 %v3951
        %v3993 = vunpack.c.l.b16 %v3954
        %v3994 = vunpack.c.l.b16 %v3958
        %v3995 = vunpack.c.l.b16 %v3961
        %v3996 = vpack.c.b16 %v3965, %v3964
        %v3997 = vpack.c.b16 %v3967, %v3966
        %v3998 = vpack.c.b16 %v3969, %v3968
        %v3999 = vpack.c.b16 %v3971, %v3970
        %v4000 = vpack.c.b16 %v3973, %v3972
        %v4001 = vpack.c.b16 %v3975, %v3974
        %v4002 = vpack.c.b16 %v3977, %v3976
        %v4003 = vpack.c.b16 %v3979, %v3978
        %v4004 = vpack.c.b16 %v3981, %v3980
        %v4005 = vpack.c.b16 %v3983, %v3982
        %v4006 = vpack.c.b16 %v3985, %v3984
        %v4007 = vpack.c.b16 %v3987, %v3986
        %v4008 = vpack.c.b16 %v3989, %v3988
        %v4009 = vpack.c.b16 %v3991, %v3990
        %v4010 = vpack.c.b16 %v3993, %v3992
        %v4011 = vpack.c.b16 %v3995, %v3994
        %v4013 = vsel %vm753, %v3996, 0
        %v4016 = vsel %vm753, %v3997, 0
        %v4019 = vsel %vm753, %v3998, 0
        %v4022 = vsel %vm753, %v3999, 0
        %v4025 = vsel %vm753, %v4000, 0
        %v4028 = vsel %vm753, %v4001, 0
        %v4031 = vsel %vm753, %v4002, 0
        %v4034 = vsel %vm753, %v4003, 0
        %v4037 = vsel %vm753, %v4004, 0
        %v4040 = vsel %vm753, %v4005, 0
        %v4043 = vsel %vm753, %v4006, 0
        %v4046 = vsel %vm753, %v4007, 0
        %v4049 = vsel %vm753, %v4008, 0
        %v4052 = vsel %vm753, %v4009, 0
        %v4055 = vsel %vm753, %v4010, 0
        %v4058 = vsel %vm753, %v4011, 0
        %v4061 = vsel %vm802, %v3963, 0
        %4063 = vmatpush.bf16.msra.mxu0 0
        %4064 = vmatpush.bf16.msra.mxu0 0
        %4065 = vmatpush.bf16.msra.mxu0 0
        %4066 = vmatpush.bf16.msra.mxu0 0
        %4067 = vmatpush.bf16.msra.mxu0 0
        %4068 = vmatpush.bf16.msra.mxu0 0
        %4069 = vmatpush.bf16.msra.mxu0 0
        %4070 = vmatpush.bf16.msra.mxu0 %v4061
        %4071 = vmatmul.bf16.gmra.mxu0 %v4013
        %v4072 = vpop.f32.mrf.mxu0
        %v4073 = vadd.f32 0.0, %v4072
        %v4074 = vpop.f32.mrf.mxu0
        %v4075 = vadd.f32 0.0, %v4074
        %4076 = vmatmul.bf16.gmra.mxu0 %v4016
        %v4077 = vpop.f32.mrf.mxu0
        %v4078 = vadd.f32 0.0, %v4077
        %v4079 = vpop.f32.mrf.mxu0
        %v4080 = vadd.f32 0.0, %v4079
        %4081 = vmatmul.bf16.gmra.mxu0 %v4019
        %v4082 = vpop.f32.mrf.mxu0
        %v4083 = vadd.f32 0.0, %v4082
        %v4084 = vpop.f32.mrf.mxu0
        %v4085 = vadd.f32 0.0, %v4084
        %4086 = vmatmul.bf16.gmra.mxu0 %v4022
        %v4087 = vpop.f32.mrf.mxu0
        %v4088 = vadd.f32 0.0, %v4087
        %v4089 = vpop.f32.mrf.mxu0
        %v4090 = vadd.f32 0.0, %v4089
        %4091 = vmatmul.bf16.gmra.mxu0 %v4025
        %v4092 = vpop.f32.mrf.mxu0
        %v4093 = vadd.f32 0.0, %v4092
        %v4094 = vpop.f32.mrf.mxu0
        %v4095 = vadd.f32 0.0, %v4094
        %4096 = vmatmul.bf16.gmra.mxu0 %v4028
        %v4097 = vpop.f32.mrf.mxu0
        %v4098 = vadd.f32 0.0, %v4097
        %v4099 = vpop.f32.mrf.mxu0
        %v4100 = vadd.f32 0.0, %v4099
        %4101 = vmatmul.bf16.gmra.mxu0 %v4031
        %v4102 = vpop.f32.mrf.mxu0
        %v4103 = vadd.f32 0.0, %v4102
        %v4104 = vpop.f32.mrf.mxu0
        %v4105 = vadd.f32 0.0, %v4104
        %4106 = vmatmul.bf16.gmra.mxu0 %v4034
        %v4107 = vpop.f32.mrf.mxu0
        %v4108 = vadd.f32 0.0, %v4107
        %v4109 = vpop.f32.mrf.mxu0
        %v4110 = vadd.f32 0.0, %v4109
        %4111 = vmatmul.bf16.gmra.mxu0 %v4037
        %v4112 = vpop.f32.mrf.mxu0
        %v4113 = vadd.f32 0.0, %v4112
        %v4114 = vpop.f32.mrf.mxu0
        %v4115 = vadd.f32 0.0, %v4114
        %4116 = vmatmul.bf16.gmra.mxu0 %v4040
        %v4117 = vpop.f32.mrf.mxu0
        %v4118 = vadd.f32 0.0, %v4117
        %v4119 = vpop.f32.mrf.mxu0
        %v4120 = vadd.f32 0.0, %v4119
        %4121 = vmatmul.bf16.gmra.mxu0 %v4043
        %v4122 = vpop.f32.mrf.mxu0
        %v4123 = vadd.f32 0.0, %v4122
        %v4124 = vpop.f32.mrf.mxu0
        %v4125 = vadd.f32 0.0, %v4124
        %4126 = vmatmul.bf16.gmra.mxu0 %v4046
        %v4127 = vpop.f32.mrf.mxu0
        %v4128 = vadd.f32 0.0, %v4127
        %v4129 = vpop.f32.mrf.mxu0
        %v4130 = vadd.f32 0.0, %v4129
        %4131 = vmatmul.bf16.gmra.mxu0 %v4049
        %v4132 = vpop.f32.mrf.mxu0
        %v4133 = vadd.f32 0.0, %v4132
        %v4134 = vpop.f32.mrf.mxu0
        %v4135 = vadd.f32 0.0, %v4134
        %4136 = vmatmul.bf16.gmra.mxu0 %v4052
        %v4137 = vpop.f32.mrf.mxu0
        %v4138 = vadd.f32 0.0, %v4137
        %v4139 = vpop.f32.mrf.mxu0
        %v4140 = vadd.f32 0.0, %v4139
        %4141 = vmatmul.bf16.gmra.mxu0 %v4055
        %v4142 = vpop.f32.mrf.mxu0
        %v4143 = vadd.f32 0.0, %v4142
        %v4144 = vpop.f32.mrf.mxu0
        %v4145 = vadd.f32 0.0, %v4144
        %4146 = vmatmul.bf16.gmra.mxu0 %v4058
        %v4147 = vpop.f32.mrf.mxu0
        %v4148 = vadd.f32 0.0, %v4147
        %v4149 = vpop.f32.mrf.mxu0
        %v4150 = vadd.f32 0.0, %v4149
        %4151 = vdwg.mxu0
        %v4152 = vadd.f32 %v3754, %v4073
        %v4153 = vadd.f32 %v3755, %v4075
        %v4154 = vadd.f32 %v3756, %v4078
        %v4155 = vadd.f32 %v3757, %v4080
        %v4156 = vadd.f32 %v3758, %v4083
        %v4157 = vadd.f32 %v3759, %v4085
        %v4158 = vadd.f32 %v3760, %v4088
        %v4159 = vadd.f32 %v3761, %v4090
        %v4160 = vadd.f32 %v3762, %v4093
        %v4161 = vadd.f32 %v3763, %v4095
        %v4162 = vadd.f32 %v3764, %v4098
        %v4163 = vadd.f32 %v3765, %v4100
        %v4164 = vadd.f32 %v3766, %v4103
        %v4165 = vadd.f32 %v3767, %v4105
        %v4166 = vadd.f32 %v3768, %v4108
        %v4167 = vadd.f32 %v3769, %v4110
        %v4168 = vadd.f32 %v3770, %v4113
        %v4169 = vadd.f32 %v3771, %v4115
        %v4170 = vadd.f32 %v3772, %v4118
        %v4171 = vadd.f32 %v3773, %v4120
        %v4172 = vadd.f32 %v3774, %v4123
        %v4173 = vadd.f32 %v3775, %v4125
        %v4174 = vadd.f32 %v3776, %v4128
        %v4175 = vadd.f32 %v3777, %v4130
        %v4176 = vadd.f32 %v3778, %v4133
        %v4177 = vadd.f32 %v3779, %v4135
        %v4178 = vadd.f32 %v3780, %v4138
        %v4179 = vadd.f32 %v3781, %v4140
        %v4180 = vadd.f32 %v3782, %v4143
        %v4181 = vadd.f32 %v3783, %v4145
        %v4182 = vadd.f32 %v3784, %v4148
        %v4183 = vadd.f32 %v3785, %v4150
        %v4184 = vld [vmem:[%s2] sm:$0x1]
        %v4186 = vperm.slane %v4184, 0
        %v4188 = vadd.f32 %v4152, %v4186
        %v4189 = vadd.f32 %v4153, %v4186
        %v4190 = vadd.f32 %v4154, %v4186
        %v4191 = vadd.f32 %v4155, %v4186
        %v4192 = vadd.f32 %v4156, %v4186
        %v4193 = vadd.f32 %v4157, %v4186
        %v4194 = vadd.f32 %v4158, %v4186
        %v4195 = vadd.f32 %v4159, %v4186
        %v4196 = vadd.f32 %v4160, %v4186
        %v4197 = vadd.f32 %v4161, %v4186
        %v4198 = vadd.f32 %v4162, %v4186
        %v4199 = vadd.f32 %v4163, %v4186
        %v4200 = vadd.f32 %v4164, %v4186
        %v4201 = vadd.f32 %v4165, %v4186
        %v4202 = vadd.f32 %v4166, %v4186
        %v4203 = vadd.f32 %v4167, %v4186
        %v4204 = vadd.f32 %v4168, %v4186
        %v4205 = vadd.f32 %v4169, %v4186
        %v4206 = vadd.f32 %v4170, %v4186
        %v4207 = vadd.f32 %v4171, %v4186
        %v4208 = vadd.f32 %v4172, %v4186
        %v4209 = vadd.f32 %v4173, %v4186
        %v4210 = vadd.f32 %v4174, %v4186
        %v4211 = vadd.f32 %v4175, %v4186
        %v4212 = vadd.f32 %v4176, %v4186
        %v4213 = vadd.f32 %v4177, %v4186
        %v4214 = vadd.f32 %v4178, %v4186
        %v4215 = vadd.f32 %v4179, %v4186
        %v4216 = vadd.f32 %v4180, %v4186
        %v4217 = vadd.f32 %v4181, %v4186
        %v4218 = vadd.f32 %v4182, %v4186
        %v4219 = vadd.f32 %v4183, %v4186
        %v4220 = vmax.f32 %v4188, 0.0
        %v4221 = vmax.f32 %v4189, 0.0
        %v4222 = vmax.f32 %v4190, 0.0
        %v4223 = vmax.f32 %v4191, 0.0
        %v4224 = vmax.f32 %v4192, 0.0
        %v4225 = vmax.f32 %v4193, 0.0
        %v4226 = vmax.f32 %v4194, 0.0
        %v4227 = vmax.f32 %v4195, 0.0
        %v4228 = vmax.f32 %v4196, 0.0
        %v4229 = vmax.f32 %v4197, 0.0
        %v4230 = vmax.f32 %v4198, 0.0
        %v4231 = vmax.f32 %v4199, 0.0
        %v4232 = vmax.f32 %v4200, 0.0
        %v4233 = vmax.f32 %v4201, 0.0
        %v4234 = vmax.f32 %v4202, 0.0
        %v4235 = vmax.f32 %v4203, 0.0
        %v4236 = vmax.f32 %v4204, 0.0
        %v4237 = vmax.f32 %v4205, 0.0
        %v4238 = vmax.f32 %v4206, 0.0
        %v4239 = vmax.f32 %v4207, 0.0
        %v4240 = vmax.f32 %v4208, 0.0
        %v4241 = vmax.f32 %v4209, 0.0
        %v4242 = vmax.f32 %v4210, 0.0
        %v4243 = vmax.f32 %v4211, 0.0
        %v4244 = vmax.f32 %v4212, 0.0
        %v4245 = vmax.f32 %v4213, 0.0
        %v4246 = vmax.f32 %v4214, 0.0
        %v4247 = vmax.f32 %v4215, 0.0
        %v4248 = vmax.f32 %v4216, 0.0
        %v4249 = vmax.f32 %v4217, 0.0
        %v4250 = vmax.f32 %v4218, 0.0
        %v4251 = vmax.f32 %v4219, 0.0
        %4252 = vst [vmem:[%s235] sm:$0xff] %v4220
        %4253 = vst [vmem:[%s235 + $0x8] sm:$0xff] %v4221
        %4254 = vst [vmem:[%s235 + $0x10] sm:$0xff] %v4222
        %4255 = vst [vmem:[%s235 + $0x18] sm:$0xff] %v4223
        %4256 = vst [vmem:[%s235 + $0x20] sm:$0xff] %v4224
        %4257 = vst [vmem:[%s235 + $0x28] sm:$0xff] %v4225
        %4258 = vst [vmem:[%s235 + $0x30] sm:$0xff] %v4226
        %4259 = vst [vmem:[%s235 + $0x38] sm:$0xff] %v4227
        %4260 = vst [vmem:[%s235 + $0x40] sm:$0xff] %v4228
        %4261 = vst [vmem:[%s235 + $0x48] sm:$0xff] %v4229
        %4262 = vst [vmem:[%s235 + $0x50] sm:$0xff] %v4230
        %4263 = vst [vmem:[%s235 + $0x58] sm:$0xff] %v4231
        %4264 = vst [vmem:[%s235 + $0x60] sm:$0xff] %v4232
        %4265 = vst [vmem:[%s235 + $0x68] sm:$0xff] %v4233
        %4266 = vst [vmem:[%s235 + $0x70] sm:$0xff] %v4234
        %4267 = vst [vmem:[%s235 + $0x78] sm:$0xff] %v4235
        %4268 = vst [vmem:[%s235 + $0x80] sm:$0xff] %v4236
        %4269 = vst [vmem:[%s235 + $0x88] sm:$0xff] %v4237
        %4270 = vst [vmem:[%s235 + $0x90] sm:$0xff] %v4238
        %4271 = vst [vmem:[%s235 + $0x98] sm:$0xff] %v4239
        %4272 = vst [vmem:[%s235 + $0xa0] sm:$0xff] %v4240
        %4273 = vst [vmem:[%s235 + $0xa8] sm:$0xff] %v4241
        %4274 = vst [vmem:[%s235 + $0xb0] sm:$0xff] %v4242
        %4275 = vst [vmem:[%s235 + $0xb8] sm:$0xff] %v4243
        %4276 = vst [vmem:[%s235 + $0xc0] sm:$0xff] %v4244
        %4277 = vst [vmem:[%s235 + $0xc8] sm:$0xff] %v4245
        %4278 = vst [vmem:[%s235 + $0xd0] sm:$0xff] %v4246
        %4279 = vst [vmem:[%s235 + $0xd8] sm:$0xff] %v4247
        %4280 = vst [vmem:[%s235 + $0xe0] sm:$0xff] %v4248
        %4281 = vst [vmem:[%s235 + $0xe8] sm:$0xff] %v4249
        %4282 = vst [vmem:[%s235 + $0xf0] sm:$0xff] %v4250
        %4283 = vst [vmem:[%s235 + $0xf8] sm:$0xff] %v4251
        %v4284 = vld [vmem:[%s242] sm:$0xff]
        %v4285 = vadd.f32 %v4220, %v4221
        %v4286 = vadd.f32 %v4285, %v4222
        %v4287 = vadd.f32 %v4286, %v4223
        %v4288 = vadd.f32 %v4287, %v4224
        %v4289 = vadd.f32 %v4288, %v4225
        %v4290 = vadd.f32 %v4289, %v4226
        %v4291 = vadd.f32 %v4290, %v4227
        %v4292 = vadd.f32 %v4291, %v4228
        %v4293 = vadd.f32 %v4292, %v4229
        %v4294 = vadd.f32 %v4293, %v4230
        %v4295 = vadd.f32 %v4294, %v4231
        %v4296 = vadd.f32 %v4295, %v4232
        %v4297 = vadd.f32 %v4296, %v4233
        %v4298 = vadd.f32 %v4297, %v4234
        %v4299 = vadd.f32 %v4298, %v4235
        %v4300 = vadd.f32 %v4299, %v4236
        %v4301 = vadd.f32 %v4300, %v4237
        %v4302 = vadd.f32 %v4301, %v4238
        %v4303 = vadd.f32 %v4302, %v4239
        %v4304 = vadd.f32 %v4303, %v4240
        %v4305 = vadd.f32 %v4304, %v4241
        %v4306 = vadd.f32 %v4305, %v4242
        %v4307 = vadd.f32 %v4306, %v4243
        %v4308 = vadd.f32 %v4307, %v4244
        %v4309 = vadd.f32 %v4308, %v4245
        %v4310 = vadd.f32 %v4309, %v4246
        %v4311 = vadd.f32 %v4310, %v4247
        %v4312 = vadd.f32 %v4311, %v4248
        %v4313 = vadd.f32 %v4312, %v4249
        %v4314 = vadd.f32 %v4313, %v4250
        %v4315 = vadd.f32 %v4314, %v4251
        %v4316 = vadd.f32 %v4284, %v4315
        %4317 = vst [vmem:[%s242] sm:$0xff] %v4316
        %v4318 = vld [vmem:[%s249] sm:$0xff]
        %v4319 = vmul.f32 %v4220, %v4220
        %v4320 = vmul.f32 %v4221, %v4221
        %v4321 = vmul.f32 %v4222, %v4222
        %v4322 = vmul.f32 %v4223, %v4223
        %v4323 = vmul.f32 %v4224, %v4224
        %v4324 = vmul.f32 %v4225, %v4225
        %v4325 = vmul.f32 %v4226, %v4226
        %v4326 = vmul.f32 %v4227, %v4227
        %v4327 = vmul.f32 %v4228, %v4228
        %v4328 = vmul.f32 %v4229, %v4229
        %v4329 = vmul.f32 %v4230, %v4230
        %v4330 = vmul.f32 %v4231, %v4231
        %v4331 = vmul.f32 %v4232, %v4232
        %v4332 = vmul.f32 %v4233, %v4233
        %v4333 = vmul.f32 %v4234, %v4234
        %v4334 = vmul.f32 %v4235, %v4235
        %v4335 = vmul.f32 %v4236, %v4236
        %v4336 = vmul.f32 %v4237, %v4237
        %v4337 = vmul.f32 %v4238, %v4238
        %v4338 = vmul.f32 %v4239, %v4239
        %v4339 = vmul.f32 %v4240, %v4240
        %v4340 = vmul.f32 %v4241, %v4241
        %v4341 = vmul.f32 %v4242, %v4242
        %v4342 = vmul.f32 %v4243, %v4243
        %v4343 = vmul.f32 %v4244, %v4244
        %v4344 = vmul.f32 %v4245, %v4245
        %v4345 = vmul.f32 %v4246, %v4246
        %v4346 = vmul.f32 %v4247, %v4247
        %v4347 = vmul.f32 %v4248, %v4248
        %v4348 = vmul.f32 %v4249, %v4249
        %v4349 = vmul.f32 %v4250, %v4250
        %v4350 = vmul.f32 %v4251, %v4251
        %v4351 = vadd.f32 %v4319, %v4320
        %v4352 = vadd.f32 %v4351, %v4321
        %v4353 = vadd.f32 %v4352, %v4322
        %v4354 = vadd.f32 %v4353, %v4323
        %v4355 = vadd.f32 %v4354, %v4324
        %v4356 = vadd.f32 %v4355, %v4325
        %v4357 = vadd.f32 %v4356, %v4326
        %v4358 = vadd.f32 %v4357, %v4327
        %v4359 = vadd.f32 %v4358, %v4328
        %v4360 = vadd.f32 %v4359, %v4329
        %v4361 = vadd.f32 %v4360, %v4330
        %v4362 = vadd.f32 %v4361, %v4331
        %v4363 = vadd.f32 %v4362, %v4332
        %v4364 = vadd.f32 %v4363, %v4333
        %v4365 = vadd.f32 %v4364, %v4334
        %v4366 = vadd.f32 %v4365, %v4335
        %v4367 = vadd.f32 %v4366, %v4336
        %v4368 = vadd.f32 %v4367, %v4337
        %v4369 = vadd.f32 %v4368, %v4338
        %v4370 = vadd.f32 %v4369, %v4339
        %v4371 = vadd.f32 %v4370, %v4340
        %v4372 = vadd.f32 %v4371, %v4341
        %v4373 = vadd.f32 %v4372, %v4342
        %v4374 = vadd.f32 %v4373, %v4343
        %v4375 = vadd.f32 %v4374, %v4344
        %v4376 = vadd.f32 %v4375, %v4345
        %v4377 = vadd.f32 %v4376, %v4346
        %v4378 = vadd.f32 %v4377, %v4347
        %v4379 = vadd.f32 %v4378, %v4348
        %v4380 = vadd.f32 %v4379, %v4349
        %v4381 = vadd.f32 %v4380, %v4350
        %v4382 = vadd.f32 %v4318, %v4381
        %4383 = vst [vmem:[%s249] sm:$0xff] %v4382
        %s4384 = sand.u32 %s113, 1
        %s4385 = scalar_lea.sflag [#allocation3], %s4384
        %s4386 = sand.u32 %s113, 1
        %s4387 = smul.addr %s4386, 256
        %s4388 = scalar_lea.vmem [#allocation2], %s4387
        %s4389 = sand.u32 %s23, 1
        %s4390 = scalar_lea.sflag [#allocation5], %s4389
        %s4391 = sand.u32 %s139, 1
        %s4392 = smul.addr %s4391, 8
        %s4393 = scalar_lea.vmem [#allocation4], %s4392
        %s4394 = sand.u32 %s23, 1
        %s4395 = scalar_lea.sflag [#allocation5], %s4394
        %s4396 = sand.u32 %s165, 1
        %s4397 = smul.addr %s4396, 8
        %s4398 = scalar_lea.vmem [#allocation6], %s4397
        // Predicated region
        $region37: #{tpu_custom_call.1} parent=31 // pred_check
          %p4399 = pneg %p123
        $region38: #{tpu_custom_call.1} parent=31 // pred_check_branch
          %4401 = sbr.rel (%p4399) target = $region40
        $region39: #{tpu_custom_call.1} parent=31 // pred_region
          %s4402 = smul.u32 32, %s28
          %4404 = vsyncadd %s4385, 0
          %s4405 = smul.addr %s27, 32
          %s4406 = sadd.s32 %s4402, %s4405
          %s4407 = smul.addr %s4406, 8
          %s4408 = scalar_lea.hbm %s3, %s4407
          %s4409 = sshll.u32 %s4388, 4
          %s4410 = int_to_ptr.vmem [resolvable:$true] %s4409
          %s4411 = sshll.u32 %s4408, 4
          %s4412 = int_to_ptr.hbm [resolvable:$true] %s4411
          %4417 = dma.vmem_to_hbm [thread:$0]  %s4410, 4096, %s4412, %s4385, 128, 128, 8
        $region40: #{tpu_custom_call.1} parent=31 // pred_fallthru
          _
        // Predicated region
        $region41: #{tpu_custom_call.1} parent=31 // pred_check
          %p4418 = pneg %p149
        $region42: #{tpu_custom_call.1} parent=31 // pred_check_branch
          %4420 = sbr.rel (%p4418) target = $region44
        $region43: #{tpu_custom_call.1} parent=31 // pred_region
          %4422 = vsyncadd %s4390, 0
          %s4423 = smul.addr %s27, 8
          %s4424 = scalar_lea.hbm %s4, %s4423
          %s4426 = sshll.u32 %s4393, 4
          %s4427 = int_to_ptr.vmem [resolvable:$true] %s4426
          %s4428 = sshll.u32 %s4424, 4
          %s4429 = int_to_ptr.hbm [resolvable:$true] %s4428
          %4431 = dma.vmem_to_hbm [thread:$0]  %s4427, 128, %s4429, %s4390
        $region44: #{tpu_custom_call.1} parent=31 // pred_fallthru
          _
        // Predicated region
        $region45: #{tpu_custom_call.1} parent=31 // pred_check
          %p4432 = pneg %p175
        $region46: #{tpu_custom_call.1} parent=31 // pred_check_branch
          %4434 = sbr.rel (%p4432) target = $region48
        $region47: #{tpu_custom_call.1} parent=31 // pred_region
          %4436 = vsyncadd %s4395, 0
          %s4437 = smul.addr %s27, 8
          %s4438 = scalar_lea.hbm %s5, %s4437
          %s4440 = sshll.u32 %s4398, 4
          %s4441 = int_to_ptr.vmem [resolvable:$true] %s4440
          %s4442 = sshll.u32 %s4438, 4
          %s4443 = int_to_ptr.hbm [resolvable:$true] %s4442
          %4445 = dma.vmem_to_hbm [thread:$0]  %s4441, 128, %s4443, %s4395
        $region48: #{tpu_custom_call.1} parent=31 // pred_fallthru
          _
      $region32: #{tpu_custom_call.1} parent=5 // pred_fallthru
        _
      %p4446 = scmp.le.s32.totalorder 2, %s18
      // Predicated region
      $region49: #{tpu_custom_call.1} parent=5 // pred_check
        %p4447 = pneg %p4446
      $region50: #{tpu_custom_call.1} parent=5 // pred_check_branch
        %4449 = sbr.rel (%p4447) target = $region52
      $region51: #{tpu_custom_call.1} parent=5 // pred_region
        %s4450 = ssub.s32 %s18, 2
        // Predicated region
        $region53: #{tpu_custom_call.1} parent=51 // pred_check
          %p4451 = pneg %p129
        $region54: #{tpu_custom_call.1} parent=51 // pred_check_branch
          %4453 = sbr.rel (%p4451) target = $region56
        $region55: #{tpu_custom_call.1} parent=51 // pred_region
          %s4454 = sand.u32 %s114, 1
          %s4455 = scalar_lea.sflag [#allocation3], %s4454
          %s4456 = sand.u32 %s114, 1
          %s4457 = smul.addr %s4456, 256
          %s4458 = scalar_lea.vmem [#allocation2], %s4457
          %4460 = dma.done %s4455, 4096
        $region56: #{tpu_custom_call.1} parent=51 // pred_fallthru
          _
        // Predicated region
        $region57: #{tpu_custom_call.1} parent=51 // pred_check
          %p4461 = pneg %p155
        $region58: #{tpu_custom_call.1} parent=51 // pred_check_branch
          %4463 = sbr.rel (%p4461) target = $region60
        $region59: #{tpu_custom_call.1} parent=51 // pred_region
          %s4464 = sand.u32 %s24, 1
          %s4465 = scalar_lea.sflag [#allocation5], %s4464
          %s4466 = sand.u32 %s140, 1
          %s4467 = smul.addr %s4466, 8
          %s4468 = scalar_lea.vmem [#allocation4], %s4467
          %4470 = dma.done %s4465, 128
        $region60: #{tpu_custom_call.1} parent=51 // pred_fallthru
          _
        // Predicated region
        $region61: #{tpu_custom_call.1} parent=51 // pred_check
          %p4471 = pneg %p181
        $region62: #{tpu_custom_call.1} parent=51 // pred_check_branch
          %4473 = sbr.rel (%p4471) target = $region64
        $region63: #{tpu_custom_call.1} parent=51 // pred_region
          %s4474 = sand.u32 %s24, 1
          %s4475 = scalar_lea.sflag [#allocation5], %s4474
          %s4476 = sand.u32 %s166, 1
          %s4477 = smul.addr %s4476, 8
          %s4478 = scalar_lea.vmem [#allocation6], %s4477
          %4480 = dma.done %s4475, 128
        $region64: #{tpu_custom_call.1} parent=51 // pred_fallthru
          _
      $region52: #{tpu_custom_call.1} parent=5 // pred_fallthru
        _
    $region6: #{tpu_custom_call.1} parent=1 // loop_footer
      %s22 = sadd.s32 1, %s18
    $region7: #{tpu_custom_call.1} parent=1 // loop_footer_branch
      %17 = sbr.rel target = $region3
    $region8: #{tpu_custom_call.1} parent=1 // loop_exit
      _
    %4481 = vsyncpa [#allocation3], 1
    %s4482 = scalar_lea.sflag [#allocation3], 1
    %4483 = vsyncpa %s4482, 1
    %4484 = vsyncpa [#allocation5], 1
    %s4485 = scalar_lea.sflag [#allocation5], 1
    %4486 = vsyncpa %s4485, 1

</llo_original>
